<compile_context>
chip_gen: v6e
topology: v6e:2x2x1
jax: 0.10.0
libtpu: 0.0.40
codegen_flags: <defaults>
</compile_context>

<pallas_src>
import jax
import jax.numpy as jnp
from jax import lax
from jax.experimental import pallas as pl
from jax.experimental.pallas import tpu as pltpu

_SUBLANE = 8
_LANE = 128
_MAX_CHUNK_T = 256
_UNROLL_CAP = 64                    # fully unroll the step loop up to this size
_VMEM_BUDGET = 24 * 1024 * 1024     # target footprint (headroom on v7x 64 MiB)
_VMEM_LIMIT = 48 * 1024 * 1024      # explicit scoped-VMEM limit for Mosaic
_LN_EPS = 1e-5


def _round_up(x, m):
    return ((x + m - 1) // m) * m


def _pick_chunk_t(T, Bp, in0, hidden, in_widths, gate_widths, act_w, cd_size):
    """Pick chunk_t so the full VMEM footprint stays under the budget."""
    fixed = 0
    for H, Gp, iw in zip(hidden, gate_widths, in_widths):
        fixed += 2 * (iw * Gp + H * Gp) * cd_size    # wih + whh (x2 buffers)
        fixed += 2 * (Gp + 2 * H) * 4                # bias, gamma, beta
        fixed += 2 * 2 * Bp * H * 4                  # h0, c0 input blocks
        fixed += 2 * Bp * H * 4                      # h/c carry scratch (f32)
        fixed += 2 * 2 * Bp * H * 4                  # hT/cT output blocks
    per_t = Bp * (2 * in0 * cd_size                  # x block (x2 buffers)
                  + 2 * hidden[-1] * 4               # out block (x2 buffers)
                  + act_w * cd_size                  # inter-layer act scratch
                  + max(gate_widths) * cd_size)      # hoisted x-projection
    ct = (_VMEM_BUDGET - fixed) // max(per_t, 1)
    return int(max(1, min(ct, T, _MAX_CHUNK_T)))


# --------------------------- fused kernel factory ---------------------------
def _make_fused_lstm_kernel(*, num_layers, chunk_t, Bp, B, hidden, gate_widths,
                            act_w, t_total, layer_norm, compute_dtype):
    L = num_layers
    static_full = (t_total % chunk_t == 0)

    def kernel(*refs):
        pos = 0
        x_ref = refs[pos]; pos += 1
        layer_refs = []
        for _ in range(L):
            layer_refs.append(refs[pos:pos + 7]); pos += 7
        out_ref = refs[pos]; pos += 1
        hT_refs = refs[pos:pos + L]; pos += L
        cT_refs = refs[pos:pos + L]; pos += L
        h_scr = refs[pos:pos + L]; pos += L
        c_scr = refs[pos:pos + L]; pos += L
        act_ref = None
        if L > 1:
            act_ref = refs[pos]; pos += 1
        xproj_ref = refs[pos]
        gp_max = xproj_ref.shape[-1]

        chunk = pl.program_id(0)

        @pl.when(chunk == 0)
        def _init():
            for ll in range(L):
                h_scr[ll][...] = layer_refs[ll][3][...]   # h0
                c_scr[ll][...] = layer_refs[ll][4][...]   # c0

        need_mask = B < Bp
        if need_mask:
            row_mask = lax.broadcasted_iota(jnp.int32, (Bp, 1), 0) < B

        if static_full:
            n_valid = None
        else:
            n_valid = jnp.minimum(chunk_t, t_total - chunk * chunk_t)

        for l in range(L):
            (wih_ref, whh_ref, bias_ref, _h0, _c0,
             gamma_ref, beta_ref) = layer_refs[l]
            Hr = hidden[l]
            Gp = gate_widths[l]
            is_last = (l == L - 1)

            # ---- hoisted input projection (+bias): one MXU matmul / chunk ----
            xin = x_ref[...] if l == 0 else act_ref[...]
            xin = xin.astype(compute_dtype)
            proj = jnp.dot(xin, wih_ref[...],
                           preferred_element_type=jnp.float32) + bias_ref[...]
            if Gp == gp_max:
                xproj_ref[...] = proj.astype(xproj_ref.dtype)
            else:
                xproj_ref[:, :Gp] = proj.astype(xproj_ref.dtype)

            # ------------------------- one timestep ---------------------------
            def step(t):
                if isinstance(t, int):
                    row = t * Bp
                else:
                    row = pl.multiple_of(t * Bp, Bp)
                xp = xproj_ref[pl.ds(row, Bp), :Gp].astype(jnp.float32)
                h = h_scr[l][...]
                c = c_scr[l][...]
                rec = jnp.dot(h.astype(compute_dtype), whh_ref[...],
                              preferred_element_type=jnp.float32)
                gates = xp + rec                       # (Bp, Gp) f32, packed
                i_g = jax.nn.sigmoid(gates[:, 0:Hr])
                f_g = jax.nn.sigmoid(gates[:, Hr:2 * Hr])
                g_g = jnp.tanh(gates[:, 2 * Hr:3 * Hr])
                o_g = jax.nn.sigmoid(gates[:, 3 * Hr:4 * Hr])
                c_new = f_g * c + i_g * g_g
                h_new = o_g * jnp.tanh(c_new)
                if need_mask:                          # keep pad rows exactly 0
                    h_new = jnp.where(row_mask, h_new, 0.0)
                    c_new = jnp.where(row_mask, c_new, 0.0)
                h_scr[l][...] = h_new
                c_scr[l][...] = c_new
                if layer_norm:                          # inline LayerNorm
                    inv_h = 1.0 / Hr
                    mu = jnp.sum(h_new, axis=-1, keepdims=True) * inv_h
                    d = h_new - mu
                    var = jnp.sum(d * d, axis=-1, keepdims=True) * inv_h
                    y = (d * lax.rsqrt(var + _LN_EPS) * gamma_ref[...]
                         + beta_ref[...])
                else:
                    y = h_new
                if need_mask:
                    y = jnp.where(row_mask, y, 0.0)
                if is_last:
                    out_ref[t] = y.astype(out_ref.dtype)
                else:
                    y_act = y.astype(act_ref.dtype)
                    if act_w > Hr:
                        y_act = jnp.concatenate(
                            [y_act, jnp.zeros((Bp, act_w - Hr), act_ref.dtype)],
                            axis=-1)
                    act_ref[pl.ds(row, Bp), :] = y_act

            def body(t, carry):
                step(t)
                return carry

            if static_full:
                if chunk_t <= _UNROLL_CAP:
                    for t in range(chunk_t):            # fully unrolled
                        step(t)
                else:
                    lax.fori_loop(0, chunk_t, body, 0)
            else:
                if chunk_t <= _UNROLL_CAP:
                    @pl.when(n_valid == chunk_t)        # unrolled fast path
                    def _full_chunk():
                        for t in range(chunk_t):
                            step(t)

                    @pl.when(n_valid < chunk_t)         # partial tail chunk
                    def _tail_chunk():
                        lax.fori_loop(0, n_valid, body, 0)
                else:
                    lax.fori_loop(0, n_valid, body, 0)

        # resident output blocks (constant index map) -> flushed once at end
        for l in range(L):
            hT_refs[l][...] = h_scr[l][...]
            cT_refs[l][...] = c_scr[l][...]

    return kernel


# ------------------- weight packing (PyTorch -> gate-packed) -----------------
def _prep_wih_t(w, in_w, gp, dtype):
    """w: (4H, in_dim) -> (in_w, gp), transposed; gate g in cols [g*H,(g+1)*H)."""
    four_h, in_dim = w.shape
    out = jnp.zeros((in_w, gp), dtype)
    return out.at[:in_dim, :four_h].set(w.T.astype(dtype))


def _prep_whh_t(w, gp, dtype):
    four_h, h = w.shape
    out = jnp.zeros((h, gp), dtype)
    return out.at[:, :four_h].set(w.T.astype(dtype))


def _prep_bias(b, gp):
    out = jnp.zeros((1, gp), jnp.float32)
    return out.at[0, :b.shape[0]].set(b.astype(jnp.float32))


# --------------------------------- wrapper -----------------------------------
def model_attacker_lstm_forward(x, params, hx=None, layer_norm=True,
                                compute_dtype=jnp.bfloat16):
    """Forward of ModelAttackerLSTMLegacy (MultiLayerLSTM).

    x: (batch, seq, input) -> (out (batch, seq, H_last),
                               ((h_n per layer...), (c_n per layer...)))
    """
    x = jnp.asarray(x)
    B, T, In = x.shape
    L = len(params)
    Bp = _round_up(B, _SUBLANE)
    hidden = [int(p["w_hh"].shape[1]) for p in params]
    gate_widths = [_round_up(4 * H, _LANE) for H in hidden]
    act_w = max(hidden[:-1]) if L > 1 else 0
    in_widths = [In] + [act_w] * (L - 1)      # wih first-dim per layer (padded)
    cd_size = jnp.dtype(compute_dtype).itemsize

    chunk_t = _pick_chunk_t(T, Bp, In, hidden, in_widths, gate_widths, act_w,
                            cd_size)
    num_chunks = -(-T // chunk_t)
    T_pad = num_chunks * chunk_t

    # single host-side transpose+pad into time-major flattened (T_pad*Bp, In)
    x_tm = jnp.zeros((T_pad, Bp, In), compute_dtype)
    x_tm = x_tm.at[:T, :B, :].set(
        jnp.transpose(x, (1, 0, 2)).astype(compute_dtype))
    x_flat = x_tm.reshape(T_pad * Bp, In)

    args = [x_flat]
    in_specs = [pl.BlockSpec((chunk_t * Bp, In), lambda c: (c, 0))]
    for l, p in enumerate(params):
        H, Gp, iw = hidden[l], gate_widths[l], in_widths[l]
        wih = _prep_wih_t(p["w_ih"], iw, Gp, compute_dtype)
        whh = _prep_whh_t(p["w_hh"], Gp, compute_dtype)
        bias = _prep_bias(p["b_ih"] + p["b_hh"], Gp)
        gamma = p["gamma"].astype(jnp.float32).reshape(1, H)
        beta = p["beta"].astype(jnp.float32).reshape(1, H)
        h0 = jnp.zeros((Bp, H), jnp.float32)
        c0 = jnp.zeros((Bp, H), jnp.float32)
        if hx is not None:
            h0 = h0.at[:B, :].set(hx[0][l].astype(jnp.float32))
            c0 = c0.at[:B, :].set(hx[1][l].astype(jnp.float32))
        args += [wih, whh, bias, h0, c0, gamma, beta]
        in_specs += [
            pl.BlockSpec((iw, Gp), lambda c: (0, 0)),
            pl.BlockSpec((H, Gp), lambda c: (0, 0)),
            pl.BlockSpec((1, Gp), lambda c: (0, 0)),
            pl.BlockSpec((Bp, H), lambda c: (0, 0)),
            pl.BlockSpec((Bp, H), lambda c: (0, 0)),
            pl.BlockSpec((1, H), lambda c: (0, 0)),
            pl.BlockSpec((1, H), lambda c: (0, 0)),
        ]

    H_last = hidden[-1]
    out_shape = [jax.ShapeDtypeStruct((T_pad, Bp, H_last), jnp.float32)]
    out_specs = [pl.BlockSpec((chunk_t, Bp, H_last), lambda c: (c, 0, 0))]
    for H in hidden:                                        # hT per layer
        out_shape.append(jax.ShapeDtypeStruct((Bp, H), jnp.float32))
        out_specs.append(pl.BlockSpec((Bp, H), lambda c: (0, 0)))
    for H in hidden:                                        # cT per layer
        out_shape.append(jax.ShapeDtypeStruct((Bp, H), jnp.float32))
        out_specs.append(pl.BlockSpec((Bp, H), lambda c: (0, 0)))

    scratch_shapes = []
    for H in hidden:                                        # h carries
        scratch_shapes.append(pltpu.VMEM((Bp, H), jnp.float32))
    for H in hidden:                                        # c carries
        scratch_shapes.append(pltpu.VMEM((Bp, H), jnp.float32))
    if L > 1:                                               # inter-layer act
        scratch_shapes.append(pltpu.VMEM((chunk_t * Bp, act_w), compute_dtype))
    scratch_shapes.append(                                  # hoisted x-proj
        pltpu.VMEM((chunk_t * Bp, max(gate_widths)), compute_dtype))

    kernel = _make_fused_lstm_kernel(
        num_layers=L, chunk_t=chunk_t, Bp=Bp, B=B, hidden=hidden,
        gate_widths=gate_widths, act_w=act_w, t_total=T,
        layer_norm=layer_norm, compute_dtype=compute_dtype)

    grid_spec = pltpu.PrefetchScalarGridSpec(
        num_scalar_prefetch=0,
        grid=(num_chunks,),
        in_specs=in_specs,
        out_specs=tuple(out_specs),
        scratch_shapes=scratch_shapes)

    outs = pl.pallas_call(
        kernel,
        out_shape=tuple(out_shape),
        grid_spec=grid_spec,
        compiler_params=pltpu.CompilerParams(
            dimension_semantics=("arbitrary",),   # sequential time recurrence
            vmem_limit_bytes=_VMEM_LIMIT),
    )(*args)

    out_seq = outs[0]
    h_n = tuple(outs[1 + l][:B, :] for l in range(L))
    c_n = tuple(outs[1 + L + l][:B, :] for l in range(L))
    out = jnp.transpose(out_seq[:T, :B, :], (1, 0, 2))
    return out, (h_n, c_n)


# ------------------------------ params / reference ---------------------------
def init_params(key, num_layers, input_size, hidden_sizes):
    """PyTorch-style uniform(-1/sqrt(H), 1/sqrt(H)) init."""
    params = []
    in_sz = input_size
    for l in range(num_layers):
        H = hidden_sizes[l]
        k = 1.0 / jnp.sqrt(H)
        key, k1, k2, k3, k4 = jax.random.split(key, 5)
        params.append(dict(
            w_ih=jax.random.uniform(k1, (4 * H, in_sz), jnp.float32, -k, k),
            w_hh=jax.random.uniform(k2, (4 * H, H), jnp.float32, -k, k),
            b_ih=jax.random.uniform(k3, (4 * H,), jnp.float32, -k, k),
            b_hh=jax.random.uniform(k4, (4 * H,), jnp.float32, -k, k),
            gamma=jnp.ones((H,), jnp.float32),
            beta=jnp.zeros((H,), jnp.float32)))
        in_sz = H
    return params


def _reference_forward(x, params, layer_norm=True):
    B, T, _ = x.shape
    prec = lax.Precision.HIGHEST
    x_tm = jnp.transpose(x, (1, 0, 2)).astype(jnp.float32)
    h_ns, c_ns = [], []
    for p in params:
        H = p["w_hh"].shape[1]
        h = jnp.zeros((B, H), jnp.float32)
        c = jnp.zeros((B, H), jnp.float32)
        outs = []
        for t in range(T):
            gates = (jnp.dot(x_tm[t], p["w_ih"].T, precision=prec)
                     + jnp.dot(h, p["w_hh"].T, precision=prec)
                     + p["b_ih"] + p["b_hh"])
            i_g = jax.nn.sigmoid(gates[:, 0:H])
            f_g = jax.nn.sigmoid(gates[:, H:2 * H])
            g_g = jnp.tanh(gates[:, 2 * H:3 * H])
            o_g = jax.nn.sigmoid(gates[:, 3 * H:4 * H])
            c = f_g * c + i_g * g_g
            h = o_g * jnp.tanh(c)
            if layer_norm:
                mu = jnp.mean(h, axis=-1, keepdims=True)
                var = jnp.mean((h - mu) ** 2, axis=-1, keepdims=True)
                y = (h - mu) * lax.rsqrt(var + _LN_EPS) * p["gamma"] + p["beta"]
            else:
                y = h
            outs.append(y)
        h_ns.append(h)
        c_ns.append(c)
        x_tm = jnp.stack(outs, axis=0)
    return jnp.transpose(x_tm, (1, 0, 2)), h_ns, c_ns


if __name__ == "__main__":
    # Shapes consistent with the module: lstm_num_layers=2, lstm_input_size=8,
    # lstm_hidden_size=32.
    batch, seq, input_size = 2, 8, 8
    num_layers = 2
    hidden_sizes = [32, 32]

    key = jax.random.PRNGKey(0)
    key, xk = jax.random.split(key)
    x = jax.random.normal(xk, (batch, seq, input_size), jnp.float32)
    params = init_params(key, num_layers, input_size, hidden_sizes)

    ref_out, ref_h, ref_c = _reference_forward(x, params)

    # --- f32 path: exactness check against the pure-JAX reference ---
    out32, (h32, c32) = model_attacker_lstm_forward(
        x, params, compute_dtype=jnp.float32)
    out32 = jax.block_until_ready(out32)
    assert out32.shape == (batch, seq, hidden_sizes[-1])
    assert len(h32) == num_layers and len(c32) == num_layers
    assert jnp.allclose(out32, ref_out, atol=1e-3, rtol=1e-3), "output mismatch"
    for l in range(num_layers):
        assert h32[l].shape == (batch, hidden_sizes[l])
        assert jnp.allclose(h32[l], ref_h[l], atol=1e-3, rtol=1e-3), "h_n mismatch"
        assert jnp.allclose(c32[l], ref_c[l], atol=1e-3, rtol=1e-3), "c_n mismatch"

    # --- default bf16 MXU path (f32 accumulation / carries / LN) ---
    out_bf, (h_bf, c_bf) = model_attacker_lstm_forward(
        x, params, compute_dtype=jnp.bfloat16)
    out_bf = jax.block_until_ready(out_bf)
    assert bool(jnp.all(jnp.isfinite(out_bf))), "bf16 output not finite"
    assert float(jnp.max(jnp.abs(out_bf - ref_out))) < 0.25, "bf16 output diverged"

    print("KERNEL_OK")
</pallas_src>

<mosaic_0001>
module attributes {stable_mosaic.version = 11 : i64} {
  func.func @kernel(%arg0: i32, %arg1: memref<64x8xf32, #tpu.memory_space<vmem>>, %arg2: memref<8x128xf32, #tpu.memory_space<vmem>>, %arg3: memref<32x128xf32, #tpu.memory_space<vmem>>, %arg4: memref<1x128xf32, #tpu.memory_space<vmem>>, %arg5: memref<8x32xf32, #tpu.memory_space<vmem>>, %arg6: memref<8x32xf32, #tpu.memory_space<vmem>>, %arg7: memref<1x32xf32, #tpu.memory_space<vmem>>, %arg8: memref<1x32xf32, #tpu.memory_space<vmem>>, %arg9: memref<32x128xf32, #tpu.memory_space<vmem>>, %arg10: memref<32x128xf32, #tpu.memory_space<vmem>>, %arg11: memref<1x128xf32, #tpu.memory_space<vmem>>, %arg12: memref<8x32xf32, #tpu.memory_space<vmem>>, %arg13: memref<8x32xf32, #tpu.memory_space<vmem>>, %arg14: memref<1x32xf32, #tpu.memory_space<vmem>>, %arg15: memref<1x32xf32, #tpu.memory_space<vmem>>, %arg16: memref<8x8x32xf32, #tpu.memory_space<vmem>>, %arg17: memref<8x32xf32, #tpu.memory_space<vmem>>, %arg18: memref<8x32xf32, #tpu.memory_space<vmem>>, %arg19: memref<8x32xf32, #tpu.memory_space<vmem>>, %arg20: memref<8x32xf32, #tpu.memory_space<vmem>>, %arg21: memref<8x32xf32, #tpu.memory_space<vmem>>, %arg22: memref<8x32xf32, #tpu.memory_space<vmem>>, %arg23: memref<8x32xf32, #tpu.memory_space<vmem>>, %arg24: memref<8x32xf32, #tpu.memory_space<vmem>>, %arg25: memref<64x32xf32, #tpu.memory_space<vmem>>, %arg26: memref<64x128xf32, #tpu.memory_space<vmem>>) attributes {dimension_semantics = [#tpu.dimension_semantics<arbitrary>], iteration_bounds = array<i64: 1>, scalar_prefetch = 0 : i64, scratch_operands = 6 : i64, tpu.core_type = #tpu.core_type<tc>, window_params = [{transform_indices = @transform_0, window_bounds = array<i64: 64, 8>}, {pipeline_mode = #tpu.pipeline_mode<synchronous>, transform_indices = @transform_1, window_bounds = array<i64: 8, 128>}, {pipeline_mode = #tpu.pipeline_mode<synchronous>, transform_indices = @transform_2, window_bounds = array<i64: 32, 128>}, {pipeline_mode = #tpu.pipeline_mode<synchronous>, transform_indices = @transform_3, window_bounds = array<i64: 1, 128>}, {pipeline_mode = #tpu.pipeline_mode<synchronous>, transform_indices = @transform_4, window_bounds = array<i64: 8, 32>}, {pipeline_mode = #tpu.pipeline_mode<synchronous>, transform_indices = @transform_5, window_bounds = array<i64: 8, 32>}, {pipeline_mode = #tpu.pipeline_mode<synchronous>, transform_indices = @transform_6, window_bounds = array<i64: 1, 32>}, {pipeline_mode = #tpu.pipeline_mode<synchronous>, transform_indices = @transform_7, window_bounds = array<i64: 1, 32>}, {pipeline_mode = #tpu.pipeline_mode<synchronous>, transform_indices = @transform_8, window_bounds = array<i64: 32, 128>}, {pipeline_mode = #tpu.pipeline_mode<synchronous>, transform_indices = @transform_9, window_bounds = array<i64: 32, 128>}, {pipeline_mode = #tpu.pipeline_mode<synchronous>, transform_indices = @transform_10, window_bounds = array<i64: 1, 128>}, {pipeline_mode = #tpu.pipeline_mode<synchronous>, transform_indices = @transform_11, window_bounds = array<i64: 8, 32>}, {pipeline_mode = #tpu.pipeline_mode<synchronous>, transform_indices = @transform_12, window_bounds = array<i64: 8, 32>}, {pipeline_mode = #tpu.pipeline_mode<synchronous>, transform_indices = @transform_13, window_bounds = array<i64: 1, 32>}, {pipeline_mode = #tpu.pipeline_mode<synchronous>, transform_indices = @transform_14, window_bounds = array<i64: 1, 32>}, {transform_indices = @transform_15, window_bounds = array<i64: 8, 8, 32>}, {pipeline_mode = #tpu.pipeline_mode<synchronous>, transform_indices = @transform_16, window_bounds = array<i64: 8, 32>}, {pipeline_mode = #tpu.pipeline_mode<synchronous>, transform_indices = @transform_17, window_bounds = array<i64: 8, 32>}, {pipeline_mode = #tpu.pipeline_mode<synchronous>, transform_indices = @transform_18, window_bounds = array<i64: 8, 32>}, {pipeline_mode = #tpu.pipeline_mode<synchronous>, transform_indices = @transform_19, window_bounds = array<i64: 8, 32>}]} {
    %c0_i32 = arith.constant 0 : i32
    %0 = arith.cmpi eq, %arg0, %c0_i32 : i32
    %1 = arith.extui %0 : i1 to i32
    %c0_i32_0 = arith.constant 0 : i32
    %2 = arith.cmpi ne, %1, %c0_i32_0 : i32
    scf.if %2 {
      %c0_507 = arith.constant 0 : index
      %c0_508 = arith.constant 0 : index
      %1132 = vector.load %arg5[%c0_507, %c0_508] : memref<8x32xf32, #tpu.memory_space<vmem>>, vector<8x32xf32>
      %c0_509 = arith.constant 0 : index
      %c0_510 = arith.constant 0 : index
      %1133 = vector.load %arg21[%c0_509, %c0_510] : memref<8x32xf32, #tpu.memory_space<vmem>>, vector<8x32xf32>
      tpu.vector_store %arg21[%c0_509, %c0_510], %1132 {strides = array<i32>} : memref<8x32xf32, #tpu.memory_space<vmem>>, vector<8x32xf32>,
      %c0_511 = arith.constant 0 : index
      %c0_512 = arith.constant 0 : index
      %1134 = vector.load %arg6[%c0_511, %c0_512] : memref<8x32xf32, #tpu.memory_space<vmem>>, vector<8x32xf32>
      %c0_513 = arith.constant 0 : index
      %c0_514 = arith.constant 0 : index
      %1135 = vector.load %arg23[%c0_513, %c0_514] : memref<8x32xf32, #tpu.memory_space<vmem>>, vector<8x32xf32>
      tpu.vector_store %arg23[%c0_513, %c0_514], %1134 {strides = array<i32>} : memref<8x32xf32, #tpu.memory_space<vmem>>, vector<8x32xf32>,
      %c0_515 = arith.constant 0 : index
      %c0_516 = arith.constant 0 : index
      %1136 = vector.load %arg12[%c0_515, %c0_516] : memref<8x32xf32, #tpu.memory_space<vmem>>, vector<8x32xf32>
      %c0_517 = arith.constant 0 : index
      %c0_518 = arith.constant 0 : index
      %1137 = vector.load %arg22[%c0_517, %c0_518] : memref<8x32xf32, #tpu.memory_space<vmem>>, vector<8x32xf32>
      tpu.vector_store %arg22[%c0_517, %c0_518], %1136 {strides = array<i32>} : memref<8x32xf32, #tpu.memory_space<vmem>>, vector<8x32xf32>,
      %c0_519 = arith.constant 0 : index
      %c0_520 = arith.constant 0 : index
      %1138 = vector.load %arg13[%c0_519, %c0_520] : memref<8x32xf32, #tpu.memory_space<vmem>>, vector<8x32xf32>
      %c0_521 = arith.constant 0 : index
      %c0_522 = arith.constant 0 : index
      %1139 = vector.load %arg24[%c0_521, %c0_522] : memref<8x32xf32, #tpu.memory_space<vmem>>, vector<8x32xf32>
      tpu.vector_store %arg24[%c0_521, %c0_522], %1138 {strides = array<i32>} : memref<8x32xf32, #tpu.memory_space<vmem>>, vector<8x32xf32>,
    } else {
    }
    %3 = tpu.iota {dimensions = array<i32: 0>} : vector<8x1xi32>
    %c2_i32 = arith.constant 2 : i32
    %4 = vector.broadcast %c2_i32 : i32 to vector<8x1xi32>
    %5 = arith.cmpi slt, %3, %4 : vector<8x1xi32>
    %c0 = arith.constant 0 : index
    %c0_1 = arith.constant 0 : index
    %6 = vector.load %arg1[%c0, %c0_1] : memref<64x8xf32, #tpu.memory_space<vmem>>, vector<64x8xf32>
    %c0_2 = arith.constant 0 : index
    %c0_3 = arith.constant 0 : index
    %7 = vector.load %arg2[%c0_2, %c0_3] : memref<8x128xf32, #tpu.memory_space<vmem>>, vector<8x128xf32>
    %cst = arith.constant dense<0.000000e+00> : vector<64x128xf32>
    %8 = tpu.matmul %6, %7, %cst {dimension_numbers = #tpu.dot_dimension_numbers<[1], [0], [0], [1], [0, 0, 1, 1], [], []>} : vector<64x8xf32>, vector<8x128xf32>, vector<64x128xf32> -> vector<64x128xf32>
    %c0_4 = arith.constant 0 : index
    %c0_5 = arith.constant 0 : index
    %9 = vector.load %arg4[%c0_4, %c0_5] : memref<1x128xf32, #tpu.memory_space<vmem>>, vector<1x128xf32>
    %10 = vector.broadcast %9 : vector<1x128xf32> to vector<64x128xf32>
    %11 = arith.addf %8, %10 : vector<64x128xf32>
    %c0_6 = arith.constant 0 : index
    %c0_7 = arith.constant 0 : index
    %12 = vector.load %arg26[%c0_6, %c0_7] : memref<64x128xf32, #tpu.memory_space<vmem>>, vector<64x128xf32>
    tpu.vector_store %arg26[%c0_6, %c0_7], %11 {strides = array<i32>} : memref<64x128xf32, #tpu.memory_space<vmem>>, vector<64x128xf32>,
    %c0_8 = arith.constant 0 : index
    %c0_9 = arith.constant 0 : index
    %13 = vector.load %arg26[%c0_8, %c0_9] : memref<64x128xf32, #tpu.memory_space<vmem>>, vector<8x128xf32>
    %c0_10 = arith.constant 0 : index
    %c0_11 = arith.constant 0 : index
    %14 = vector.load %arg21[%c0_10, %c0_11] : memref<8x32xf32, #tpu.memory_space<vmem>>, vector<8x32xf32>
    %c0_12 = arith.constant 0 : index
    %c0_13 = arith.constant 0 : index
    %15 = vector.load %arg23[%c0_12, %c0_13] : memref<8x32xf32, #tpu.memory_space<vmem>>, vector<8x32xf32>
    %c0_14 = arith.constant 0 : index
    %c0_15 = arith.constant 0 : index
    %16 = vector.load %arg3[%c0_14, %c0_15] : memref<32x128xf32, #tpu.memory_space<vmem>>, vector<32x128xf32>
    %cst_16 = arith.constant dense<0.000000e+00> : vector<8x128xf32>
    %17 = tpu.matmul %14, %16, %cst_16 {dimension_numbers = #tpu.dot_dimension_numbers<[1], [0], [0], [1], [0, 0, 1, 1], [], []>} : vector<8x32xf32>, vector<32x128xf32>, vector<8x128xf32> -> vector<8x128xf32>
    %18 = arith.addf %13, %17 : vector<8x128xf32>
    %19 = vector.extract_strided_slice %18 {offsets = [0, 0], sizes = [8, 32], strides = [1, 1]} : vector<8x128xf32> to vector<8x32xf32>
    %20 = arith.negf %19 : vector<8x32xf32>
    %21 = math.exp %20 : vector<8x32xf32>
    %cst_17 = arith.constant 1.000000e+00 : f32
    %22 = vector.broadcast %cst_17 : f32 to vector<8x32xf32>
    %23 = arith.addf %22, %21 : vector<8x32xf32>
    %24 = arith.divf %22, %23 : vector<8x32xf32>
    %25 = vector.extract_strided_slice %18 {offsets = [0, 32], sizes = [8, 32], strides = [1, 1]} : vector<8x128xf32> to vector<8x32xf32>
    %26 = arith.negf %25 : vector<8x32xf32>
    %27 = math.exp %26 : vector<8x32xf32>
    %cst_18 = arith.constant 1.000000e+00 : f32
    %28 = vector.broadcast %cst_18 : f32 to vector<8x32xf32>
    %29 = arith.addf %28, %27 : vector<8x32xf32>
    %30 = arith.divf %28, %29 : vector<8x32xf32>
    %31 = vector.extract_strided_slice %18 {offsets = [0, 64], sizes = [8, 32], strides = [1, 1]} : vector<8x128xf32> to vector<8x32xf32>
    %32 = math.tanh %31 : vector<8x32xf32>
    %33 = vector.extract_strided_slice %18 {offsets = [0, 96], sizes = [8, 32], strides = [1, 1]} : vector<8x128xf32> to vector<8x32xf32>
    %34 = arith.negf %33 : vector<8x32xf32>
    %35 = math.exp %34 : vector<8x32xf32>
    %cst_19 = arith.constant 1.000000e+00 : f32
    %36 = vector.broadcast %cst_19 : f32 to vector<8x32xf32>
    %37 = arith.addf %36, %35 : vector<8x32xf32>
    %38 = arith.divf %36, %37 : vector<8x32xf32>
    %39 = arith.mulf %30, %15 : vector<8x32xf32>
    %40 = arith.mulf %24, %32 : vector<8x32xf32>
    %41 = arith.addf %39, %40 : vector<8x32xf32>
    %42 = math.tanh %41 : vector<8x32xf32>
    %43 = arith.mulf %38, %42 : vector<8x32xf32>
    %cst_20 = arith.constant 0.000000e+00 : f32
    %44 = vector.shape_cast %5 : vector<8x1xi1> to vector<8x1xi1>
    %45 = vector.broadcast %44 : vector<8x1xi1> to vector<8x32xi1>
    %46 = vector.broadcast %cst_20 : f32 to vector<8x32xf32>
    %47 = arith.select %45, %43, %46 : vector<8x32xi1>, vector<8x32xf32>
    %cst_21 = arith.constant 0.000000e+00 : f32
    %48 = vector.shape_cast %5 : vector<8x1xi1> to vector<8x1xi1>
    %49 = vector.broadcast %48 : vector<8x1xi1> to vector<8x32xi1>
    %50 = vector.broadcast %cst_21 : f32 to vector<8x32xf32>
    %51 = arith.select %49, %41, %50 : vector<8x32xi1>, vector<8x32xf32>
    %c0_22 = arith.constant 0 : index
    %c0_23 = arith.constant 0 : index
    %52 = vector.load %arg21[%c0_22, %c0_23] : memref<8x32xf32, #tpu.memory_space<vmem>>, vector<8x32xf32>
    tpu.vector_store %arg21[%c0_22, %c0_23], %47 {strides = array<i32>} : memref<8x32xf32, #tpu.memory_space<vmem>>, vector<8x32xf32>,
    %c0_24 = arith.constant 0 : index
    %c0_25 = arith.constant 0 : index
    %53 = vector.load %arg23[%c0_24, %c0_25] : memref<8x32xf32, #tpu.memory_space<vmem>>, vector<8x32xf32>
    tpu.vector_store %arg23[%c0_24, %c0_25], %51 {strides = array<i32>} : memref<8x32xf32, #tpu.memory_space<vmem>>, vector<8x32xf32>,
    %cst_26 = arith.constant dense<0.000000e+00> : vector<8xf32>
    %54 = vector.multi_reduction <add>, %47, %cst_26 [1] : vector<8x32xf32> to vector<8xf32>
    %55 = vector.shape_cast %54 : vector<8xf32> to vector<8x1xf32>
    %cst_27 = arith.constant 3.125000e-02 : f32
    %56 = vector.broadcast %cst_27 : f32 to vector<8x1xf32>
    %57 = arith.mulf %55, %56 : vector<8x1xf32>
    %58 = vector.broadcast %57 : vector<8x1xf32> to vector<8x32xf32>
    %59 = arith.subf %47, %58 : vector<8x32xf32>
    %60 = arith.mulf %59, %59 : vector<8x32xf32>
    %cst_28 = arith.constant dense<0.000000e+00> : vector<8xf32>
    %61 = vector.multi_reduction <add>, %60, %cst_28 [1] : vector<8x32xf32> to vector<8xf32>
    %62 = vector.shape_cast %61 : vector<8xf32> to vector<8x1xf32>
    %cst_29 = arith.constant 3.125000e-02 : f32
    %63 = vector.broadcast %cst_29 : f32 to vector<8x1xf32>
    %64 = arith.mulf %62, %63 : vector<8x1xf32>
    %cst_30 = arith.constant 9.99999974E-6 : f32
    %65 = vector.broadcast %cst_30 : f32 to vector<8x1xf32>
    %66 = arith.addf %64, %65 : vector<8x1xf32>
    %67 = math.rsqrt %66 : vector<8x1xf32>
    %68 = vector.broadcast %67 : vector<8x1xf32> to vector<8x32xf32>
    %69 = arith.mulf %59, %68 : vector<8x32xf32>
    %c0_31 = arith.constant 0 : index
    %c0_32 = arith.constant 0 : index
    %70 = vector.load %arg7[%c0_31, %c0_32] : memref<1x32xf32, #tpu.memory_space<vmem>>, vector<1x32xf32>
    %71 = vector.broadcast %70 : vector<1x32xf32> to vector<8x32xf32>
    %72 = arith.mulf %69, %71 : vector<8x32xf32>
    %c0_33 = arith.constant 0 : index
    %c0_34 = arith.constant 0 : index
    %73 = vector.load %arg8[%c0_33, %c0_34] : memref<1x32xf32, #tpu.memory_space<vmem>>, vector<1x32xf32>
    %74 = vector.broadcast %73 : vector<1x32xf32> to vector<8x32xf32>
    %75 = arith.addf %72, %74 : vector<8x32xf32>
    %cst_35 = arith.constant 0.000000e+00 : f32
    %76 = vector.shape_cast %5 : vector<8x1xi1> to vector<8x1xi1>
    %77 = vector.broadcast %76 : vector<8x1xi1> to vector<8x32xi1>
    %78 = vector.broadcast %cst_35 : f32 to vector<8x32xf32>
    %79 = arith.select %77, %75, %78 : vector<8x32xi1>, vector<8x32xf32>
    %c0_36 = arith.constant 0 : index
    %c0_37 = arith.constant 0 : index
    %80 = vector.load %arg25[%c0_36, %c0_37] : memref<64x32xf32, #tpu.memory_space<vmem>>, vector<8x32xf32>
    tpu.vector_store %arg25[%c0_36, %c0_37], %79 {strides = array<i32>} : memref<64x32xf32, #tpu.memory_space<vmem>>, vector<8x32xf32>,
    %c8 = arith.constant 8 : index
    %c0_38 = arith.constant 0 : index
    %81 = vector.load %arg26[%c8, %c0_38] : memref<64x128xf32, #tpu.memory_space<vmem>>, vector<8x128xf32>
    %c0_39 = arith.constant 0 : index
    %c0_40 = arith.constant 0 : index
    %82 = vector.load %arg21[%c0_39, %c0_40] : memref<8x32xf32, #tpu.memory_space<vmem>>, vector<8x32xf32>
    %c0_41 = arith.constant 0 : index
    %c0_42 = arith.constant 0 : index
    %83 = vector.load %arg23[%c0_41, %c0_42] : memref<8x32xf32, #tpu.memory_space<vmem>>, vector<8x32xf32>
    %c0_43 = arith.constant 0 : index
    %c0_44 = arith.constant 0 : index
    %84 = vector.load %arg3[%c0_43, %c0_44] : memref<32x128xf32, #tpu.memory_space<vmem>>, vector<32x128xf32>
    %cst_45 = arith.constant dense<0.000000e+00> : vector<8x128xf32>
    %85 = tpu.matmul %82, %84, %cst_45 {dimension_numbers = #tpu.dot_dimension_numbers<[1], [0], [0], [1], [0, 0, 1, 1], [], []>} : vector<8x32xf32>, vector<32x128xf32>, vector<8x128xf32> -> vector<8x128xf32>
    %86 = arith.addf %81, %85 : vector<8x128xf32>
    %87 = vector.extract_strided_slice %86 {offsets = [0, 0], sizes = [8, 32], strides = [1, 1]} : vector<8x128xf32> to vector<8x32xf32>
    %88 = arith.negf %87 : vector<8x32xf32>
    %89 = math.exp %88 : vector<8x32xf32>
    %cst_46 = arith.constant 1.000000e+00 : f32
    %90 = vector.broadcast %cst_46 : f32 to vector<8x32xf32>
    %91 = arith.addf %90, %89 : vector<8x32xf32>
    %92 = arith.divf %90, %91 : vector<8x32xf32>
    %93 = vector.extract_strided_slice %86 {offsets = [0, 32], sizes = [8, 32], strides = [1, 1]} : vector<8x128xf32> to vector<8x32xf32>
    %94 = arith.negf %93 : vector<8x32xf32>
    %95 = math.exp %94 : vector<8x32xf32>
    %cst_47 = arith.constant 1.000000e+00 : f32
    %96 = vector.broadcast %cst_47 : f32 to vector<8x32xf32>
    %97 = arith.addf %96, %95 : vector<8x32xf32>
    %98 = arith.divf %96, %97 : vector<8x32xf32>
    %99 = vector.extract_strided_slice %86 {offsets = [0, 64], sizes = [8, 32], strides = [1, 1]} : vector<8x128xf32> to vector<8x32xf32>
    %100 = math.tanh %99 : vector<8x32xf32>
    %101 = vector.extract_strided_slice %86 {offsets = [0, 96], sizes = [8, 32], strides = [1, 1]} : vector<8x128xf32> to vector<8x32xf32>
    %102 = arith.negf %101 : vector<8x32xf32>
    %103 = math.exp %102 : vector<8x32xf32>
    %cst_48 = arith.constant 1.000000e+00 : f32
    %104 = vector.broadcast %cst_48 : f32 to vector<8x32xf32>
    %105 = arith.addf %104, %103 : vector<8x32xf32>
    %106 = arith.divf %104, %105 : vector<8x32xf32>
    %107 = arith.mulf %98, %83 : vector<8x32xf32>
    %108 = arith.mulf %92, %100 : vector<8x32xf32>
    %109 = arith.addf %107, %108 : vector<8x32xf32>
    %110 = math.tanh %109 : vector<8x32xf32>
    %111 = arith.mulf %106, %110 : vector<8x32xf32>
    %cst_49 = arith.constant 0.000000e+00 : f32
    %112 = vector.shape_cast %5 : vector<8x1xi1> to vector<8x1xi1>
    %113 = vector.broadcast %112 : vector<8x1xi1> to vector<8x32xi1>
    %114 = vector.broadcast %cst_49 : f32 to vector<8x32xf32>
    %115 = arith.select %113, %111, %114 : vector<8x32xi1>, vector<8x32xf32>
    %cst_50 = arith.constant 0.000000e+00 : f32
    %116 = vector.shape_cast %5 : vector<8x1xi1> to vector<8x1xi1>
    %117 = vector.broadcast %116 : vector<8x1xi1> to vector<8x32xi1>
    %118 = vector.broadcast %cst_50 : f32 to vector<8x32xf32>
    %119 = arith.select %117, %109, %118 : vector<8x32xi1>, vector<8x32xf32>
    %c0_51 = arith.constant 0 : index
    %c0_52 = arith.constant 0 : index
    %120 = vector.load %arg21[%c0_51, %c0_52] : memref<8x32xf32, #tpu.memory_space<vmem>>, vector<8x32xf32>
    tpu.vector_store %arg21[%c0_51, %c0_52], %115 {strides = array<i32>} : memref<8x32xf32, #tpu.memory_space<vmem>>, vector<8x32xf32>,
    %c0_53 = arith.constant 0 : index
    %c0_54 = arith.constant 0 : index
    %121 = vector.load %arg23[%c0_53, %c0_54] : memref<8x32xf32, #tpu.memory_space<vmem>>, vector<8x32xf32>
    tpu.vector_store %arg23[%c0_53, %c0_54], %119 {strides = array<i32>} : memref<8x32xf32, #tpu.memory_space<vmem>>, vector<8x32xf32>,
    %cst_55 = arith.constant dense<0.000000e+00> : vector<8xf32>
    %122 = vector.multi_reduction <add>, %115, %cst_55 [1] : vector<8x32xf32> to vector<8xf32>
    %123 = vector.shape_cast %122 : vector<8xf32> to vector<8x1xf32>
    %cst_56 = arith.constant 3.125000e-02 : f32
    %124 = vector.broadcast %cst_56 : f32 to vector<8x1xf32>
    %125 = arith.mulf %123, %124 : vector<8x1xf32>
    %126 = vector.broadcast %125 : vector<8x1xf32> to vector<8x32xf32>
    %127 = arith.subf %115, %126 : vector<8x32xf32>
    %128 = arith.mulf %127, %127 : vector<8x32xf32>
    %cst_57 = arith.constant dense<0.000000e+00> : vector<8xf32>
    %129 = vector.multi_reduction <add>, %128, %cst_57 [1] : vector<8x32xf32> to vector<8xf32>
    %130 = vector.shape_cast %129 : vector<8xf32> to vector<8x1xf32>
    %cst_58 = arith.constant 3.125000e-02 : f32
    %131 = vector.broadcast %cst_58 : f32 to vector<8x1xf32>
    %132 = arith.mulf %130, %131 : vector<8x1xf32>
    %cst_59 = arith.constant 9.99999974E-6 : f32
    %133 = vector.broadcast %cst_59 : f32 to vector<8x1xf32>
    %134 = arith.addf %132, %133 : vector<8x1xf32>
    %135 = math.rsqrt %134 : vector<8x1xf32>
    %136 = vector.broadcast %135 : vector<8x1xf32> to vector<8x32xf32>
    %137 = arith.mulf %127, %136 : vector<8x32xf32>
    %c0_60 = arith.constant 0 : index
    %c0_61 = arith.constant 0 : index
    %138 = vector.load %arg7[%c0_60, %c0_61] : memref<1x32xf32, #tpu.memory_space<vmem>>, vector<1x32xf32>
    %139 = vector.broadcast %138 : vector<1x32xf32> to vector<8x32xf32>
    %140 = arith.mulf %137, %139 : vector<8x32xf32>
    %c0_62 = arith.constant 0 : index
    %c0_63 = arith.constant 0 : index
    %141 = vector.load %arg8[%c0_62, %c0_63] : memref<1x32xf32, #tpu.memory_space<vmem>>, vector<1x32xf32>
    %142 = vector.broadcast %141 : vector<1x32xf32> to vector<8x32xf32>
    %143 = arith.addf %140, %142 : vector<8x32xf32>
    %cst_64 = arith.constant 0.000000e+00 : f32
    %144 = vector.shape_cast %5 : vector<8x1xi1> to vector<8x1xi1>
    %145 = vector.broadcast %144 : vector<8x1xi1> to vector<8x32xi1>
    %146 = vector.broadcast %cst_64 : f32 to vector<8x32xf32>
    %147 = arith.select %145, %143, %146 : vector<8x32xi1>, vector<8x32xf32>
    %c8_65 = arith.constant 8 : index
    %c0_66 = arith.constant 0 : index
    %148 = vector.load %arg25[%c8_65, %c0_66] : memref<64x32xf32, #tpu.memory_space<vmem>>, vector<8x32xf32>
    tpu.vector_store %arg25[%c8_65, %c0_66], %147 {strides = array<i32>} : memref<64x32xf32, #tpu.memory_space<vmem>>, vector<8x32xf32>,
    %c16 = arith.constant 16 : index
    %c0_67 = arith.constant 0 : index
    %149 = vector.load %arg26[%c16, %c0_67] : memref<64x128xf32, #tpu.memory_space<vmem>>, vector<8x128xf32>
    %c0_68 = arith.constant 0 : index
    %c0_69 = arith.constant 0 : index
    %150 = vector.load %arg21[%c0_68, %c0_69] : memref<8x32xf32, #tpu.memory_space<vmem>>, vector<8x32xf32>
    %c0_70 = arith.constant 0 : index
    %c0_71 = arith.constant 0 : index
    %151 = vector.load %arg23[%c0_70, %c0_71] : memref<8x32xf32, #tpu.memory_space<vmem>>, vector<8x32xf32>
    %c0_72 = arith.constant 0 : index
    %c0_73 = arith.constant 0 : index
    %152 = vector.load %arg3[%c0_72, %c0_73] : memref<32x128xf32, #tpu.memory_space<vmem>>, vector<32x128xf32>
    %cst_74 = arith.constant dense<0.000000e+00> : vector<8x128xf32>
    %153 = tpu.matmul %150, %152, %cst_74 {dimension_numbers = #tpu.dot_dimension_numbers<[1], [0], [0], [1], [0, 0, 1, 1], [], []>} : vector<8x32xf32>, vector<32x128xf32>, vector<8x128xf32> -> vector<8x128xf32>
    %154 = arith.addf %149, %153 : vector<8x128xf32>
    %155 = vector.extract_strided_slice %154 {offsets = [0, 0], sizes = [8, 32], strides = [1, 1]} : vector<8x128xf32> to vector<8x32xf32>
    %156 = arith.negf %155 : vector<8x32xf32>
    %157 = math.exp %156 : vector<8x32xf32>
    %cst_75 = arith.constant 1.000000e+00 : f32
    %158 = vector.broadcast %cst_75 : f32 to vector<8x32xf32>
    %159 = arith.addf %158, %157 : vector<8x32xf32>
    %160 = arith.divf %158, %159 : vector<8x32xf32>
    %161 = vector.extract_strided_slice %154 {offsets = [0, 32], sizes = [8, 32], strides = [1, 1]} : vector<8x128xf32> to vector<8x32xf32>
    %162 = arith.negf %161 : vector<8x32xf32>
    %163 = math.exp %162 : vector<8x32xf32>
    %cst_76 = arith.constant 1.000000e+00 : f32
    %164 = vector.broadcast %cst_76 : f32 to vector<8x32xf32>
    %165 = arith.addf %164, %163 : vector<8x32xf32>
    %166 = arith.divf %164, %165 : vector<8x32xf32>
    %167 = vector.extract_strided_slice %154 {offsets = [0, 64], sizes = [8, 32], strides = [1, 1]} : vector<8x128xf32> to vector<8x32xf32>
    %168 = math.tanh %167 : vector<8x32xf32>
    %169 = vector.extract_strided_slice %154 {offsets = [0, 96], sizes = [8, 32], strides = [1, 1]} : vector<8x128xf32> to vector<8x32xf32>
    %170 = arith.negf %169 : vector<8x32xf32>
    %171 = math.exp %170 : vector<8x32xf32>
    %cst_77 = arith.constant 1.000000e+00 : f32
    %172 = vector.broadcast %cst_77 : f32 to vector<8x32xf32>
    %173 = arith.addf %172, %171 : vector<8x32xf32>
    %174 = arith.divf %172, %173 : vector<8x32xf32>
    %175 = arith.mulf %166, %151 : vector<8x32xf32>
    %176 = arith.mulf %160, %168 : vector<8x32xf32>
    %177 = arith.addf %175, %176 : vector<8x32xf32>
    %178 = math.tanh %177 : vector<8x32xf32>
    %179 = arith.mulf %174, %178 : vector<8x32xf32>
    %cst_78 = arith.constant 0.000000e+00 : f32
    %180 = vector.shape_cast %5 : vector<8x1xi1> to vector<8x1xi1>
    %181 = vector.broadcast %180 : vector<8x1xi1> to vector<8x32xi1>
    %182 = vector.broadcast %cst_78 : f32 to vector<8x32xf32>
    %183 = arith.select %181, %179, %182 : vector<8x32xi1>, vector<8x32xf32>
    %cst_79 = arith.constant 0.000000e+00 : f32
    %184 = vector.shape_cast %5 : vector<8x1xi1> to vector<8x1xi1>
    %185 = vector.broadcast %184 : vector<8x1xi1> to vector<8x32xi1>
    %186 = vector.broadcast %cst_79 : f32 to vector<8x32xf32>
    %187 = arith.select %185, %177, %186 : vector<8x32xi1>, vector<8x32xf32>
    %c0_80 = arith.constant 0 : index
    %c0_81 = arith.constant 0 : index
    %188 = vector.load %arg21[%c0_80, %c0_81] : memref<8x32xf32, #tpu.memory_space<vmem>>, vector<8x32xf32>
    tpu.vector_store %arg21[%c0_80, %c0_81], %183 {strides = array<i32>} : memref<8x32xf32, #tpu.memory_space<vmem>>, vector<8x32xf32>,
    %c0_82 = arith.constant 0 : index
    %c0_83 = arith.constant 0 : index
    %189 = vector.load %arg23[%c0_82, %c0_83] : memref<8x32xf32, #tpu.memory_space<vmem>>, vector<8x32xf32>
    tpu.vector_store %arg23[%c0_82, %c0_83], %187 {strides = array<i32>} : memref<8x32xf32, #tpu.memory_space<vmem>>, vector<8x32xf32>,
    %cst_84 = arith.constant dense<0.000000e+00> : vector<8xf32>
    %190 = vector.multi_reduction <add>, %183, %cst_84 [1] : vector<8x32xf32> to vector<8xf32>
    %191 = vector.shape_cast %190 : vector<8xf32> to vector<8x1xf32>
    %cst_85 = arith.constant 3.125000e-02 : f32
    %192 = vector.broadcast %cst_85 : f32 to vector<8x1xf32>
    %193 = arith.mulf %191, %192 : vector<8x1xf32>
    %194 = vector.broadcast %193 : vector<8x1xf32> to vector<8x32xf32>
    %195 = arith.subf %183, %194 : vector<8x32xf32>
    %196 = arith.mulf %195, %195 : vector<8x32xf32>
    %cst_86 = arith.constant dense<0.000000e+00> : vector<8xf32>
    %197 = vector.multi_reduction <add>, %196, %cst_86 [1] : vector<8x32xf32> to vector<8xf32>
    %198 = vector.shape_cast %197 : vector<8xf32> to vector<8x1xf32>
    %cst_87 = arith.constant 3.125000e-02 : f32
    %199 = vector.broadcast %cst_87 : f32 to vector<8x1xf32>
    %200 = arith.mulf %198, %199 : vector<8x1xf32>
    %cst_88 = arith.constant 9.99999974E-6 : f32
    %201 = vector.broadcast %cst_88 : f32 to vector<8x1xf32>
    %202 = arith.addf %200, %201 : vector<8x1xf32>
    %203 = math.rsqrt %202 : vector<8x1xf32>
    %204 = vector.broadcast %203 : vector<8x1xf32> to vector<8x32xf32>
    %205 = arith.mulf %195, %204 : vector<8x32xf32>
    %c0_89 = arith.constant 0 : index
    %c0_90 = arith.constant 0 : index
    %206 = vector.load %arg7[%c0_89, %c0_90] : memref<1x32xf32, #tpu.memory_space<vmem>>, vector<1x32xf32>
    %207 = vector.broadcast %206 : vector<1x32xf32> to vector<8x32xf32>
    %208 = arith.mulf %205, %207 : vector<8x32xf32>
    %c0_91 = arith.constant 0 : index
    %c0_92 = arith.constant 0 : index
    %209 = vector.load %arg8[%c0_91, %c0_92] : memref<1x32xf32, #tpu.memory_space<vmem>>, vector<1x32xf32>
    %210 = vector.broadcast %209 : vector<1x32xf32> to vector<8x32xf32>
    %211 = arith.addf %208, %210 : vector<8x32xf32>
    %cst_93 = arith.constant 0.000000e+00 : f32
    %212 = vector.shape_cast %5 : vector<8x1xi1> to vector<8x1xi1>
    %213 = vector.broadcast %212 : vector<8x1xi1> to vector<8x32xi1>
    %214 = vector.broadcast %cst_93 : f32 to vector<8x32xf32>
    %215 = arith.select %213, %211, %214 : vector<8x32xi1>, vector<8x32xf32>
    %c16_94 = arith.constant 16 : index
    %c0_95 = arith.constant 0 : index
    %216 = vector.load %arg25[%c16_94, %c0_95] : memref<64x32xf32, #tpu.memory_space<vmem>>, vector<8x32xf32>
    tpu.vector_store %arg25[%c16_94, %c0_95], %215 {strides = array<i32>} : memref<64x32xf32, #tpu.memory_space<vmem>>, vector<8x32xf32>,
    %c24 = arith.constant 24 : index
    %c0_96 = arith.constant 0 : index
    %217 = vector.load %arg26[%c24, %c0_96] : memref<64x128xf32, #tpu.memory_space<vmem>>, vector<8x128xf32>
    %c0_97 = arith.constant 0 : index
    %c0_98 = arith.constant 0 : index
    %218 = vector.load %arg21[%c0_97, %c0_98] : memref<8x32xf32, #tpu.memory_space<vmem>>, vector<8x32xf32>
    %c0_99 = arith.constant 0 : index
    %c0_100 = arith.constant 0 : index
    %219 = vector.load %arg23[%c0_99, %c0_100] : memref<8x32xf32, #tpu.memory_space<vmem>>, vector<8x32xf32>
    %c0_101 = arith.constant 0 : index
    %c0_102 = arith.constant 0 : index
    %220 = vector.load %arg3[%c0_101, %c0_102] : memref<32x128xf32, #tpu.memory_space<vmem>>, vector<32x128xf32>
    %cst_103 = arith.constant dense<0.000000e+00> : vector<8x128xf32>
    %221 = tpu.matmul %218, %220, %cst_103 {dimension_numbers = #tpu.dot_dimension_numbers<[1], [0], [0], [1], [0, 0, 1, 1], [], []>} : vector<8x32xf32>, vector<32x128xf32>, vector<8x128xf32> -> vector<8x128xf32>
    %222 = arith.addf %217, %221 : vector<8x128xf32>
    %223 = vector.extract_strided_slice %222 {offsets = [0, 0], sizes = [8, 32], strides = [1, 1]} : vector<8x128xf32> to vector<8x32xf32>
    %224 = arith.negf %223 : vector<8x32xf32>
    %225 = math.exp %224 : vector<8x32xf32>
    %cst_104 = arith.constant 1.000000e+00 : f32
    %226 = vector.broadcast %cst_104 : f32 to vector<8x32xf32>
    %227 = arith.addf %226, %225 : vector<8x32xf32>
    %228 = arith.divf %226, %227 : vector<8x32xf32>
    %229 = vector.extract_strided_slice %222 {offsets = [0, 32], sizes = [8, 32], strides = [1, 1]} : vector<8x128xf32> to vector<8x32xf32>
    %230 = arith.negf %229 : vector<8x32xf32>
    %231 = math.exp %230 : vector<8x32xf32>
    %cst_105 = arith.constant 1.000000e+00 : f32
    %232 = vector.broadcast %cst_105 : f32 to vector<8x32xf32>
    %233 = arith.addf %232, %231 : vector<8x32xf32>
    %234 = arith.divf %232, %233 : vector<8x32xf32>
    %235 = vector.extract_strided_slice %222 {offsets = [0, 64], sizes = [8, 32], strides = [1, 1]} : vector<8x128xf32> to vector<8x32xf32>
    %236 = math.tanh %235 : vector<8x32xf32>
    %237 = vector.extract_strided_slice %222 {offsets = [0, 96], sizes = [8, 32], strides = [1, 1]} : vector<8x128xf32> to vector<8x32xf32>
    %238 = arith.negf %237 : vector<8x32xf32>
    %239 = math.exp %238 : vector<8x32xf32>
    %cst_106 = arith.constant 1.000000e+00 : f32
    %240 = vector.broadcast %cst_106 : f32 to vector<8x32xf32>
    %241 = arith.addf %240, %239 : vector<8x32xf32>
    %242 = arith.divf %240, %241 : vector<8x32xf32>
    %243 = arith.mulf %234, %219 : vector<8x32xf32>
    %244 = arith.mulf %228, %236 : vector<8x32xf32>
    %245 = arith.addf %243, %244 : vector<8x32xf32>
    %246 = math.tanh %245 : vector<8x32xf32>
    %247 = arith.mulf %242, %246 : vector<8x32xf32>
    %cst_107 = arith.constant 0.000000e+00 : f32
    %248 = vector.shape_cast %5 : vector<8x1xi1> to vector<8x1xi1>
    %249 = vector.broadcast %248 : vector<8x1xi1> to vector<8x32xi1>
    %250 = vector.broadcast %cst_107 : f32 to vector<8x32xf32>
    %251 = arith.select %249, %247, %250 : vector<8x32xi1>, vector<8x32xf32>
    %cst_108 = arith.constant 0.000000e+00 : f32
    %252 = vector.shape_cast %5 : vector<8x1xi1> to vector<8x1xi1>
    %253 = vector.broadcast %252 : vector<8x1xi1> to vector<8x32xi1>
    %254 = vector.broadcast %cst_108 : f32 to vector<8x32xf32>
    %255 = arith.select %253, %245, %254 : vector<8x32xi1>, vector<8x32xf32>
    %c0_109 = arith.constant 0 : index
    %c0_110 = arith.constant 0 : index
    %256 = vector.load %arg21[%c0_109, %c0_110] : memref<8x32xf32, #tpu.memory_space<vmem>>, vector<8x32xf32>
    tpu.vector_store %arg21[%c0_109, %c0_110], %251 {strides = array<i32>} : memref<8x32xf32, #tpu.memory_space<vmem>>, vector<8x32xf32>,
    %c0_111 = arith.constant 0 : index
    %c0_112 = arith.constant 0 : index
    %257 = vector.load %arg23[%c0_111, %c0_112] : memref<8x32xf32, #tpu.memory_space<vmem>>, vector<8x32xf32>
    tpu.vector_store %arg23[%c0_111, %c0_112], %255 {strides = array<i32>} : memref<8x32xf32, #tpu.memory_space<vmem>>, vector<8x32xf32>,
    %cst_113 = arith.constant dense<0.000000e+00> : vector<8xf32>
    %258 = vector.multi_reduction <add>, %251, %cst_113 [1] : vector<8x32xf32> to vector<8xf32>
    %259 = vector.shape_cast %258 : vector<8xf32> to vector<8x1xf32>
    %cst_114 = arith.constant 3.125000e-02 : f32
    %260 = vector.broadcast %cst_114 : f32 to vector<8x1xf32>
    %261 = arith.mulf %259, %260 : vector<8x1xf32>
    %262 = vector.broadcast %261 : vector<8x1xf32> to vector<8x32xf32>
    %263 = arith.subf %251, %262 : vector<8x32xf32>
    %264 = arith.mulf %263, %263 : vector<8x32xf32>
    %cst_115 = arith.constant dense<0.000000e+00> : vector<8xf32>
    %265 = vector.multi_reduction <add>, %264, %cst_115 [1] : vector<8x32xf32> to vector<8xf32>
    %266 = vector.shape_cast %265 : vector<8xf32> to vector<8x1xf32>
    %cst_116 = arith.constant 3.125000e-02 : f32
    %267 = vector.broadcast %cst_116 : f32 to vector<8x1xf32>
    %268 = arith.mulf %266, %267 : vector<8x1xf32>
    %cst_117 = arith.constant 9.99999974E-6 : f32
    %269 = vector.broadcast %cst_117 : f32 to vector<8x1xf32>
    %270 = arith.addf %268, %269 : vector<8x1xf32>
    %271 = math.rsqrt %270 : vector<8x1xf32>
    %272 = vector.broadcast %271 : vector<8x1xf32> to vector<8x32xf32>
    %273 = arith.mulf %263, %272 : vector<8x32xf32>
    %c0_118 = arith.constant 0 : index
    %c0_119 = arith.constant 0 : index
    %274 = vector.load %arg7[%c0_118, %c0_119] : memref<1x32xf32, #tpu.memory_space<vmem>>, vector<1x32xf32>
    %275 = vector.broadcast %274 : vector<1x32xf32> to vector<8x32xf32>
    %276 = arith.mulf %273, %275 : vector<8x32xf32>
    %c0_120 = arith.constant 0 : index
    %c0_121 = arith.constant 0 : index
    %277 = vector.load %arg8[%c0_120, %c0_121] : memref<1x32xf32, #tpu.memory_space<vmem>>, vector<1x32xf32>
    %278 = vector.broadcast %277 : vector<1x32xf32> to vector<8x32xf32>
    %279 = arith.addf %276, %278 : vector<8x32xf32>
    %cst_122 = arith.constant 0.000000e+00 : f32
    %280 = vector.shape_cast %5 : vector<8x1xi1> to vector<8x1xi1>
    %281 = vector.broadcast %280 : vector<8x1xi1> to vector<8x32xi1>
    %282 = vector.broadcast %cst_122 : f32 to vector<8x32xf32>
    %283 = arith.select %281, %279, %282 : vector<8x32xi1>, vector<8x32xf32>
    %c24_123 = arith.constant 24 : index
    %c0_124 = arith.constant 0 : index
    %284 = vector.load %arg25[%c24_123, %c0_124] : memref<64x32xf32, #tpu.memory_space<vmem>>, vector<8x32xf32>
    tpu.vector_store %arg25[%c24_123, %c0_124], %283 {strides = array<i32>} : memref<64x32xf32, #tpu.memory_space<vmem>>, vector<8x32xf32>,
    %c32 = arith.constant 32 : index
    %c0_125 = arith.constant 0 : index
    %285 = vector.load %arg26[%c32, %c0_125] : memref<64x128xf32, #tpu.memory_space<vmem>>, vector<8x128xf32>
    %c0_126 = arith.constant 0 : index
    %c0_127 = arith.constant 0 : index
    %286 = vector.load %arg21[%c0_126, %c0_127] : memref<8x32xf32, #tpu.memory_space<vmem>>, vector<8x32xf32>
    %c0_128 = arith.constant 0 : index
    %c0_129 = arith.constant 0 : index
    %287 = vector.load %arg23[%c0_128, %c0_129] : memref<8x32xf32, #tpu.memory_space<vmem>>, vector<8x32xf32>
    %c0_130 = arith.constant 0 : index
    %c0_131 = arith.constant 0 : index
    %288 = vector.load %arg3[%c0_130, %c0_131] : memref<32x128xf32, #tpu.memory_space<vmem>>, vector<32x128xf32>
    %cst_132 = arith.constant dense<0.000000e+00> : vector<8x128xf32>
    %289 = tpu.matmul %286, %288, %cst_132 {dimension_numbers = #tpu.dot_dimension_numbers<[1], [0], [0], [1], [0, 0, 1, 1], [], []>} : vector<8x32xf32>, vector<32x128xf32>, vector<8x128xf32> -> vector<8x128xf32>
    %290 = arith.addf %285, %289 : vector<8x128xf32>
    %291 = vector.extract_strided_slice %290 {offsets = [0, 0], sizes = [8, 32], strides = [1, 1]} : vector<8x128xf32> to vector<8x32xf32>
    %292 = arith.negf %291 : vector<8x32xf32>
    %293 = math.exp %292 : vector<8x32xf32>
    %cst_133 = arith.constant 1.000000e+00 : f32
    %294 = vector.broadcast %cst_133 : f32 to vector<8x32xf32>
    %295 = arith.addf %294, %293 : vector<8x32xf32>
    %296 = arith.divf %294, %295 : vector<8x32xf32>
    %297 = vector.extract_strided_slice %290 {offsets = [0, 32], sizes = [8, 32], strides = [1, 1]} : vector<8x128xf32> to vector<8x32xf32>
    %298 = arith.negf %297 : vector<8x32xf32>
    %299 = math.exp %298 : vector<8x32xf32>
    %cst_134 = arith.constant 1.000000e+00 : f32
    %300 = vector.broadcast %cst_134 : f32 to vector<8x32xf32>
    %301 = arith.addf %300, %299 : vector<8x32xf32>
    %302 = arith.divf %300, %301 : vector<8x32xf32>
    %303 = vector.extract_strided_slice %290 {offsets = [0, 64], sizes = [8, 32], strides = [1, 1]} : vector<8x128xf32> to vector<8x32xf32>
    %304 = math.tanh %303 : vector<8x32xf32>
    %305 = vector.extract_strided_slice %290 {offsets = [0, 96], sizes = [8, 32], strides = [1, 1]} : vector<8x128xf32> to vector<8x32xf32>
    %306 = arith.negf %305 : vector<8x32xf32>
    %307 = math.exp %306 : vector<8x32xf32>
    %cst_135 = arith.constant 1.000000e+00 : f32
    %308 = vector.broadcast %cst_135 : f32 to vector<8x32xf32>
    %309 = arith.addf %308, %307 : vector<8x32xf32>
    %310 = arith.divf %308, %309 : vector<8x32xf32>
    %311 = arith.mulf %302, %287 : vector<8x32xf32>
    %312 = arith.mulf %296, %304 : vector<8x32xf32>
    %313 = arith.addf %311, %312 : vector<8x32xf32>
    %314 = math.tanh %313 : vector<8x32xf32>
    %315 = arith.mulf %310, %314 : vector<8x32xf32>
    %cst_136 = arith.constant 0.000000e+00 : f32
    %316 = vector.shape_cast %5 : vector<8x1xi1> to vector<8x1xi1>
    %317 = vector.broadcast %316 : vector<8x1xi1> to vector<8x32xi1>
    %318 = vector.broadcast %cst_136 : f32 to vector<8x32xf32>
    %319 = arith.select %317, %315, %318 : vector<8x32xi1>, vector<8x32xf32>
    %cst_137 = arith.constant 0.000000e+00 : f32
    %320 = vector.shape_cast %5 : vector<8x1xi1> to vector<8x1xi1>
    %321 = vector.broadcast %320 : vector<8x1xi1> to vector<8x32xi1>
    %322 = vector.broadcast %cst_137 : f32 to vector<8x32xf32>
    %323 = arith.select %321, %313, %322 : vector<8x32xi1>, vector<8x32xf32>
    %c0_138 = arith.constant 0 : index
    %c0_139 = arith.constant 0 : index
    %324 = vector.load %arg21[%c0_138, %c0_139] : memref<8x32xf32, #tpu.memory_space<vmem>>, vector<8x32xf32>
    tpu.vector_store %arg21[%c0_138, %c0_139], %319 {strides = array<i32>} : memref<8x32xf32, #tpu.memory_space<vmem>>, vector<8x32xf32>,
    %c0_140 = arith.constant 0 : index
    %c0_141 = arith.constant 0 : index
    %325 = vector.load %arg23[%c0_140, %c0_141] : memref<8x32xf32, #tpu.memory_space<vmem>>, vector<8x32xf32>
    tpu.vector_store %arg23[%c0_140, %c0_141], %323 {strides = array<i32>} : memref<8x32xf32, #tpu.memory_space<vmem>>, vector<8x32xf32>,
    %cst_142 = arith.constant dense<0.000000e+00> : vector<8xf32>
    %326 = vector.multi_reduction <add>, %319, %cst_142 [1] : vector<8x32xf32> to vector<8xf32>
    %327 = vector.shape_cast %326 : vector<8xf32> to vector<8x1xf32>
    %cst_143 = arith.constant 3.125000e-02 : f32
    %328 = vector.broadcast %cst_143 : f32 to vector<8x1xf32>
    %329 = arith.mulf %327, %328 : vector<8x1xf32>
    %330 = vector.broadcast %329 : vector<8x1xf32> to vector<8x32xf32>
    %331 = arith.subf %319, %330 : vector<8x32xf32>
    %332 = arith.mulf %331, %331 : vector<8x32xf32>
    %cst_144 = arith.constant dense<0.000000e+00> : vector<8xf32>
    %333 = vector.multi_reduction <add>, %332, %cst_144 [1] : vector<8x32xf32> to vector<8xf32>
    %334 = vector.shape_cast %333 : vector<8xf32> to vector<8x1xf32>
    %cst_145 = arith.constant 3.125000e-02 : f32
    %335 = vector.broadcast %cst_145 : f32 to vector<8x1xf32>
    %336 = arith.mulf %334, %335 : vector<8x1xf32>
    %cst_146 = arith.constant 9.99999974E-6 : f32
    %337 = vector.broadcast %cst_146 : f32 to vector<8x1xf32>
    %338 = arith.addf %336, %337 : vector<8x1xf32>
    %339 = math.rsqrt %338 : vector<8x1xf32>
    %340 = vector.broadcast %339 : vector<8x1xf32> to vector<8x32xf32>
    %341 = arith.mulf %331, %340 : vector<8x32xf32>
    %c0_147 = arith.constant 0 : index
    %c0_148 = arith.constant 0 : index
    %342 = vector.load %arg7[%c0_147, %c0_148] : memref<1x32xf32, #tpu.memory_space<vmem>>, vector<1x32xf32>
    %343 = vector.broadcast %342 : vector<1x32xf32> to vector<8x32xf32>
    %344 = arith.mulf %341, %343 : vector<8x32xf32>
    %c0_149 = arith.constant 0 : index
    %c0_150 = arith.constant 0 : index
    %345 = vector.load %arg8[%c0_149, %c0_150] : memref<1x32xf32, #tpu.memory_space<vmem>>, vector<1x32xf32>
    %346 = vector.broadcast %345 : vector<1x32xf32> to vector<8x32xf32>
    %347 = arith.addf %344, %346 : vector<8x32xf32>
    %cst_151 = arith.constant 0.000000e+00 : f32
    %348 = vector.shape_cast %5 : vector<8x1xi1> to vector<8x1xi1>
    %349 = vector.broadcast %348 : vector<8x1xi1> to vector<8x32xi1>
    %350 = vector.broadcast %cst_151 : f32 to vector<8x32xf32>
    %351 = arith.select %349, %347, %350 : vector<8x32xi1>, vector<8x32xf32>
    %c32_152 = arith.constant 32 : index
    %c0_153 = arith.constant 0 : index
    %352 = vector.load %arg25[%c32_152, %c0_153] : memref<64x32xf32, #tpu.memory_space<vmem>>, vector<8x32xf32>
    tpu.vector_store %arg25[%c32_152, %c0_153], %351 {strides = array<i32>} : memref<64x32xf32, #tpu.memory_space<vmem>>, vector<8x32xf32>,
    %c40 = arith.constant 40 : index
    %c0_154 = arith.constant 0 : index
    %353 = vector.load %arg26[%c40, %c0_154] : memref<64x128xf32, #tpu.memory_space<vmem>>, vector<8x128xf32>
    %c0_155 = arith.constant 0 : index
    %c0_156 = arith.constant 0 : index
    %354 = vector.load %arg21[%c0_155, %c0_156] : memref<8x32xf32, #tpu.memory_space<vmem>>, vector<8x32xf32>
    %c0_157 = arith.constant 0 : index
    %c0_158 = arith.constant 0 : index
    %355 = vector.load %arg23[%c0_157, %c0_158] : memref<8x32xf32, #tpu.memory_space<vmem>>, vector<8x32xf32>
    %c0_159 = arith.constant 0 : index
    %c0_160 = arith.constant 0 : index
    %356 = vector.load %arg3[%c0_159, %c0_160] : memref<32x128xf32, #tpu.memory_space<vmem>>, vector<32x128xf32>
    %cst_161 = arith.constant dense<0.000000e+00> : vector<8x128xf32>
    %357 = tpu.matmul %354, %356, %cst_161 {dimension_numbers = #tpu.dot_dimension_numbers<[1], [0], [0], [1], [0, 0, 1, 1], [], []>} : vector<8x32xf32>, vector<32x128xf32>, vector<8x128xf32> -> vector<8x128xf32>
    %358 = arith.addf %353, %357 : vector<8x128xf32>
    %359 = vector.extract_strided_slice %358 {offsets = [0, 0], sizes = [8, 32], strides = [1, 1]} : vector<8x128xf32> to vector<8x32xf32>
    %360 = arith.negf %359 : vector<8x32xf32>
    %361 = math.exp %360 : vector<8x32xf32>
    %cst_162 = arith.constant 1.000000e+00 : f32
    %362 = vector.broadcast %cst_162 : f32 to vector<8x32xf32>
    %363 = arith.addf %362, %361 : vector<8x32xf32>
    %364 = arith.divf %362, %363 : vector<8x32xf32>
    %365 = vector.extract_strided_slice %358 {offsets = [0, 32], sizes = [8, 32], strides = [1, 1]} : vector<8x128xf32> to vector<8x32xf32>
    %366 = arith.negf %365 : vector<8x32xf32>
    %367 = math.exp %366 : vector<8x32xf32>
    %cst_163 = arith.constant 1.000000e+00 : f32
    %368 = vector.broadcast %cst_163 : f32 to vector<8x32xf32>
    %369 = arith.addf %368, %367 : vector<8x32xf32>
    %370 = arith.divf %368, %369 : vector<8x32xf32>
    %371 = vector.extract_strided_slice %358 {offsets = [0, 64], sizes = [8, 32], strides = [1, 1]} : vector<8x128xf32> to vector<8x32xf32>
    %372 = math.tanh %371 : vector<8x32xf32>
    %373 = vector.extract_strided_slice %358 {offsets = [0, 96], sizes = [8, 32], strides = [1, 1]} : vector<8x128xf32> to vector<8x32xf32>
    %374 = arith.negf %373 : vector<8x32xf32>
    %375 = math.exp %374 : vector<8x32xf32>
    %cst_164 = arith.constant 1.000000e+00 : f32
    %376 = vector.broadcast %cst_164 : f32 to vector<8x32xf32>
    %377 = arith.addf %376, %375 : vector<8x32xf32>
    %378 = arith.divf %376, %377 : vector<8x32xf32>
    %379 = arith.mulf %370, %355 : vector<8x32xf32>
    %380 = arith.mulf %364, %372 : vector<8x32xf32>
    %381 = arith.addf %379, %380 : vector<8x32xf32>
    %382 = math.tanh %381 : vector<8x32xf32>
    %383 = arith.mulf %378, %382 : vector<8x32xf32>
    %cst_165 = arith.constant 0.000000e+00 : f32
    %384 = vector.shape_cast %5 : vector<8x1xi1> to vector<8x1xi1>
    %385 = vector.broadcast %384 : vector<8x1xi1> to vector<8x32xi1>
    %386 = vector.broadcast %cst_165 : f32 to vector<8x32xf32>
    %387 = arith.select %385, %383, %386 : vector<8x32xi1>, vector<8x32xf32>
    %cst_166 = arith.constant 0.000000e+00 : f32
    %388 = vector.shape_cast %5 : vector<8x1xi1> to vector<8x1xi1>
    %389 = vector.broadcast %388 : vector<8x1xi1> to vector<8x32xi1>
    %390 = vector.broadcast %cst_166 : f32 to vector<8x32xf32>
    %391 = arith.select %389, %381, %390 : vector<8x32xi1>, vector<8x32xf32>
    %c0_167 = arith.constant 0 : index
    %c0_168 = arith.constant 0 : index
    %392 = vector.load %arg21[%c0_167, %c0_168] : memref<8x32xf32, #tpu.memory_space<vmem>>, vector<8x32xf32>
    tpu.vector_store %arg21[%c0_167, %c0_168], %387 {strides = array<i32>} : memref<8x32xf32, #tpu.memory_space<vmem>>, vector<8x32xf32>,
    %c0_169 = arith.constant 0 : index
    %c0_170 = arith.constant 0 : index
    %393 = vector.load %arg23[%c0_169, %c0_170] : memref<8x32xf32, #tpu.memory_space<vmem>>, vector<8x32xf32>
    tpu.vector_store %arg23[%c0_169, %c0_170], %391 {strides = array<i32>} : memref<8x32xf32, #tpu.memory_space<vmem>>, vector<8x32xf32>,
    %cst_171 = arith.constant dense<0.000000e+00> : vector<8xf32>
    %394 = vector.multi_reduction <add>, %387, %cst_171 [1] : vector<8x32xf32> to vector<8xf32>
    %395 = vector.shape_cast %394 : vector<8xf32> to vector<8x1xf32>
    %cst_172 = arith.constant 3.125000e-02 : f32
    %396 = vector.broadcast %cst_172 : f32 to vector<8x1xf32>
    %397 = arith.mulf %395, %396 : vector<8x1xf32>
    %398 = vector.broadcast %397 : vector<8x1xf32> to vector<8x32xf32>
    %399 = arith.subf %387, %398 : vector<8x32xf32>
    %400 = arith.mulf %399, %399 : vector<8x32xf32>
    %cst_173 = arith.constant dense<0.000000e+00> : vector<8xf32>
    %401 = vector.multi_reduction <add>, %400, %cst_173 [1] : vector<8x32xf32> to vector<8xf32>
    %402 = vector.shape_cast %401 : vector<8xf32> to vector<8x1xf32>
    %cst_174 = arith.constant 3.125000e-02 : f32
    %403 = vector.broadcast %cst_174 : f32 to vector<8x1xf32>
    %404 = arith.mulf %402, %403 : vector<8x1xf32>
    %cst_175 = arith.constant 9.99999974E-6 : f32
    %405 = vector.broadcast %cst_175 : f32 to vector<8x1xf32>
    %406 = arith.addf %404, %405 : vector<8x1xf32>
    %407 = math.rsqrt %406 : vector<8x1xf32>
    %408 = vector.broadcast %407 : vector<8x1xf32> to vector<8x32xf32>
    %409 = arith.mulf %399, %408 : vector<8x32xf32>
    %c0_176 = arith.constant 0 : index
    %c0_177 = arith.constant 0 : index
    %410 = vector.load %arg7[%c0_176, %c0_177] : memref<1x32xf32, #tpu.memory_space<vmem>>, vector<1x32xf32>
    %411 = vector.broadcast %410 : vector<1x32xf32> to vector<8x32xf32>
    %412 = arith.mulf %409, %411 : vector<8x32xf32>
    %c0_178 = arith.constant 0 : index
    %c0_179 = arith.constant 0 : index
    %413 = vector.load %arg8[%c0_178, %c0_179] : memref<1x32xf32, #tpu.memory_space<vmem>>, vector<1x32xf32>
    %414 = vector.broadcast %413 : vector<1x32xf32> to vector<8x32xf32>
    %415 = arith.addf %412, %414 : vector<8x32xf32>
    %cst_180 = arith.constant 0.000000e+00 : f32
    %416 = vector.shape_cast %5 : vector<8x1xi1> to vector<8x1xi1>
    %417 = vector.broadcast %416 : vector<8x1xi1> to vector<8x32xi1>
    %418 = vector.broadcast %cst_180 : f32 to vector<8x32xf32>
    %419 = arith.select %417, %415, %418 : vector<8x32xi1>, vector<8x32xf32>
    %c40_181 = arith.constant 40 : index
    %c0_182 = arith.constant 0 : index
    %420 = vector.load %arg25[%c40_181, %c0_182] : memref<64x32xf32, #tpu.memory_space<vmem>>, vector<8x32xf32>
    tpu.vector_store %arg25[%c40_181, %c0_182], %419 {strides = array<i32>} : memref<64x32xf32, #tpu.memory_space<vmem>>, vector<8x32xf32>,
    %c48 = arith.constant 48 : index
    %c0_183 = arith.constant 0 : index
    %421 = vector.load %arg26[%c48, %c0_183] : memref<64x128xf32, #tpu.memory_space<vmem>>, vector<8x128xf32>
    %c0_184 = arith.constant 0 : index
    %c0_185 = arith.constant 0 : index
    %422 = vector.load %arg21[%c0_184, %c0_185] : memref<8x32xf32, #tpu.memory_space<vmem>>, vector<8x32xf32>
    %c0_186 = arith.constant 0 : index
    %c0_187 = arith.constant 0 : index
    %423 = vector.load %arg23[%c0_186, %c0_187] : memref<8x32xf32, #tpu.memory_space<vmem>>, vector<8x32xf32>
    %c0_188 = arith.constant 0 : index
    %c0_189 = arith.constant 0 : index
    %424 = vector.load %arg3[%c0_188, %c0_189] : memref<32x128xf32, #tpu.memory_space<vmem>>, vector<32x128xf32>
    %cst_190 = arith.constant dense<0.000000e+00> : vector<8x128xf32>
    %425 = tpu.matmul %422, %424, %cst_190 {dimension_numbers = #tpu.dot_dimension_numbers<[1], [0], [0], [1], [0, 0, 1, 1], [], []>} : vector<8x32xf32>, vector<32x128xf32>, vector<8x128xf32> -> vector<8x128xf32>
    %426 = arith.addf %421, %425 : vector<8x128xf32>
    %427 = vector.extract_strided_slice %426 {offsets = [0, 0], sizes = [8, 32], strides = [1, 1]} : vector<8x128xf32> to vector<8x32xf32>
    %428 = arith.negf %427 : vector<8x32xf32>
    %429 = math.exp %428 : vector<8x32xf32>
    %cst_191 = arith.constant 1.000000e+00 : f32
    %430 = vector.broadcast %cst_191 : f32 to vector<8x32xf32>
    %431 = arith.addf %430, %429 : vector<8x32xf32>
    %432 = arith.divf %430, %431 : vector<8x32xf32>
    %433 = vector.extract_strided_slice %426 {offsets = [0, 32], sizes = [8, 32], strides = [1, 1]} : vector<8x128xf32> to vector<8x32xf32>
    %434 = arith.negf %433 : vector<8x32xf32>
    %435 = math.exp %434 : vector<8x32xf32>
    %cst_192 = arith.constant 1.000000e+00 : f32
    %436 = vector.broadcast %cst_192 : f32 to vector<8x32xf32>
    %437 = arith.addf %436, %435 : vector<8x32xf32>
    %438 = arith.divf %436, %437 : vector<8x32xf32>
    %439 = vector.extract_strided_slice %426 {offsets = [0, 64], sizes = [8, 32], strides = [1, 1]} : vector<8x128xf32> to vector<8x32xf32>
    %440 = math.tanh %439 : vector<8x32xf32>
    %441 = vector.extract_strided_slice %426 {offsets = [0, 96], sizes = [8, 32], strides = [1, 1]} : vector<8x128xf32> to vector<8x32xf32>
    %442 = arith.negf %441 : vector<8x32xf32>
    %443 = math.exp %442 : vector<8x32xf32>
    %cst_193 = arith.constant 1.000000e+00 : f32
    %444 = vector.broadcast %cst_193 : f32 to vector<8x32xf32>
    %445 = arith.addf %444, %443 : vector<8x32xf32>
    %446 = arith.divf %444, %445 : vector<8x32xf32>
    %447 = arith.mulf %438, %423 : vector<8x32xf32>
    %448 = arith.mulf %432, %440 : vector<8x32xf32>
    %449 = arith.addf %447, %448 : vector<8x32xf32>
    %450 = math.tanh %449 : vector<8x32xf32>
    %451 = arith.mulf %446, %450 : vector<8x32xf32>
    %cst_194 = arith.constant 0.000000e+00 : f32
    %452 = vector.shape_cast %5 : vector<8x1xi1> to vector<8x1xi1>
    %453 = vector.broadcast %452 : vector<8x1xi1> to vector<8x32xi1>
    %454 = vector.broadcast %cst_194 : f32 to vector<8x32xf32>
    %455 = arith.select %453, %451, %454 : vector<8x32xi1>, vector<8x32xf32>
    %cst_195 = arith.constant 0.000000e+00 : f32
    %456 = vector.shape_cast %5 : vector<8x1xi1> to vector<8x1xi1>
    %457 = vector.broadcast %456 : vector<8x1xi1> to vector<8x32xi1>
    %458 = vector.broadcast %cst_195 : f32 to vector<8x32xf32>
    %459 = arith.select %457, %449, %458 : vector<8x32xi1>, vector<8x32xf32>
    %c0_196 = arith.constant 0 : index
    %c0_197 = arith.constant 0 : index
    %460 = vector.load %arg21[%c0_196, %c0_197] : memref<8x32xf32, #tpu.memory_space<vmem>>, vector<8x32xf32>
    tpu.vector_store %arg21[%c0_196, %c0_197], %455 {strides = array<i32>} : memref<8x32xf32, #tpu.memory_space<vmem>>, vector<8x32xf32>,
    %c0_198 = arith.constant 0 : index
    %c0_199 = arith.constant 0 : index
    %461 = vector.load %arg23[%c0_198, %c0_199] : memref<8x32xf32, #tpu.memory_space<vmem>>, vector<8x32xf32>
    tpu.vector_store %arg23[%c0_198, %c0_199], %459 {strides = array<i32>} : memref<8x32xf32, #tpu.memory_space<vmem>>, vector<8x32xf32>,
    %cst_200 = arith.constant dense<0.000000e+00> : vector<8xf32>
    %462 = vector.multi_reduction <add>, %455, %cst_200 [1] : vector<8x32xf32> to vector<8xf32>
    %463 = vector.shape_cast %462 : vector<8xf32> to vector<8x1xf32>
    %cst_201 = arith.constant 3.125000e-02 : f32
    %464 = vector.broadcast %cst_201 : f32 to vector<8x1xf32>
    %465 = arith.mulf %463, %464 : vector<8x1xf32>
    %466 = vector.broadcast %465 : vector<8x1xf32> to vector<8x32xf32>
    %467 = arith.subf %455, %466 : vector<8x32xf32>
    %468 = arith.mulf %467, %467 : vector<8x32xf32>
    %cst_202 = arith.constant dense<0.000000e+00> : vector<8xf32>
    %469 = vector.multi_reduction <add>, %468, %cst_202 [1] : vector<8x32xf32> to vector<8xf32>
    %470 = vector.shape_cast %469 : vector<8xf32> to vector<8x1xf32>
    %cst_203 = arith.constant 3.125000e-02 : f32
    %471 = vector.broadcast %cst_203 : f32 to vector<8x1xf32>
    %472 = arith.mulf %470, %471 : vector<8x1xf32>
    %cst_204 = arith.constant 9.99999974E-6 : f32
    %473 = vector.broadcast %cst_204 : f32 to vector<8x1xf32>
    %474 = arith.addf %472, %473 : vector<8x1xf32>
    %475 = math.rsqrt %474 : vector<8x1xf32>
    %476 = vector.broadcast %475 : vector<8x1xf32> to vector<8x32xf32>
    %477 = arith.mulf %467, %476 : vector<8x32xf32>
    %c0_205 = arith.constant 0 : index
    %c0_206 = arith.constant 0 : index
    %478 = vector.load %arg7[%c0_205, %c0_206] : memref<1x32xf32, #tpu.memory_space<vmem>>, vector<1x32xf32>
    %479 = vector.broadcast %478 : vector<1x32xf32> to vector<8x32xf32>
    %480 = arith.mulf %477, %479 : vector<8x32xf32>
    %c0_207 = arith.constant 0 : index
    %c0_208 = arith.constant 0 : index
    %481 = vector.load %arg8[%c0_207, %c0_208] : memref<1x32xf32, #tpu.memory_space<vmem>>, vector<1x32xf32>
    %482 = vector.broadcast %481 : vector<1x32xf32> to vector<8x32xf32>
    %483 = arith.addf %480, %482 : vector<8x32xf32>
    %cst_209 = arith.constant 0.000000e+00 : f32
    %484 = vector.shape_cast %5 : vector<8x1xi1> to vector<8x1xi1>
    %485 = vector.broadcast %484 : vector<8x1xi1> to vector<8x32xi1>
    %486 = vector.broadcast %cst_209 : f32 to vector<8x32xf32>
    %487 = arith.select %485, %483, %486 : vector<8x32xi1>, vector<8x32xf32>
    %c48_210 = arith.constant 48 : index
    %c0_211 = arith.constant 0 : index
    %488 = vector.load %arg25[%c48_210, %c0_211] : memref<64x32xf32, #tpu.memory_space<vmem>>, vector<8x32xf32>
    tpu.vector_store %arg25[%c48_210, %c0_211], %487 {strides = array<i32>} : memref<64x32xf32, #tpu.memory_space<vmem>>, vector<8x32xf32>,
    %c56 = arith.constant 56 : index
    %c0_212 = arith.constant 0 : index
    %489 = vector.load %arg26[%c56, %c0_212] : memref<64x128xf32, #tpu.memory_space<vmem>>, vector<8x128xf32>
    %c0_213 = arith.constant 0 : index
    %c0_214 = arith.constant 0 : index
    %490 = vector.load %arg21[%c0_213, %c0_214] : memref<8x32xf32, #tpu.memory_space<vmem>>, vector<8x32xf32>
    %c0_215 = arith.constant 0 : index
    %c0_216 = arith.constant 0 : index
    %491 = vector.load %arg23[%c0_215, %c0_216] : memref<8x32xf32, #tpu.memory_space<vmem>>, vector<8x32xf32>
    %c0_217 = arith.constant 0 : index
    %c0_218 = arith.constant 0 : index
    %492 = vector.load %arg3[%c0_217, %c0_218] : memref<32x128xf32, #tpu.memory_space<vmem>>, vector<32x128xf32>
    %cst_219 = arith.constant dense<0.000000e+00> : vector<8x128xf32>
    %493 = tpu.matmul %490, %492, %cst_219 {dimension_numbers = #tpu.dot_dimension_numbers<[1], [0], [0], [1], [0, 0, 1, 1], [], []>} : vector<8x32xf32>, vector<32x128xf32>, vector<8x128xf32> -> vector<8x128xf32>
    %494 = arith.addf %489, %493 : vector<8x128xf32>
    %495 = vector.extract_strided_slice %494 {offsets = [0, 0], sizes = [8, 32], strides = [1, 1]} : vector<8x128xf32> to vector<8x32xf32>
    %496 = arith.negf %495 : vector<8x32xf32>
    %497 = math.exp %496 : vector<8x32xf32>
    %cst_220 = arith.constant 1.000000e+00 : f32
    %498 = vector.broadcast %cst_220 : f32 to vector<8x32xf32>
    %499 = arith.addf %498, %497 : vector<8x32xf32>
    %500 = arith.divf %498, %499 : vector<8x32xf32>
    %501 = vector.extract_strided_slice %494 {offsets = [0, 32], sizes = [8, 32], strides = [1, 1]} : vector<8x128xf32> to vector<8x32xf32>
    %502 = arith.negf %501 : vector<8x32xf32>
    %503 = math.exp %502 : vector<8x32xf32>
    %cst_221 = arith.constant 1.000000e+00 : f32
    %504 = vector.broadcast %cst_221 : f32 to vector<8x32xf32>
    %505 = arith.addf %504, %503 : vector<8x32xf32>
    %506 = arith.divf %504, %505 : vector<8x32xf32>
    %507 = vector.extract_strided_slice %494 {offsets = [0, 64], sizes = [8, 32], strides = [1, 1]} : vector<8x128xf32> to vector<8x32xf32>
    %508 = math.tanh %507 : vector<8x32xf32>
    %509 = vector.extract_strided_slice %494 {offsets = [0, 96], sizes = [8, 32], strides = [1, 1]} : vector<8x128xf32> to vector<8x32xf32>
    %510 = arith.negf %509 : vector<8x32xf32>
    %511 = math.exp %510 : vector<8x32xf32>
    %cst_222 = arith.constant 1.000000e+00 : f32
    %512 = vector.broadcast %cst_222 : f32 to vector<8x32xf32>
    %513 = arith.addf %512, %511 : vector<8x32xf32>
    %514 = arith.divf %512, %513 : vector<8x32xf32>
    %515 = arith.mulf %506, %491 : vector<8x32xf32>
    %516 = arith.mulf %500, %508 : vector<8x32xf32>
    %517 = arith.addf %515, %516 : vector<8x32xf32>
    %518 = math.tanh %517 : vector<8x32xf32>
    %519 = arith.mulf %514, %518 : vector<8x32xf32>
    %cst_223 = arith.constant 0.000000e+00 : f32
    %520 = vector.shape_cast %5 : vector<8x1xi1> to vector<8x1xi1>
    %521 = vector.broadcast %520 : vector<8x1xi1> to vector<8x32xi1>
    %522 = vector.broadcast %cst_223 : f32 to vector<8x32xf32>
    %523 = arith.select %521, %519, %522 : vector<8x32xi1>, vector<8x32xf32>
    %cst_224 = arith.constant 0.000000e+00 : f32
    %524 = vector.shape_cast %5 : vector<8x1xi1> to vector<8x1xi1>
    %525 = vector.broadcast %524 : vector<8x1xi1> to vector<8x32xi1>
    %526 = vector.broadcast %cst_224 : f32 to vector<8x32xf32>
    %527 = arith.select %525, %517, %526 : vector<8x32xi1>, vector<8x32xf32>
    %c0_225 = arith.constant 0 : index
    %c0_226 = arith.constant 0 : index
    %528 = vector.load %arg21[%c0_225, %c0_226] : memref<8x32xf32, #tpu.memory_space<vmem>>, vector<8x32xf32>
    tpu.vector_store %arg21[%c0_225, %c0_226], %523 {strides = array<i32>} : memref<8x32xf32, #tpu.memory_space<vmem>>, vector<8x32xf32>,
    %c0_227 = arith.constant 0 : index
    %c0_228 = arith.constant 0 : index
    %529 = vector.load %arg23[%c0_227, %c0_228] : memref<8x32xf32, #tpu.memory_space<vmem>>, vector<8x32xf32>
    tpu.vector_store %arg23[%c0_227, %c0_228], %527 {strides = array<i32>} : memref<8x32xf32, #tpu.memory_space<vmem>>, vector<8x32xf32>,
    %cst_229 = arith.constant dense<0.000000e+00> : vector<8xf32>
    %530 = vector.multi_reduction <add>, %523, %cst_229 [1] : vector<8x32xf32> to vector<8xf32>
    %531 = vector.shape_cast %530 : vector<8xf32> to vector<8x1xf32>
    %cst_230 = arith.constant 3.125000e-02 : f32
    %532 = vector.broadcast %cst_230 : f32 to vector<8x1xf32>
    %533 = arith.mulf %531, %532 : vector<8x1xf32>
    %534 = vector.broadcast %533 : vector<8x1xf32> to vector<8x32xf32>
    %535 = arith.subf %523, %534 : vector<8x32xf32>
    %536 = arith.mulf %535, %535 : vector<8x32xf32>
    %cst_231 = arith.constant dense<0.000000e+00> : vector<8xf32>
    %537 = vector.multi_reduction <add>, %536, %cst_231 [1] : vector<8x32xf32> to vector<8xf32>
    %538 = vector.shape_cast %537 : vector<8xf32> to vector<8x1xf32>
    %cst_232 = arith.constant 3.125000e-02 : f32
    %539 = vector.broadcast %cst_232 : f32 to vector<8x1xf32>
    %540 = arith.mulf %538, %539 : vector<8x1xf32>
    %cst_233 = arith.constant 9.99999974E-6 : f32
    %541 = vector.broadcast %cst_233 : f32 to vector<8x1xf32>
    %542 = arith.addf %540, %541 : vector<8x1xf32>
    %543 = math.rsqrt %542 : vector<8x1xf32>
    %544 = vector.broadcast %543 : vector<8x1xf32> to vector<8x32xf32>
    %545 = arith.mulf %535, %544 : vector<8x32xf32>
    %c0_234 = arith.constant 0 : index
    %c0_235 = arith.constant 0 : index
    %546 = vector.load %arg7[%c0_234, %c0_235] : memref<1x32xf32, #tpu.memory_space<vmem>>, vector<1x32xf32>
    %547 = vector.broadcast %546 : vector<1x32xf32> to vector<8x32xf32>
    %548 = arith.mulf %545, %547 : vector<8x32xf32>
    %c0_236 = arith.constant 0 : index
    %c0_237 = arith.constant 0 : index
    %549 = vector.load %arg8[%c0_236, %c0_237] : memref<1x32xf32, #tpu.memory_space<vmem>>, vector<1x32xf32>
    %550 = vector.broadcast %549 : vector<1x32xf32> to vector<8x32xf32>
    %551 = arith.addf %548, %550 : vector<8x32xf32>
    %cst_238 = arith.constant 0.000000e+00 : f32
    %552 = vector.shape_cast %5 : vector<8x1xi1> to vector<8x1xi1>
    %553 = vector.broadcast %552 : vector<8x1xi1> to vector<8x32xi1>
    %554 = vector.broadcast %cst_238 : f32 to vector<8x32xf32>
    %555 = arith.select %553, %551, %554 : vector<8x32xi1>, vector<8x32xf32>
    %c56_239 = arith.constant 56 : index
    %c0_240 = arith.constant 0 : index
    %556 = vector.load %arg25[%c56_239, %c0_240] : memref<64x32xf32, #tpu.memory_space<vmem>>, vector<8x32xf32>
    tpu.vector_store %arg25[%c56_239, %c0_240], %555 {strides = array<i32>} : memref<64x32xf32, #tpu.memory_space<vmem>>, vector<8x32xf32>,
    %c0_241 = arith.constant 0 : index
    %c0_242 = arith.constant 0 : index
    %557 = vector.load %arg25[%c0_241, %c0_242] : memref<64x32xf32, #tpu.memory_space<vmem>>, vector<64x32xf32>
    %c0_243 = arith.constant 0 : index
    %c0_244 = arith.constant 0 : index
    %558 = vector.load %arg9[%c0_243, %c0_244] : memref<32x128xf32, #tpu.memory_space<vmem>>, vector<32x128xf32>
    %cst_245 = arith.constant dense<0.000000e+00> : vector<64x128xf32>
    %559 = tpu.matmul %557, %558, %cst_245 {dimension_numbers = #tpu.dot_dimension_numbers<[1], [0], [0], [1], [0, 0, 1, 1], [], []>} : vector<64x32xf32>, vector<32x128xf32>, vector<64x128xf32> -> vector<64x128xf32>
    %c0_246 = arith.constant 0 : index
    %c0_247 = arith.constant 0 : index
    %560 = vector.load %arg11[%c0_246, %c0_247] : memref<1x128xf32, #tpu.memory_space<vmem>>, vector<1x128xf32>
    %561 = vector.broadcast %560 : vector<1x128xf32> to vector<64x128xf32>
    %562 = arith.addf %559, %561 : vector<64x128xf32>
    %c0_248 = arith.constant 0 : index
    %c0_249 = arith.constant 0 : index
    %563 = vector.load %arg26[%c0_248, %c0_249] : memref<64x128xf32, #tpu.memory_space<vmem>>, vector<64x128xf32>
    tpu.vector_store %arg26[%c0_248, %c0_249], %562 {strides = array<i32>} : memref<64x128xf32, #tpu.memory_space<vmem>>, vector<64x128xf32>,
    %c0_250 = arith.constant 0 : index
    %c0_251 = arith.constant 0 : index
    %564 = vector.load %arg26[%c0_250, %c0_251] : memref<64x128xf32, #tpu.memory_space<vmem>>, vector<8x128xf32>
    %c0_252 = arith.constant 0 : index
    %c0_253 = arith.constant 0 : index
    %565 = vector.load %arg22[%c0_252, %c0_253] : memref<8x32xf32, #tpu.memory_space<vmem>>, vector<8x32xf32>
    %c0_254 = arith.constant 0 : index
    %c0_255 = arith.constant 0 : index
    %566 = vector.load %arg24[%c0_254, %c0_255] : memref<8x32xf32, #tpu.memory_space<vmem>>, vector<8x32xf32>
    %c0_256 = arith.constant 0 : index
    %c0_257 = arith.constant 0 : index
    %567 = vector.load %arg10[%c0_256, %c0_257] : memref<32x128xf32, #tpu.memory_space<vmem>>, vector<32x128xf32>
    %cst_258 = arith.constant dense<0.000000e+00> : vector<8x128xf32>
    %568 = tpu.matmul %565, %567, %cst_258 {dimension_numbers = #tpu.dot_dimension_numbers<[1], [0], [0], [1], [0, 0, 1, 1], [], []>} : vector<8x32xf32>, vector<32x128xf32>, vector<8x128xf32> -> vector<8x128xf32>
    %569 = arith.addf %564, %568 : vector<8x128xf32>
    %570 = vector.extract_strided_slice %569 {offsets = [0, 0], sizes = [8, 32], strides = [1, 1]} : vector<8x128xf32> to vector<8x32xf32>
    %571 = arith.negf %570 : vector<8x32xf32>
    %572 = math.exp %571 : vector<8x32xf32>
    %cst_259 = arith.constant 1.000000e+00 : f32
    %573 = vector.broadcast %cst_259 : f32 to vector<8x32xf32>
    %574 = arith.addf %573, %572 : vector<8x32xf32>
    %575 = arith.divf %573, %574 : vector<8x32xf32>
    %576 = vector.extract_strided_slice %569 {offsets = [0, 32], sizes = [8, 32], strides = [1, 1]} : vector<8x128xf32> to vector<8x32xf32>
    %577 = arith.negf %576 : vector<8x32xf32>
    %578 = math.exp %577 : vector<8x32xf32>
    %cst_260 = arith.constant 1.000000e+00 : f32
    %579 = vector.broadcast %cst_260 : f32 to vector<8x32xf32>
    %580 = arith.addf %579, %578 : vector<8x32xf32>
    %581 = arith.divf %579, %580 : vector<8x32xf32>
    %582 = vector.extract_strided_slice %569 {offsets = [0, 64], sizes = [8, 32], strides = [1, 1]} : vector<8x128xf32> to vector<8x32xf32>
    %583 = math.tanh %582 : vector<8x32xf32>
    %584 = vector.extract_strided_slice %569 {offsets = [0, 96], sizes = [8, 32], strides = [1, 1]} : vector<8x128xf32> to vector<8x32xf32>
    %585 = arith.negf %584 : vector<8x32xf32>
    %586 = math.exp %585 : vector<8x32xf32>
    %cst_261 = arith.constant 1.000000e+00 : f32
    %587 = vector.broadcast %cst_261 : f32 to vector<8x32xf32>
    %588 = arith.addf %587, %586 : vector<8x32xf32>
    %589 = arith.divf %587, %588 : vector<8x32xf32>
    %590 = arith.mulf %581, %566 : vector<8x32xf32>
    %591 = arith.mulf %575, %583 : vector<8x32xf32>
    %592 = arith.addf %590, %591 : vector<8x32xf32>
    %593 = math.tanh %592 : vector<8x32xf32>
    %594 = arith.mulf %589, %593 : vector<8x32xf32>
    %cst_262 = arith.constant 0.000000e+00 : f32
    %595 = vector.shape_cast %5 : vector<8x1xi1> to vector<8x1xi1>
    %596 = vector.broadcast %595 : vector<8x1xi1> to vector<8x32xi1>
    %597 = vector.broadcast %cst_262 : f32 to vector<8x32xf32>
    %598 = arith.select %596, %594, %597 : vector<8x32xi1>, vector<8x32xf32>
    %cst_263 = arith.constant 0.000000e+00 : f32
    %599 = vector.shape_cast %5 : vector<8x1xi1> to vector<8x1xi1>
    %600 = vector.broadcast %599 : vector<8x1xi1> to vector<8x32xi1>
    %601 = vector.broadcast %cst_263 : f32 to vector<8x32xf32>
    %602 = arith.select %600, %592, %601 : vector<8x32xi1>, vector<8x32xf32>
    %c0_264 = arith.constant 0 : index
    %c0_265 = arith.constant 0 : index
    %603 = vector.load %arg22[%c0_264, %c0_265] : memref<8x32xf32, #tpu.memory_space<vmem>>, vector<8x32xf32>
    tpu.vector_store %arg22[%c0_264, %c0_265], %598 {strides = array<i32>} : memref<8x32xf32, #tpu.memory_space<vmem>>, vector<8x32xf32>,
    %c0_266 = arith.constant 0 : index
    %c0_267 = arith.constant 0 : index
    %604 = vector.load %arg24[%c0_266, %c0_267] : memref<8x32xf32, #tpu.memory_space<vmem>>, vector<8x32xf32>
    tpu.vector_store %arg24[%c0_266, %c0_267], %602 {strides = array<i32>} : memref<8x32xf32, #tpu.memory_space<vmem>>, vector<8x32xf32>,
    %cst_268 = arith.constant dense<0.000000e+00> : vector<8xf32>
    %605 = vector.multi_reduction <add>, %598, %cst_268 [1] : vector<8x32xf32> to vector<8xf32>
    %606 = vector.shape_cast %605 : vector<8xf32> to vector<8x1xf32>
    %cst_269 = arith.constant 3.125000e-02 : f32
    %607 = vector.broadcast %cst_269 : f32 to vector<8x1xf32>
    %608 = arith.mulf %606, %607 : vector<8x1xf32>
    %609 = vector.broadcast %608 : vector<8x1xf32> to vector<8x32xf32>
    %610 = arith.subf %598, %609 : vector<8x32xf32>
    %611 = arith.mulf %610, %610 : vector<8x32xf32>
    %cst_270 = arith.constant dense<0.000000e+00> : vector<8xf32>
    %612 = vector.multi_reduction <add>, %611, %cst_270 [1] : vector<8x32xf32> to vector<8xf32>
    %613 = vector.shape_cast %612 : vector<8xf32> to vector<8x1xf32>
    %cst_271 = arith.constant 3.125000e-02 : f32
    %614 = vector.broadcast %cst_271 : f32 to vector<8x1xf32>
    %615 = arith.mulf %613, %614 : vector<8x1xf32>
    %cst_272 = arith.constant 9.99999974E-6 : f32
    %616 = vector.broadcast %cst_272 : f32 to vector<8x1xf32>
    %617 = arith.addf %615, %616 : vector<8x1xf32>
    %618 = math.rsqrt %617 : vector<8x1xf32>
    %619 = vector.broadcast %618 : vector<8x1xf32> to vector<8x32xf32>
    %620 = arith.mulf %610, %619 : vector<8x32xf32>
    %c0_273 = arith.constant 0 : index
    %c0_274 = arith.constant 0 : index
    %621 = vector.load %arg14[%c0_273, %c0_274] : memref<1x32xf32, #tpu.memory_space<vmem>>, vector<1x32xf32>
    %622 = vector.broadcast %621 : vector<1x32xf32> to vector<8x32xf32>
    %623 = arith.mulf %620, %622 : vector<8x32xf32>
    %c0_275 = arith.constant 0 : index
    %c0_276 = arith.constant 0 : index
    %624 = vector.load %arg15[%c0_275, %c0_276] : memref<1x32xf32, #tpu.memory_space<vmem>>, vector<1x32xf32>
    %625 = vector.broadcast %624 : vector<1x32xf32> to vector<8x32xf32>
    %626 = arith.addf %623, %625 : vector<8x32xf32>
    %cst_277 = arith.constant 0.000000e+00 : f32
    %627 = vector.shape_cast %5 : vector<8x1xi1> to vector<8x1xi1>
    %628 = vector.broadcast %627 : vector<8x1xi1> to vector<8x32xi1>
    %629 = vector.broadcast %cst_277 : f32 to vector<8x32xf32>
    %630 = arith.select %628, %626, %629 : vector<8x32xi1>, vector<8x32xf32>
    %c0_278 = arith.constant 0 : index
    %c0_279 = arith.constant 0 : index
    %c0_280 = arith.constant 0 : index
    %631 = vector.load %arg16[%c0_278, %c0_279, %c0_280] : memref<8x8x32xf32, #tpu.memory_space<vmem>>, vector<1x8x32xf32>
    %632 = vector.shape_cast %631 : vector<1x8x32xf32> to vector<8x32xf32>
    %633 = vector.shape_cast %630 : vector<8x32xf32> to vector<1x8x32xf32>
    tpu.vector_store %arg16[%c0_278, %c0_279, %c0_280], %633 {strides = array<i32>} : memref<8x8x32xf32, #tpu.memory_space<vmem>>, vector<1x8x32xf32>,
    %c8_281 = arith.constant 8 : index
    %c0_282 = arith.constant 0 : index
    %634 = vector.load %arg26[%c8_281, %c0_282] : memref<64x128xf32, #tpu.memory_space<vmem>>, vector<8x128xf32>
    %c0_283 = arith.constant 0 : index
    %c0_284 = arith.constant 0 : index
    %635 = vector.load %arg22[%c0_283, %c0_284] : memref<8x32xf32, #tpu.memory_space<vmem>>, vector<8x32xf32>
    %c0_285 = arith.constant 0 : index
    %c0_286 = arith.constant 0 : index
    %636 = vector.load %arg24[%c0_285, %c0_286] : memref<8x32xf32, #tpu.memory_space<vmem>>, vector<8x32xf32>
    %c0_287 = arith.constant 0 : index
    %c0_288 = arith.constant 0 : index
    %637 = vector.load %arg10[%c0_287, %c0_288] : memref<32x128xf32, #tpu.memory_space<vmem>>, vector<32x128xf32>
    %cst_289 = arith.constant dense<0.000000e+00> : vector<8x128xf32>
    %638 = tpu.matmul %635, %637, %cst_289 {dimension_numbers = #tpu.dot_dimension_numbers<[1], [0], [0], [1], [0, 0, 1, 1], [], []>} : vector<8x32xf32>, vector<32x128xf32>, vector<8x128xf32> -> vector<8x128xf32>
    %639 = arith.addf %634, %638 : vector<8x128xf32>
    %640 = vector.extract_strided_slice %639 {offsets = [0, 0], sizes = [8, 32], strides = [1, 1]} : vector<8x128xf32> to vector<8x32xf32>
    %641 = arith.negf %640 : vector<8x32xf32>
    %642 = math.exp %641 : vector<8x32xf32>
    %cst_290 = arith.constant 1.000000e+00 : f32
    %643 = vector.broadcast %cst_290 : f32 to vector<8x32xf32>
    %644 = arith.addf %643, %642 : vector<8x32xf32>
    %645 = arith.divf %643, %644 : vector<8x32xf32>
    %646 = vector.extract_strided_slice %639 {offsets = [0, 32], sizes = [8, 32], strides = [1, 1]} : vector<8x128xf32> to vector<8x32xf32>
    %647 = arith.negf %646 : vector<8x32xf32>
    %648 = math.exp %647 : vector<8x32xf32>
    %cst_291 = arith.constant 1.000000e+00 : f32
    %649 = vector.broadcast %cst_291 : f32 to vector<8x32xf32>
    %650 = arith.addf %649, %648 : vector<8x32xf32>
    %651 = arith.divf %649, %650 : vector<8x32xf32>
    %652 = vector.extract_strided_slice %639 {offsets = [0, 64], sizes = [8, 32], strides = [1, 1]} : vector<8x128xf32> to vector<8x32xf32>
    %653 = math.tanh %652 : vector<8x32xf32>
    %654 = vector.extract_strided_slice %639 {offsets = [0, 96], sizes = [8, 32], strides = [1, 1]} : vector<8x128xf32> to vector<8x32xf32>
    %655 = arith.negf %654 : vector<8x32xf32>
    %656 = math.exp %655 : vector<8x32xf32>
    %cst_292 = arith.constant 1.000000e+00 : f32
    %657 = vector.broadcast %cst_292 : f32 to vector<8x32xf32>
    %658 = arith.addf %657, %656 : vector<8x32xf32>
    %659 = arith.divf %657, %658 : vector<8x32xf32>
    %660 = arith.mulf %651, %636 : vector<8x32xf32>
    %661 = arith.mulf %645, %653 : vector<8x32xf32>
    %662 = arith.addf %660, %661 : vector<8x32xf32>
    %663 = math.tanh %662 : vector<8x32xf32>
    %664 = arith.mulf %659, %663 : vector<8x32xf32>
    %cst_293 = arith.constant 0.000000e+00 : f32
    %665 = vector.shape_cast %5 : vector<8x1xi1> to vector<8x1xi1>
    %666 = vector.broadcast %665 : vector<8x1xi1> to vector<8x32xi1>
    %667 = vector.broadcast %cst_293 : f32 to vector<8x32xf32>
    %668 = arith.select %666, %664, %667 : vector<8x32xi1>, vector<8x32xf32>
    %cst_294 = arith.constant 0.000000e+00 : f32
    %669 = vector.shape_cast %5 : vector<8x1xi1> to vector<8x1xi1>
    %670 = vector.broadcast %669 : vector<8x1xi1> to vector<8x32xi1>
    %671 = vector.broadcast %cst_294 : f32 to vector<8x32xf32>
    %672 = arith.select %670, %662, %671 : vector<8x32xi1>, vector<8x32xf32>
    %c0_295 = arith.constant 0 : index
    %c0_296 = arith.constant 0 : index
    %673 = vector.load %arg22[%c0_295, %c0_296] : memref<8x32xf32, #tpu.memory_space<vmem>>, vector<8x32xf32>
    tpu.vector_store %arg22[%c0_295, %c0_296], %668 {strides = array<i32>} : memref<8x32xf32, #tpu.memory_space<vmem>>, vector<8x32xf32>,
    %c0_297 = arith.constant 0 : index
    %c0_298 = arith.constant 0 : index
    %674 = vector.load %arg24[%c0_297, %c0_298] : memref<8x32xf32, #tpu.memory_space<vmem>>, vector<8x32xf32>
    tpu.vector_store %arg24[%c0_297, %c0_298], %672 {strides = array<i32>} : memref<8x32xf32, #tpu.memory_space<vmem>>, vector<8x32xf32>,
    %cst_299 = arith.constant dense<0.000000e+00> : vector<8xf32>
    %675 = vector.multi_reduction <add>, %668, %cst_299 [1] : vector<8x32xf32> to vector<8xf32>
    %676 = vector.shape_cast %675 : vector<8xf32> to vector<8x1xf32>
    %cst_300 = arith.constant 3.125000e-02 : f32
    %677 = vector.broadcast %cst_300 : f32 to vector<8x1xf32>
    %678 = arith.mulf %676, %677 : vector<8x1xf32>
    %679 = vector.broadcast %678 : vector<8x1xf32> to vector<8x32xf32>
    %680 = arith.subf %668, %679 : vector<8x32xf32>
    %681 = arith.mulf %680, %680 : vector<8x32xf32>
    %cst_301 = arith.constant dense<0.000000e+00> : vector<8xf32>
    %682 = vector.multi_reduction <add>, %681, %cst_301 [1] : vector<8x32xf32> to vector<8xf32>
    %683 = vector.shape_cast %682 : vector<8xf32> to vector<8x1xf32>
    %cst_302 = arith.constant 3.125000e-02 : f32
    %684 = vector.broadcast %cst_302 : f32 to vector<8x1xf32>
    %685 = arith.mulf %683, %684 : vector<8x1xf32>
    %cst_303 = arith.constant 9.99999974E-6 : f32
    %686 = vector.broadcast %cst_303 : f32 to vector<8x1xf32>
    %687 = arith.addf %685, %686 : vector<8x1xf32>
    %688 = math.rsqrt %687 : vector<8x1xf32>
    %689 = vector.broadcast %688 : vector<8x1xf32> to vector<8x32xf32>
    %690 = arith.mulf %680, %689 : vector<8x32xf32>
    %c0_304 = arith.constant 0 : index
    %c0_305 = arith.constant 0 : index
    %691 = vector.load %arg14[%c0_304, %c0_305] : memref<1x32xf32, #tpu.memory_space<vmem>>, vector<1x32xf32>
    %692 = vector.broadcast %691 : vector<1x32xf32> to vector<8x32xf32>
    %693 = arith.mulf %690, %692 : vector<8x32xf32>
    %c0_306 = arith.constant 0 : index
    %c0_307 = arith.constant 0 : index
    %694 = vector.load %arg15[%c0_306, %c0_307] : memref<1x32xf32, #tpu.memory_space<vmem>>, vector<1x32xf32>
    %695 = vector.broadcast %694 : vector<1x32xf32> to vector<8x32xf32>
    %696 = arith.addf %693, %695 : vector<8x32xf32>
    %cst_308 = arith.constant 0.000000e+00 : f32
    %697 = vector.shape_cast %5 : vector<8x1xi1> to vector<8x1xi1>
    %698 = vector.broadcast %697 : vector<8x1xi1> to vector<8x32xi1>
    %699 = vector.broadcast %cst_308 : f32 to vector<8x32xf32>
    %700 = arith.select %698, %696, %699 : vector<8x32xi1>, vector<8x32xf32>
    %c1 = arith.constant 1 : index
    %c0_309 = arith.constant 0 : index
    %c0_310 = arith.constant 0 : index
    %701 = vector.load %arg16[%c1, %c0_309, %c0_310] : memref<8x8x32xf32, #tpu.memory_space<vmem>>, vector<1x8x32xf32>
    %702 = vector.shape_cast %701 : vector<1x8x32xf32> to vector<8x32xf32>
    %703 = vector.shape_cast %700 : vector<8x32xf32> to vector<1x8x32xf32>
    tpu.vector_store %arg16[%c1, %c0_309, %c0_310], %703 {strides = array<i32>} : memref<8x8x32xf32, #tpu.memory_space<vmem>>, vector<1x8x32xf32>,
    %c16_311 = arith.constant 16 : index
    %c0_312 = arith.constant 0 : index
    %704 = vector.load %arg26[%c16_311, %c0_312] : memref<64x128xf32, #tpu.memory_space<vmem>>, vector<8x128xf32>
    %c0_313 = arith.constant 0 : index
    %c0_314 = arith.constant 0 : index
    %705 = vector.load %arg22[%c0_313, %c0_314] : memref<8x32xf32, #tpu.memory_space<vmem>>, vector<8x32xf32>
    %c0_315 = arith.constant 0 : index
    %c0_316 = arith.constant 0 : index
    %706 = vector.load %arg24[%c0_315, %c0_316] : memref<8x32xf32, #tpu.memory_space<vmem>>, vector<8x32xf32>
    %c0_317 = arith.constant 0 : index
    %c0_318 = arith.constant 0 : index
    %707 = vector.load %arg10[%c0_317, %c0_318] : memref<32x128xf32, #tpu.memory_space<vmem>>, vector<32x128xf32>
    %cst_319 = arith.constant dense<0.000000e+00> : vector<8x128xf32>
    %708 = tpu.matmul %705, %707, %cst_319 {dimension_numbers = #tpu.dot_dimension_numbers<[1], [0], [0], [1], [0, 0, 1, 1], [], []>} : vector<8x32xf32>, vector<32x128xf32>, vector<8x128xf32> -> vector<8x128xf32>
    %709 = arith.addf %704, %708 : vector<8x128xf32>
    %710 = vector.extract_strided_slice %709 {offsets = [0, 0], sizes = [8, 32], strides = [1, 1]} : vector<8x128xf32> to vector<8x32xf32>
    %711 = arith.negf %710 : vector<8x32xf32>
    %712 = math.exp %711 : vector<8x32xf32>
    %cst_320 = arith.constant 1.000000e+00 : f32
    %713 = vector.broadcast %cst_320 : f32 to vector<8x32xf32>
    %714 = arith.addf %713, %712 : vector<8x32xf32>
    %715 = arith.divf %713, %714 : vector<8x32xf32>
    %716 = vector.extract_strided_slice %709 {offsets = [0, 32], sizes = [8, 32], strides = [1, 1]} : vector<8x128xf32> to vector<8x32xf32>
    %717 = arith.negf %716 : vector<8x32xf32>
    %718 = math.exp %717 : vector<8x32xf32>
    %cst_321 = arith.constant 1.000000e+00 : f32
    %719 = vector.broadcast %cst_321 : f32 to vector<8x32xf32>
    %720 = arith.addf %719, %718 : vector<8x32xf32>
    %721 = arith.divf %719, %720 : vector<8x32xf32>
    %722 = vector.extract_strided_slice %709 {offsets = [0, 64], sizes = [8, 32], strides = [1, 1]} : vector<8x128xf32> to vector<8x32xf32>
    %723 = math.tanh %722 : vector<8x32xf32>
    %724 = vector.extract_strided_slice %709 {offsets = [0, 96], sizes = [8, 32], strides = [1, 1]} : vector<8x128xf32> to vector<8x32xf32>
    %725 = arith.negf %724 : vector<8x32xf32>
    %726 = math.exp %725 : vector<8x32xf32>
    %cst_322 = arith.constant 1.000000e+00 : f32
    %727 = vector.broadcast %cst_322 : f32 to vector<8x32xf32>
    %728 = arith.addf %727, %726 : vector<8x32xf32>
    %729 = arith.divf %727, %728 : vector<8x32xf32>
    %730 = arith.mulf %721, %706 : vector<8x32xf32>
    %731 = arith.mulf %715, %723 : vector<8x32xf32>
    %732 = arith.addf %730, %731 : vector<8x32xf32>
    %733 = math.tanh %732 : vector<8x32xf32>
    %734 = arith.mulf %729, %733 : vector<8x32xf32>
    %cst_323 = arith.constant 0.000000e+00 : f32
    %735 = vector.shape_cast %5 : vector<8x1xi1> to vector<8x1xi1>
    %736 = vector.broadcast %735 : vector<8x1xi1> to vector<8x32xi1>
    %737 = vector.broadcast %cst_323 : f32 to vector<8x32xf32>
    %738 = arith.select %736, %734, %737 : vector<8x32xi1>, vector<8x32xf32>
    %cst_324 = arith.constant 0.000000e+00 : f32
    %739 = vector.shape_cast %5 : vector<8x1xi1> to vector<8x1xi1>
    %740 = vector.broadcast %739 : vector<8x1xi1> to vector<8x32xi1>
    %741 = vector.broadcast %cst_324 : f32 to vector<8x32xf32>
    %742 = arith.select %740, %732, %741 : vector<8x32xi1>, vector<8x32xf32>
    %c0_325 = arith.constant 0 : index
    %c0_326 = arith.constant 0 : index
    %743 = vector.load %arg22[%c0_325, %c0_326] : memref<8x32xf32, #tpu.memory_space<vmem>>, vector<8x32xf32>
    tpu.vector_store %arg22[%c0_325, %c0_326], %738 {strides = array<i32>} : memref<8x32xf32, #tpu.memory_space<vmem>>, vector<8x32xf32>,
    %c0_327 = arith.constant 0 : index
    %c0_328 = arith.constant 0 : index
    %744 = vector.load %arg24[%c0_327, %c0_328] : memref<8x32xf32, #tpu.memory_space<vmem>>, vector<8x32xf32>
    tpu.vector_store %arg24[%c0_327, %c0_328], %742 {strides = array<i32>} : memref<8x32xf32, #tpu.memory_space<vmem>>, vector<8x32xf32>,
    %cst_329 = arith.constant dense<0.000000e+00> : vector<8xf32>
    %745 = vector.multi_reduction <add>, %738, %cst_329 [1] : vector<8x32xf32> to vector<8xf32>
    %746 = vector.shape_cast %745 : vector<8xf32> to vector<8x1xf32>
    %cst_330 = arith.constant 3.125000e-02 : f32
    %747 = vector.broadcast %cst_330 : f32 to vector<8x1xf32>
    %748 = arith.mulf %746, %747 : vector<8x1xf32>
    %749 = vector.broadcast %748 : vector<8x1xf32> to vector<8x32xf32>
    %750 = arith.subf %738, %749 : vector<8x32xf32>
    %751 = arith.mulf %750, %750 : vector<8x32xf32>
    %cst_331 = arith.constant dense<0.000000e+00> : vector<8xf32>
    %752 = vector.multi_reduction <add>, %751, %cst_331 [1] : vector<8x32xf32> to vector<8xf32>
    %753 = vector.shape_cast %752 : vector<8xf32> to vector<8x1xf32>
    %cst_332 = arith.constant 3.125000e-02 : f32
    %754 = vector.broadcast %cst_332 : f32 to vector<8x1xf32>
    %755 = arith.mulf %753, %754 : vector<8x1xf32>
    %cst_333 = arith.constant 9.99999974E-6 : f32
    %756 = vector.broadcast %cst_333 : f32 to vector<8x1xf32>
    %757 = arith.addf %755, %756 : vector<8x1xf32>
    %758 = math.rsqrt %757 : vector<8x1xf32>
    %759 = vector.broadcast %758 : vector<8x1xf32> to vector<8x32xf32>
    %760 = arith.mulf %750, %759 : vector<8x32xf32>
    %c0_334 = arith.constant 0 : index
    %c0_335 = arith.constant 0 : index
    %761 = vector.load %arg14[%c0_334, %c0_335] : memref<1x32xf32, #tpu.memory_space<vmem>>, vector<1x32xf32>
    %762 = vector.broadcast %761 : vector<1x32xf32> to vector<8x32xf32>
    %763 = arith.mulf %760, %762 : vector<8x32xf32>
    %c0_336 = arith.constant 0 : index
    %c0_337 = arith.constant 0 : index
    %764 = vector.load %arg15[%c0_336, %c0_337] : memref<1x32xf32, #tpu.memory_space<vmem>>, vector<1x32xf32>
    %765 = vector.broadcast %764 : vector<1x32xf32> to vector<8x32xf32>
    %766 = arith.addf %763, %765 : vector<8x32xf32>
    %cst_338 = arith.constant 0.000000e+00 : f32
    %767 = vector.shape_cast %5 : vector<8x1xi1> to vector<8x1xi1>
    %768 = vector.broadcast %767 : vector<8x1xi1> to vector<8x32xi1>
    %769 = vector.broadcast %cst_338 : f32 to vector<8x32xf32>
    %770 = arith.select %768, %766, %769 : vector<8x32xi1>, vector<8x32xf32>
    %c2 = arith.constant 2 : index
    %c0_339 = arith.constant 0 : index
    %c0_340 = arith.constant 0 : index
    %771 = vector.load %arg16[%c2, %c0_339, %c0_340] : memref<8x8x32xf32, #tpu.memory_space<vmem>>, vector<1x8x32xf32>
    %772 = vector.shape_cast %771 : vector<1x8x32xf32> to vector<8x32xf32>
    %773 = vector.shape_cast %770 : vector<8x32xf32> to vector<1x8x32xf32>
    tpu.vector_store %arg16[%c2, %c0_339, %c0_340], %773 {strides = array<i32>} : memref<8x8x32xf32, #tpu.memory_space<vmem>>, vector<1x8x32xf32>,
    %c24_341 = arith.constant 24 : index
    %c0_342 = arith.constant 0 : index
    %774 = vector.load %arg26[%c24_341, %c0_342] : memref<64x128xf32, #tpu.memory_space<vmem>>, vector<8x128xf32>
    %c0_343 = arith.constant 0 : index
    %c0_344 = arith.constant 0 : index
    %775 = vector.load %arg22[%c0_343, %c0_344] : memref<8x32xf32, #tpu.memory_space<vmem>>, vector<8x32xf32>
    %c0_345 = arith.constant 0 : index
    %c0_346 = arith.constant 0 : index
    %776 = vector.load %arg24[%c0_345, %c0_346] : memref<8x32xf32, #tpu.memory_space<vmem>>, vector<8x32xf32>
    %c0_347 = arith.constant 0 : index
    %c0_348 = arith.constant 0 : index
    %777 = vector.load %arg10[%c0_347, %c0_348] : memref<32x128xf32, #tpu.memory_space<vmem>>, vector<32x128xf32>
    %cst_349 = arith.constant dense<0.000000e+00> : vector<8x128xf32>
    %778 = tpu.matmul %775, %777, %cst_349 {dimension_numbers = #tpu.dot_dimension_numbers<[1], [0], [0], [1], [0, 0, 1, 1], [], []>} : vector<8x32xf32>, vector<32x128xf32>, vector<8x128xf32> -> vector<8x128xf32>
    %779 = arith.addf %774, %778 : vector<8x128xf32>
    %780 = vector.extract_strided_slice %779 {offsets = [0, 0], sizes = [8, 32], strides = [1, 1]} : vector<8x128xf32> to vector<8x32xf32>
    %781 = arith.negf %780 : vector<8x32xf32>
    %782 = math.exp %781 : vector<8x32xf32>
    %cst_350 = arith.constant 1.000000e+00 : f32
    %783 = vector.broadcast %cst_350 : f32 to vector<8x32xf32>
    %784 = arith.addf %783, %782 : vector<8x32xf32>
    %785 = arith.divf %783, %784 : vector<8x32xf32>
    %786 = vector.extract_strided_slice %779 {offsets = [0, 32], sizes = [8, 32], strides = [1, 1]} : vector<8x128xf32> to vector<8x32xf32>
    %787 = arith.negf %786 : vector<8x32xf32>
    %788 = math.exp %787 : vector<8x32xf32>
    %cst_351 = arith.constant 1.000000e+00 : f32
    %789 = vector.broadcast %cst_351 : f32 to vector<8x32xf32>
    %790 = arith.addf %789, %788 : vector<8x32xf32>
    %791 = arith.divf %789, %790 : vector<8x32xf32>
    %792 = vector.extract_strided_slice %779 {offsets = [0, 64], sizes = [8, 32], strides = [1, 1]} : vector<8x128xf32> to vector<8x32xf32>
    %793 = math.tanh %792 : vector<8x32xf32>
    %794 = vector.extract_strided_slice %779 {offsets = [0, 96], sizes = [8, 32], strides = [1, 1]} : vector<8x128xf32> to vector<8x32xf32>
    %795 = arith.negf %794 : vector<8x32xf32>
    %796 = math.exp %795 : vector<8x32xf32>
    %cst_352 = arith.constant 1.000000e+00 : f32
    %797 = vector.broadcast %cst_352 : f32 to vector<8x32xf32>
    %798 = arith.addf %797, %796 : vector<8x32xf32>
    %799 = arith.divf %797, %798 : vector<8x32xf32>
    %800 = arith.mulf %791, %776 : vector<8x32xf32>
    %801 = arith.mulf %785, %793 : vector<8x32xf32>
    %802 = arith.addf %800, %801 : vector<8x32xf32>
    %803 = math.tanh %802 : vector<8x32xf32>
    %804 = arith.mulf %799, %803 : vector<8x32xf32>
    %cst_353 = arith.constant 0.000000e+00 : f32
    %805 = vector.shape_cast %5 : vector<8x1xi1> to vector<8x1xi1>
    %806 = vector.broadcast %805 : vector<8x1xi1> to vector<8x32xi1>
    %807 = vector.broadcast %cst_353 : f32 to vector<8x32xf32>
    %808 = arith.select %806, %804, %807 : vector<8x32xi1>, vector<8x32xf32>
    %cst_354 = arith.constant 0.000000e+00 : f32
    %809 = vector.shape_cast %5 : vector<8x1xi1> to vector<8x1xi1>
    %810 = vector.broadcast %809 : vector<8x1xi1> to vector<8x32xi1>
    %811 = vector.broadcast %cst_354 : f32 to vector<8x32xf32>
    %812 = arith.select %810, %802, %811 : vector<8x32xi1>, vector<8x32xf32>
    %c0_355 = arith.constant 0 : index
    %c0_356 = arith.constant 0 : index
    %813 = vector.load %arg22[%c0_355, %c0_356] : memref<8x32xf32, #tpu.memory_space<vmem>>, vector<8x32xf32>
    tpu.vector_store %arg22[%c0_355, %c0_356], %808 {strides = array<i32>} : memref<8x32xf32, #tpu.memory_space<vmem>>, vector<8x32xf32>,
    %c0_357 = arith.constant 0 : index
    %c0_358 = arith.constant 0 : index
    %814 = vector.load %arg24[%c0_357, %c0_358] : memref<8x32xf32, #tpu.memory_space<vmem>>, vector<8x32xf32>
    tpu.vector_store %arg24[%c0_357, %c0_358], %812 {strides = array<i32>} : memref<8x32xf32, #tpu.memory_space<vmem>>, vector<8x32xf32>,
    %cst_359 = arith.constant dense<0.000000e+00> : vector<8xf32>
    %815 = vector.multi_reduction <add>, %808, %cst_359 [1] : vector<8x32xf32> to vector<8xf32>
    %816 = vector.shape_cast %815 : vector<8xf32> to vector<8x1xf32>
    %cst_360 = arith.constant 3.125000e-02 : f32
    %817 = vector.broadcast %cst_360 : f32 to vector<8x1xf32>
    %818 = arith.mulf %816, %817 : vector<8x1xf32>
    %819 = vector.broadcast %818 : vector<8x1xf32> to vector<8x32xf32>
    %820 = arith.subf %808, %819 : vector<8x32xf32>
    %821 = arith.mulf %820, %820 : vector<8x32xf32>
    %cst_361 = arith.constant dense<0.000000e+00> : vector<8xf32>
    %822 = vector.multi_reduction <add>, %821, %cst_361 [1] : vector<8x32xf32> to vector<8xf32>
    %823 = vector.shape_cast %822 : vector<8xf32> to vector<8x1xf32>
    %cst_362 = arith.constant 3.125000e-02 : f32
    %824 = vector.broadcast %cst_362 : f32 to vector<8x1xf32>
    %825 = arith.mulf %823, %824 : vector<8x1xf32>
    %cst_363 = arith.constant 9.99999974E-6 : f32
    %826 = vector.broadcast %cst_363 : f32 to vector<8x1xf32>
    %827 = arith.addf %825, %826 : vector<8x1xf32>
    %828 = math.rsqrt %827 : vector<8x1xf32>
    %829 = vector.broadcast %828 : vector<8x1xf32> to vector<8x32xf32>
    %830 = arith.mulf %820, %829 : vector<8x32xf32>
    %c0_364 = arith.constant 0 : index
    %c0_365 = arith.constant 0 : index
    %831 = vector.load %arg14[%c0_364, %c0_365] : memref<1x32xf32, #tpu.memory_space<vmem>>, vector<1x32xf32>
    %832 = vector.broadcast %831 : vector<1x32xf32> to vector<8x32xf32>
    %833 = arith.mulf %830, %832 : vector<8x32xf32>
    %c0_366 = arith.constant 0 : index
    %c0_367 = arith.constant 0 : index
    %834 = vector.load %arg15[%c0_366, %c0_367] : memref<1x32xf32, #tpu.memory_space<vmem>>, vector<1x32xf32>
    %835 = vector.broadcast %834 : vector<1x32xf32> to vector<8x32xf32>
    %836 = arith.addf %833, %835 : vector<8x32xf32>
    %cst_368 = arith.constant 0.000000e+00 : f32
    %837 = vector.shape_cast %5 : vector<8x1xi1> to vector<8x1xi1>
    %838 = vector.broadcast %837 : vector<8x1xi1> to vector<8x32xi1>
    %839 = vector.broadcast %cst_368 : f32 to vector<8x32xf32>
    %840 = arith.select %838, %836, %839 : vector<8x32xi1>, vector<8x32xf32>
    %c3 = arith.constant 3 : index
    %c0_369 = arith.constant 0 : index
    %c0_370 = arith.constant 0 : index
    %841 = vector.load %arg16[%c3, %c0_369, %c0_370] : memref<8x8x32xf32, #tpu.memory_space<vmem>>, vector<1x8x32xf32>
    %842 = vector.shape_cast %841 : vector<1x8x32xf32> to vector<8x32xf32>
    %843 = vector.shape_cast %840 : vector<8x32xf32> to vector<1x8x32xf32>
    tpu.vector_store %arg16[%c3, %c0_369, %c0_370], %843 {strides = array<i32>} : memref<8x8x32xf32, #tpu.memory_space<vmem>>, vector<1x8x32xf32>,
    %c32_371 = arith.constant 32 : index
    %c0_372 = arith.constant 0 : index
    %844 = vector.load %arg26[%c32_371, %c0_372] : memref<64x128xf32, #tpu.memory_space<vmem>>, vector<8x128xf32>
    %c0_373 = arith.constant 0 : index
    %c0_374 = arith.constant 0 : index
    %845 = vector.load %arg22[%c0_373, %c0_374] : memref<8x32xf32, #tpu.memory_space<vmem>>, vector<8x32xf32>
    %c0_375 = arith.constant 0 : index
    %c0_376 = arith.constant 0 : index
    %846 = vector.load %arg24[%c0_375, %c0_376] : memref<8x32xf32, #tpu.memory_space<vmem>>, vector<8x32xf32>
    %c0_377 = arith.constant 0 : index
    %c0_378 = arith.constant 0 : index
    %847 = vector.load %arg10[%c0_377, %c0_378] : memref<32x128xf32, #tpu.memory_space<vmem>>, vector<32x128xf32>
    %cst_379 = arith.constant dense<0.000000e+00> : vector<8x128xf32>
    %848 = tpu.matmul %845, %847, %cst_379 {dimension_numbers = #tpu.dot_dimension_numbers<[1], [0], [0], [1], [0, 0, 1, 1], [], []>} : vector<8x32xf32>, vector<32x128xf32>, vector<8x128xf32> -> vector<8x128xf32>
    %849 = arith.addf %844, %848 : vector<8x128xf32>
    %850 = vector.extract_strided_slice %849 {offsets = [0, 0], sizes = [8, 32], strides = [1, 1]} : vector<8x128xf32> to vector<8x32xf32>
    %851 = arith.negf %850 : vector<8x32xf32>
    %852 = math.exp %851 : vector<8x32xf32>
    %cst_380 = arith.constant 1.000000e+00 : f32
    %853 = vector.broadcast %cst_380 : f32 to vector<8x32xf32>
    %854 = arith.addf %853, %852 : vector<8x32xf32>
    %855 = arith.divf %853, %854 : vector<8x32xf32>
    %856 = vector.extract_strided_slice %849 {offsets = [0, 32], sizes = [8, 32], strides = [1, 1]} : vector<8x128xf32> to vector<8x32xf32>
    %857 = arith.negf %856 : vector<8x32xf32>
    %858 = math.exp %857 : vector<8x32xf32>
    %cst_381 = arith.constant 1.000000e+00 : f32
    %859 = vector.broadcast %cst_381 : f32 to vector<8x32xf32>
    %860 = arith.addf %859, %858 : vector<8x32xf32>
    %861 = arith.divf %859, %860 : vector<8x32xf32>
    %862 = vector.extract_strided_slice %849 {offsets = [0, 64], sizes = [8, 32], strides = [1, 1]} : vector<8x128xf32> to vector<8x32xf32>
    %863 = math.tanh %862 : vector<8x32xf32>
    %864 = vector.extract_strided_slice %849 {offsets = [0, 96], sizes = [8, 32], strides = [1, 1]} : vector<8x128xf32> to vector<8x32xf32>
    %865 = arith.negf %864 : vector<8x32xf32>
    %866 = math.exp %865 : vector<8x32xf32>
    %cst_382 = arith.constant 1.000000e+00 : f32
    %867 = vector.broadcast %cst_382 : f32 to vector<8x32xf32>
    %868 = arith.addf %867, %866 : vector<8x32xf32>
    %869 = arith.divf %867, %868 : vector<8x32xf32>
    %870 = arith.mulf %861, %846 : vector<8x32xf32>
    %871 = arith.mulf %855, %863 : vector<8x32xf32>
    %872 = arith.addf %870, %871 : vector<8x32xf32>
    %873 = math.tanh %872 : vector<8x32xf32>
    %874 = arith.mulf %869, %873 : vector<8x32xf32>
    %cst_383 = arith.constant 0.000000e+00 : f32
    %875 = vector.shape_cast %5 : vector<8x1xi1> to vector<8x1xi1>
    %876 = vector.broadcast %875 : vector<8x1xi1> to vector<8x32xi1>
    %877 = vector.broadcast %cst_383 : f32 to vector<8x32xf32>
    %878 = arith.select %876, %874, %877 : vector<8x32xi1>, vector<8x32xf32>
    %cst_384 = arith.constant 0.000000e+00 : f32
    %879 = vector.shape_cast %5 : vector<8x1xi1> to vector<8x1xi1>
    %880 = vector.broadcast %879 : vector<8x1xi1> to vector<8x32xi1>
    %881 = vector.broadcast %cst_384 : f32 to vector<8x32xf32>
    %882 = arith.select %880, %872, %881 : vector<8x32xi1>, vector<8x32xf32>
    %c0_385 = arith.constant 0 : index
    %c0_386 = arith.constant 0 : index
    %883 = vector.load %arg22[%c0_385, %c0_386] : memref<8x32xf32, #tpu.memory_space<vmem>>, vector<8x32xf32>
    tpu.vector_store %arg22[%c0_385, %c0_386], %878 {strides = array<i32>} : memref<8x32xf32, #tpu.memory_space<vmem>>, vector<8x32xf32>,
    %c0_387 = arith.constant 0 : index
    %c0_388 = arith.constant 0 : index
    %884 = vector.load %arg24[%c0_387, %c0_388] : memref<8x32xf32, #tpu.memory_space<vmem>>, vector<8x32xf32>
    tpu.vector_store %arg24[%c0_387, %c0_388], %882 {strides = array<i32>} : memref<8x32xf32, #tpu.memory_space<vmem>>, vector<8x32xf32>,
    %cst_389 = arith.constant dense<0.000000e+00> : vector<8xf32>
    %885 = vector.multi_reduction <add>, %878, %cst_389 [1] : vector<8x32xf32> to vector<8xf32>
    %886 = vector.shape_cast %885 : vector<8xf32> to vector<8x1xf32>
    %cst_390 = arith.constant 3.125000e-02 : f32
    %887 = vector.broadcast %cst_390 : f32 to vector<8x1xf32>
    %888 = arith.mulf %886, %887 : vector<8x1xf32>
    %889 = vector.broadcast %888 : vector<8x1xf32> to vector<8x32xf32>
    %890 = arith.subf %878, %889 : vector<8x32xf32>
    %891 = arith.mulf %890, %890 : vector<8x32xf32>
    %cst_391 = arith.constant dense<0.000000e+00> : vector<8xf32>
    %892 = vector.multi_reduction <add>, %891, %cst_391 [1] : vector<8x32xf32> to vector<8xf32>
    %893 = vector.shape_cast %892 : vector<8xf32> to vector<8x1xf32>
    %cst_392 = arith.constant 3.125000e-02 : f32
    %894 = vector.broadcast %cst_392 : f32 to vector<8x1xf32>
    %895 = arith.mulf %893, %894 : vector<8x1xf32>
    %cst_393 = arith.constant 9.99999974E-6 : f32
    %896 = vector.broadcast %cst_393 : f32 to vector<8x1xf32>
    %897 = arith.addf %895, %896 : vector<8x1xf32>
    %898 = math.rsqrt %897 : vector<8x1xf32>
    %899 = vector.broadcast %898 : vector<8x1xf32> to vector<8x32xf32>
    %900 = arith.mulf %890, %899 : vector<8x32xf32>
    %c0_394 = arith.constant 0 : index
    %c0_395 = arith.constant 0 : index
    %901 = vector.load %arg14[%c0_394, %c0_395] : memref<1x32xf32, #tpu.memory_space<vmem>>, vector<1x32xf32>
    %902 = vector.broadcast %901 : vector<1x32xf32> to vector<8x32xf32>
    %903 = arith.mulf %900, %902 : vector<8x32xf32>
    %c0_396 = arith.constant 0 : index
    %c0_397 = arith.constant 0 : index
    %904 = vector.load %arg15[%c0_396, %c0_397] : memref<1x32xf32, #tpu.memory_space<vmem>>, vector<1x32xf32>
    %905 = vector.broadcast %904 : vector<1x32xf32> to vector<8x32xf32>
    %906 = arith.addf %903, %905 : vector<8x32xf32>
    %cst_398 = arith.constant 0.000000e+00 : f32
    %907 = vector.shape_cast %5 : vector<8x1xi1> to vector<8x1xi1>
    %908 = vector.broadcast %907 : vector<8x1xi1> to vector<8x32xi1>
    %909 = vector.broadcast %cst_398 : f32 to vector<8x32xf32>
    %910 = arith.select %908, %906, %909 : vector<8x32xi1>, vector<8x32xf32>
    %c4 = arith.constant 4 : index
    %c0_399 = arith.constant 0 : index
    %c0_400 = arith.constant 0 : index
    %911 = vector.load %arg16[%c4, %c0_399, %c0_400] : memref<8x8x32xf32, #tpu.memory_space<vmem>>, vector<1x8x32xf32>
    %912 = vector.shape_cast %911 : vector<1x8x32xf32> to vector<8x32xf32>
    %913 = vector.shape_cast %910 : vector<8x32xf32> to vector<1x8x32xf32>
    tpu.vector_store %arg16[%c4, %c0_399, %c0_400], %913 {strides = array<i32>} : memref<8x8x32xf32, #tpu.memory_space<vmem>>, vector<1x8x32xf32>,
    %c40_401 = arith.constant 40 : index
    %c0_402 = arith.constant 0 : index
    %914 = vector.load %arg26[%c40_401, %c0_402] : memref<64x128xf32, #tpu.memory_space<vmem>>, vector<8x128xf32>
    %c0_403 = arith.constant 0 : index
    %c0_404 = arith.constant 0 : index
    %915 = vector.load %arg22[%c0_403, %c0_404] : memref<8x32xf32, #tpu.memory_space<vmem>>, vector<8x32xf32>
    %c0_405 = arith.constant 0 : index
    %c0_406 = arith.constant 0 : index
    %916 = vector.load %arg24[%c0_405, %c0_406] : memref<8x32xf32, #tpu.memory_space<vmem>>, vector<8x32xf32>
    %c0_407 = arith.constant 0 : index
    %c0_408 = arith.constant 0 : index
    %917 = vector.load %arg10[%c0_407, %c0_408] : memref<32x128xf32, #tpu.memory_space<vmem>>, vector<32x128xf32>
    %cst_409 = arith.constant dense<0.000000e+00> : vector<8x128xf32>
    %918 = tpu.matmul %915, %917, %cst_409 {dimension_numbers = #tpu.dot_dimension_numbers<[1], [0], [0], [1], [0, 0, 1, 1], [], []>} : vector<8x32xf32>, vector<32x128xf32>, vector<8x128xf32> -> vector<8x128xf32>
    %919 = arith.addf %914, %918 : vector<8x128xf32>
    %920 = vector.extract_strided_slice %919 {offsets = [0, 0], sizes = [8, 32], strides = [1, 1]} : vector<8x128xf32> to vector<8x32xf32>
    %921 = arith.negf %920 : vector<8x32xf32>
    %922 = math.exp %921 : vector<8x32xf32>
    %cst_410 = arith.constant 1.000000e+00 : f32
    %923 = vector.broadcast %cst_410 : f32 to vector<8x32xf32>
    %924 = arith.addf %923, %922 : vector<8x32xf32>
    %925 = arith.divf %923, %924 : vector<8x32xf32>
    %926 = vector.extract_strided_slice %919 {offsets = [0, 32], sizes = [8, 32], strides = [1, 1]} : vector<8x128xf32> to vector<8x32xf32>
    %927 = arith.negf %926 : vector<8x32xf32>
    %928 = math.exp %927 : vector<8x32xf32>
    %cst_411 = arith.constant 1.000000e+00 : f32
    %929 = vector.broadcast %cst_411 : f32 to vector<8x32xf32>
    %930 = arith.addf %929, %928 : vector<8x32xf32>
    %931 = arith.divf %929, %930 : vector<8x32xf32>
    %932 = vector.extract_strided_slice %919 {offsets = [0, 64], sizes = [8, 32], strides = [1, 1]} : vector<8x128xf32> to vector<8x32xf32>
    %933 = math.tanh %932 : vector<8x32xf32>
    %934 = vector.extract_strided_slice %919 {offsets = [0, 96], sizes = [8, 32], strides = [1, 1]} : vector<8x128xf32> to vector<8x32xf32>
    %935 = arith.negf %934 : vector<8x32xf32>
    %936 = math.exp %935 : vector<8x32xf32>
    %cst_412 = arith.constant 1.000000e+00 : f32
    %937 = vector.broadcast %cst_412 : f32 to vector<8x32xf32>
    %938 = arith.addf %937, %936 : vector<8x32xf32>
    %939 = arith.divf %937, %938 : vector<8x32xf32>
    %940 = arith.mulf %931, %916 : vector<8x32xf32>
    %941 = arith.mulf %925, %933 : vector<8x32xf32>
    %942 = arith.addf %940, %941 : vector<8x32xf32>
    %943 = math.tanh %942 : vector<8x32xf32>
    %944 = arith.mulf %939, %943 : vector<8x32xf32>
    %cst_413 = arith.constant 0.000000e+00 : f32
    %945 = vector.shape_cast %5 : vector<8x1xi1> to vector<8x1xi1>
    %946 = vector.broadcast %945 : vector<8x1xi1> to vector<8x32xi1>
    %947 = vector.broadcast %cst_413 : f32 to vector<8x32xf32>
    %948 = arith.select %946, %944, %947 : vector<8x32xi1>, vector<8x32xf32>
    %cst_414 = arith.constant 0.000000e+00 : f32
    %949 = vector.shape_cast %5 : vector<8x1xi1> to vector<8x1xi1>
    %950 = vector.broadcast %949 : vector<8x1xi1> to vector<8x32xi1>
    %951 = vector.broadcast %cst_414 : f32 to vector<8x32xf32>
    %952 = arith.select %950, %942, %951 : vector<8x32xi1>, vector<8x32xf32>
    %c0_415 = arith.constant 0 : index
    %c0_416 = arith.constant 0 : index
    %953 = vector.load %arg22[%c0_415, %c0_416] : memref<8x32xf32, #tpu.memory_space<vmem>>, vector<8x32xf32>
    tpu.vector_store %arg22[%c0_415, %c0_416], %948 {strides = array<i32>} : memref<8x32xf32, #tpu.memory_space<vmem>>, vector<8x32xf32>,
    %c0_417 = arith.constant 0 : index
    %c0_418 = arith.constant 0 : index
    %954 = vector.load %arg24[%c0_417, %c0_418] : memref<8x32xf32, #tpu.memory_space<vmem>>, vector<8x32xf32>
    tpu.vector_store %arg24[%c0_417, %c0_418], %952 {strides = array<i32>} : memref<8x32xf32, #tpu.memory_space<vmem>>, vector<8x32xf32>,
    %cst_419 = arith.constant dense<0.000000e+00> : vector<8xf32>
    %955 = vector.multi_reduction <add>, %948, %cst_419 [1] : vector<8x32xf32> to vector<8xf32>
    %956 = vector.shape_cast %955 : vector<8xf32> to vector<8x1xf32>
    %cst_420 = arith.constant 3.125000e-02 : f32
    %957 = vector.broadcast %cst_420 : f32 to vector<8x1xf32>
    %958 = arith.mulf %956, %957 : vector<8x1xf32>
    %959 = vector.broadcast %958 : vector<8x1xf32> to vector<8x32xf32>
    %960 = arith.subf %948, %959 : vector<8x32xf32>
    %961 = arith.mulf %960, %960 : vector<8x32xf32>
    %cst_421 = arith.constant dense<0.000000e+00> : vector<8xf32>
    %962 = vector.multi_reduction <add>, %961, %cst_421 [1] : vector<8x32xf32> to vector<8xf32>
    %963 = vector.shape_cast %962 : vector<8xf32> to vector<8x1xf32>
    %cst_422 = arith.constant 3.125000e-02 : f32
    %964 = vector.broadcast %cst_422 : f32 to vector<8x1xf32>
    %965 = arith.mulf %963, %964 : vector<8x1xf32>
    %cst_423 = arith.constant 9.99999974E-6 : f32
    %966 = vector.broadcast %cst_423 : f32 to vector<8x1xf32>
    %967 = arith.addf %965, %966 : vector<8x1xf32>
    %968 = math.rsqrt %967 : vector<8x1xf32>
    %969 = vector.broadcast %968 : vector<8x1xf32> to vector<8x32xf32>
    %970 = arith.mulf %960, %969 : vector<8x32xf32>
    %c0_424 = arith.constant 0 : index
    %c0_425 = arith.constant 0 : index
    %971 = vector.load %arg14[%c0_424, %c0_425] : memref<1x32xf32, #tpu.memory_space<vmem>>, vector<1x32xf32>
    %972 = vector.broadcast %971 : vector<1x32xf32> to vector<8x32xf32>
    %973 = arith.mulf %970, %972 : vector<8x32xf32>
    %c0_426 = arith.constant 0 : index
    %c0_427 = arith.constant 0 : index
    %974 = vector.load %arg15[%c0_426, %c0_427] : memref<1x32xf32, #tpu.memory_space<vmem>>, vector<1x32xf32>
    %975 = vector.broadcast %974 : vector<1x32xf32> to vector<8x32xf32>
    %976 = arith.addf %973, %975 : vector<8x32xf32>
    %cst_428 = arith.constant 0.000000e+00 : f32
    %977 = vector.shape_cast %5 : vector<8x1xi1> to vector<8x1xi1>
    %978 = vector.broadcast %977 : vector<8x1xi1> to vector<8x32xi1>
    %979 = vector.broadcast %cst_428 : f32 to vector<8x32xf32>
    %980 = arith.select %978, %976, %979 : vector<8x32xi1>, vector<8x32xf32>
    %c5 = arith.constant 5 : index
    %c0_429 = arith.constant 0 : index
    %c0_430 = arith.constant 0 : index
    %981 = vector.load %arg16[%c5, %c0_429, %c0_430] : memref<8x8x32xf32, #tpu.memory_space<vmem>>, vector<1x8x32xf32>
    %982 = vector.shape_cast %981 : vector<1x8x32xf32> to vector<8x32xf32>
    %983 = vector.shape_cast %980 : vector<8x32xf32> to vector<1x8x32xf32>
    tpu.vector_store %arg16[%c5, %c0_429, %c0_430], %983 {strides = array<i32>} : memref<8x8x32xf32, #tpu.memory_space<vmem>>, vector<1x8x32xf32>,
    %c48_431 = arith.constant 48 : index
    %c0_432 = arith.constant 0 : index
    %984 = vector.load %arg26[%c48_431, %c0_432] : memref<64x128xf32, #tpu.memory_space<vmem>>, vector<8x128xf32>
    %c0_433 = arith.constant 0 : index
    %c0_434 = arith.constant 0 : index
    %985 = vector.load %arg22[%c0_433, %c0_434] : memref<8x32xf32, #tpu.memory_space<vmem>>, vector<8x32xf32>
    %c0_435 = arith.constant 0 : index
    %c0_436 = arith.constant 0 : index
    %986 = vector.load %arg24[%c0_435, %c0_436] : memref<8x32xf32, #tpu.memory_space<vmem>>, vector<8x32xf32>
    %c0_437 = arith.constant 0 : index
    %c0_438 = arith.constant 0 : index
    %987 = vector.load %arg10[%c0_437, %c0_438] : memref<32x128xf32, #tpu.memory_space<vmem>>, vector<32x128xf32>
    %cst_439 = arith.constant dense<0.000000e+00> : vector<8x128xf32>
    %988 = tpu.matmul %985, %987, %cst_439 {dimension_numbers = #tpu.dot_dimension_numbers<[1], [0], [0], [1], [0, 0, 1, 1], [], []>} : vector<8x32xf32>, vector<32x128xf32>, vector<8x128xf32> -> vector<8x128xf32>
    %989 = arith.addf %984, %988 : vector<8x128xf32>
    %990 = vector.extract_strided_slice %989 {offsets = [0, 0], sizes = [8, 32], strides = [1, 1]} : vector<8x128xf32> to vector<8x32xf32>
    %991 = arith.negf %990 : vector<8x32xf32>
    %992 = math.exp %991 : vector<8x32xf32>
    %cst_440 = arith.constant 1.000000e+00 : f32
    %993 = vector.broadcast %cst_440 : f32 to vector<8x32xf32>
    %994 = arith.addf %993, %992 : vector<8x32xf32>
    %995 = arith.divf %993, %994 : vector<8x32xf32>
    %996 = vector.extract_strided_slice %989 {offsets = [0, 32], sizes = [8, 32], strides = [1, 1]} : vector<8x128xf32> to vector<8x32xf32>
    %997 = arith.negf %996 : vector<8x32xf32>
    %998 = math.exp %997 : vector<8x32xf32>
    %cst_441 = arith.constant 1.000000e+00 : f32
    %999 = vector.broadcast %cst_441 : f32 to vector<8x32xf32>
    %1000 = arith.addf %999, %998 : vector<8x32xf32>
    %1001 = arith.divf %999, %1000 : vector<8x32xf32>
    %1002 = vector.extract_strided_slice %989 {offsets = [0, 64], sizes = [8, 32], strides = [1, 1]} : vector<8x128xf32> to vector<8x32xf32>
    %1003 = math.tanh %1002 : vector<8x32xf32>
    %1004 = vector.extract_strided_slice %989 {offsets = [0, 96], sizes = [8, 32], strides = [1, 1]} : vector<8x128xf32> to vector<8x32xf32>
    %1005 = arith.negf %1004 : vector<8x32xf32>
    %1006 = math.exp %1005 : vector<8x32xf32>
    %cst_442 = arith.constant 1.000000e+00 : f32
    %1007 = vector.broadcast %cst_442 : f32 to vector<8x32xf32>
    %1008 = arith.addf %1007, %1006 : vector<8x32xf32>
    %1009 = arith.divf %1007, %1008 : vector<8x32xf32>
    %1010 = arith.mulf %1001, %986 : vector<8x32xf32>
    %1011 = arith.mulf %995, %1003 : vector<8x32xf32>
    %1012 = arith.addf %1010, %1011 : vector<8x32xf32>
    %1013 = math.tanh %1012 : vector<8x32xf32>
    %1014 = arith.mulf %1009, %1013 : vector<8x32xf32>
    %cst_443 = arith.constant 0.000000e+00 : f32
    %1015 = vector.shape_cast %5 : vector<8x1xi1> to vector<8x1xi1>
    %1016 = vector.broadcast %1015 : vector<8x1xi1> to vector<8x32xi1>
    %1017 = vector.broadcast %cst_443 : f32 to vector<8x32xf32>
    %1018 = arith.select %1016, %1014, %1017 : vector<8x32xi1>, vector<8x32xf32>
    %cst_444 = arith.constant 0.000000e+00 : f32
    %1019 = vector.shape_cast %5 : vector<8x1xi1> to vector<8x1xi1>
    %1020 = vector.broadcast %1019 : vector<8x1xi1> to vector<8x32xi1>
    %1021 = vector.broadcast %cst_444 : f32 to vector<8x32xf32>
    %1022 = arith.select %1020, %1012, %1021 : vector<8x32xi1>, vector<8x32xf32>
    %c0_445 = arith.constant 0 : index
    %c0_446 = arith.constant 0 : index
    %1023 = vector.load %arg22[%c0_445, %c0_446] : memref<8x32xf32, #tpu.memory_space<vmem>>, vector<8x32xf32>
    tpu.vector_store %arg22[%c0_445, %c0_446], %1018 {strides = array<i32>} : memref<8x32xf32, #tpu.memory_space<vmem>>, vector<8x32xf32>,
    %c0_447 = arith.constant 0 : index
    %c0_448 = arith.constant 0 : index
    %1024 = vector.load %arg24[%c0_447, %c0_448] : memref<8x32xf32, #tpu.memory_space<vmem>>, vector<8x32xf32>
    tpu.vector_store %arg24[%c0_447, %c0_448], %1022 {strides = array<i32>} : memref<8x32xf32, #tpu.memory_space<vmem>>, vector<8x32xf32>,
    %cst_449 = arith.constant dense<0.000000e+00> : vector<8xf32>
    %1025 = vector.multi_reduction <add>, %1018, %cst_449 [1] : vector<8x32xf32> to vector<8xf32>
    %1026 = vector.shape_cast %1025 : vector<8xf32> to vector<8x1xf32>
    %cst_450 = arith.constant 3.125000e-02 : f32
    %1027 = vector.broadcast %cst_450 : f32 to vector<8x1xf32>
    %1028 = arith.mulf %1026, %1027 : vector<8x1xf32>
    %1029 = vector.broadcast %1028 : vector<8x1xf32> to vector<8x32xf32>
    %1030 = arith.subf %1018, %1029 : vector<8x32xf32>
    %1031 = arith.mulf %1030, %1030 : vector<8x32xf32>
    %cst_451 = arith.constant dense<0.000000e+00> : vector<8xf32>
    %1032 = vector.multi_reduction <add>, %1031, %cst_451 [1] : vector<8x32xf32> to vector<8xf32>
    %1033 = vector.shape_cast %1032 : vector<8xf32> to vector<8x1xf32>
    %cst_452 = arith.constant 3.125000e-02 : f32
    %1034 = vector.broadcast %cst_452 : f32 to vector<8x1xf32>
    %1035 = arith.mulf %1033, %1034 : vector<8x1xf32>
    %cst_453 = arith.constant 9.99999974E-6 : f32
    %1036 = vector.broadcast %cst_453 : f32 to vector<8x1xf32>
    %1037 = arith.addf %1035, %1036 : vector<8x1xf32>
    %1038 = math.rsqrt %1037 : vector<8x1xf32>
    %1039 = vector.broadcast %1038 : vector<8x1xf32> to vector<8x32xf32>
    %1040 = arith.mulf %1030, %1039 : vector<8x32xf32>
    %c0_454 = arith.constant 0 : index
    %c0_455 = arith.constant 0 : index
    %1041 = vector.load %arg14[%c0_454, %c0_455] : memref<1x32xf32, #tpu.memory_space<vmem>>, vector<1x32xf32>
    %1042 = vector.broadcast %1041 : vector<1x32xf32> to vector<8x32xf32>
    %1043 = arith.mulf %1040, %1042 : vector<8x32xf32>
    %c0_456 = arith.constant 0 : index
    %c0_457 = arith.constant 0 : index
    %1044 = vector.load %arg15[%c0_456, %c0_457] : memref<1x32xf32, #tpu.memory_space<vmem>>, vector<1x32xf32>
    %1045 = vector.broadcast %1044 : vector<1x32xf32> to vector<8x32xf32>
    %1046 = arith.addf %1043, %1045 : vector<8x32xf32>
    %cst_458 = arith.constant 0.000000e+00 : f32
    %1047 = vector.shape_cast %5 : vector<8x1xi1> to vector<8x1xi1>
    %1048 = vector.broadcast %1047 : vector<8x1xi1> to vector<8x32xi1>
    %1049 = vector.broadcast %cst_458 : f32 to vector<8x32xf32>
    %1050 = arith.select %1048, %1046, %1049 : vector<8x32xi1>, vector<8x32xf32>
    %c6 = arith.constant 6 : index
    %c0_459 = arith.constant 0 : index
    %c0_460 = arith.constant 0 : index
    %1051 = vector.load %arg16[%c6, %c0_459, %c0_460] : memref<8x8x32xf32, #tpu.memory_space<vmem>>, vector<1x8x32xf32>
    %1052 = vector.shape_cast %1051 : vector<1x8x32xf32> to vector<8x32xf32>
    %1053 = vector.shape_cast %1050 : vector<8x32xf32> to vector<1x8x32xf32>
    tpu.vector_store %arg16[%c6, %c0_459, %c0_460], %1053 {strides = array<i32>} : memref<8x8x32xf32, #tpu.memory_space<vmem>>, vector<1x8x32xf32>,
    %c56_461 = arith.constant 56 : index
    %c0_462 = arith.constant 0 : index
    %1054 = vector.load %arg26[%c56_461, %c0_462] : memref<64x128xf32, #tpu.memory_space<vmem>>, vector<8x128xf32>
    %c0_463 = arith.constant 0 : index
    %c0_464 = arith.constant 0 : index
    %1055 = vector.load %arg22[%c0_463, %c0_464] : memref<8x32xf32, #tpu.memory_space<vmem>>, vector<8x32xf32>
    %c0_465 = arith.constant 0 : index
    %c0_466 = arith.constant 0 : index
    %1056 = vector.load %arg24[%c0_465, %c0_466] : memref<8x32xf32, #tpu.memory_space<vmem>>, vector<8x32xf32>
    %c0_467 = arith.constant 0 : index
    %c0_468 = arith.constant 0 : index
    %1057 = vector.load %arg10[%c0_467, %c0_468] : memref<32x128xf32, #tpu.memory_space<vmem>>, vector<32x128xf32>
    %cst_469 = arith.constant dense<0.000000e+00> : vector<8x128xf32>
    %1058 = tpu.matmul %1055, %1057, %cst_469 {dimension_numbers = #tpu.dot_dimension_numbers<[1], [0], [0], [1], [0, 0, 1, 1], [], []>} : vector<8x32xf32>, vector<32x128xf32>, vector<8x128xf32> -> vector<8x128xf32>
    %1059 = arith.addf %1054, %1058 : vector<8x128xf32>
    %1060 = vector.extract_strided_slice %1059 {offsets = [0, 0], sizes = [8, 32], strides = [1, 1]} : vector<8x128xf32> to vector<8x32xf32>
    %1061 = arith.negf %1060 : vector<8x32xf32>
    %1062 = math.exp %1061 : vector<8x32xf32>
    %cst_470 = arith.constant 1.000000e+00 : f32
    %1063 = vector.broadcast %cst_470 : f32 to vector<8x32xf32>
    %1064 = arith.addf %1063, %1062 : vector<8x32xf32>
    %1065 = arith.divf %1063, %1064 : vector<8x32xf32>
    %1066 = vector.extract_strided_slice %1059 {offsets = [0, 32], sizes = [8, 32], strides = [1, 1]} : vector<8x128xf32> to vector<8x32xf32>
    %1067 = arith.negf %1066 : vector<8x32xf32>
    %1068 = math.exp %1067 : vector<8x32xf32>
    %cst_471 = arith.constant 1.000000e+00 : f32
    %1069 = vector.broadcast %cst_471 : f32 to vector<8x32xf32>
    %1070 = arith.addf %1069, %1068 : vector<8x32xf32>
    %1071 = arith.divf %1069, %1070 : vector<8x32xf32>
    %1072 = vector.extract_strided_slice %1059 {offsets = [0, 64], sizes = [8, 32], strides = [1, 1]} : vector<8x128xf32> to vector<8x32xf32>
    %1073 = math.tanh %1072 : vector<8x32xf32>
    %1074 = vector.extract_strided_slice %1059 {offsets = [0, 96], sizes = [8, 32], strides = [1, 1]} : vector<8x128xf32> to vector<8x32xf32>
    %1075 = arith.negf %1074 : vector<8x32xf32>
    %1076 = math.exp %1075 : vector<8x32xf32>
    %cst_472 = arith.constant 1.000000e+00 : f32
    %1077 = vector.broadcast %cst_472 : f32 to vector<8x32xf32>
    %1078 = arith.addf %1077, %1076 : vector<8x32xf32>
    %1079 = arith.divf %1077, %1078 : vector<8x32xf32>
    %1080 = arith.mulf %1071, %1056 : vector<8x32xf32>
    %1081 = arith.mulf %1065, %1073 : vector<8x32xf32>
    %1082 = arith.addf %1080, %1081 : vector<8x32xf32>
    %1083 = math.tanh %1082 : vector<8x32xf32>
    %1084 = arith.mulf %1079, %1083 : vector<8x32xf32>
    %cst_473 = arith.constant 0.000000e+00 : f32
    %1085 = vector.shape_cast %5 : vector<8x1xi1> to vector<8x1xi1>
    %1086 = vector.broadcast %1085 : vector<8x1xi1> to vector<8x32xi1>
    %1087 = vector.broadcast %cst_473 : f32 to vector<8x32xf32>
    %1088 = arith.select %1086, %1084, %1087 : vector<8x32xi1>, vector<8x32xf32>
    %cst_474 = arith.constant 0.000000e+00 : f32
    %1089 = vector.shape_cast %5 : vector<8x1xi1> to vector<8x1xi1>
    %1090 = vector.broadcast %1089 : vector<8x1xi1> to vector<8x32xi1>
    %1091 = vector.broadcast %cst_474 : f32 to vector<8x32xf32>
    %1092 = arith.select %1090, %1082, %1091 : vector<8x32xi1>, vector<8x32xf32>
    %c0_475 = arith.constant 0 : index
    %c0_476 = arith.constant 0 : index
    %1093 = vector.load %arg22[%c0_475, %c0_476] : memref<8x32xf32, #tpu.memory_space<vmem>>, vector<8x32xf32>
    tpu.vector_store %arg22[%c0_475, %c0_476], %1088 {strides = array<i32>} : memref<8x32xf32, #tpu.memory_space<vmem>>, vector<8x32xf32>,
    %c0_477 = arith.constant 0 : index
    %c0_478 = arith.constant 0 : index
    %1094 = vector.load %arg24[%c0_477, %c0_478] : memref<8x32xf32, #tpu.memory_space<vmem>>, vector<8x32xf32>
    tpu.vector_store %arg24[%c0_477, %c0_478], %1092 {strides = array<i32>} : memref<8x32xf32, #tpu.memory_space<vmem>>, vector<8x32xf32>,
    %cst_479 = arith.constant dense<0.000000e+00> : vector<8xf32>
    %1095 = vector.multi_reduction <add>, %1088, %cst_479 [1] : vector<8x32xf32> to vector<8xf32>
    %1096 = vector.shape_cast %1095 : vector<8xf32> to vector<8x1xf32>
    %cst_480 = arith.constant 3.125000e-02 : f32
    %1097 = vector.broadcast %cst_480 : f32 to vector<8x1xf32>
    %1098 = arith.mulf %1096, %1097 : vector<8x1xf32>
    %1099 = vector.broadcast %1098 : vector<8x1xf32> to vector<8x32xf32>
    %1100 = arith.subf %1088, %1099 : vector<8x32xf32>
    %1101 = arith.mulf %1100, %1100 : vector<8x32xf32>
    %cst_481 = arith.constant dense<0.000000e+00> : vector<8xf32>
    %1102 = vector.multi_reduction <add>, %1101, %cst_481 [1] : vector<8x32xf32> to vector<8xf32>
    %1103 = vector.shape_cast %1102 : vector<8xf32> to vector<8x1xf32>
    %cst_482 = arith.constant 3.125000e-02 : f32
    %1104 = vector.broadcast %cst_482 : f32 to vector<8x1xf32>
    %1105 = arith.mulf %1103, %1104 : vector<8x1xf32>
    %cst_483 = arith.constant 9.99999974E-6 : f32
    %1106 = vector.broadcast %cst_483 : f32 to vector<8x1xf32>
    %1107 = arith.addf %1105, %1106 : vector<8x1xf32>
    %1108 = math.rsqrt %1107 : vector<8x1xf32>
    %1109 = vector.broadcast %1108 : vector<8x1xf32> to vector<8x32xf32>
    %1110 = arith.mulf %1100, %1109 : vector<8x32xf32>
    %c0_484 = arith.constant 0 : index
    %c0_485 = arith.constant 0 : index
    %1111 = vector.load %arg14[%c0_484, %c0_485] : memref<1x32xf32, #tpu.memory_space<vmem>>, vector<1x32xf32>
    %1112 = vector.broadcast %1111 : vector<1x32xf32> to vector<8x32xf32>
    %1113 = arith.mulf %1110, %1112 : vector<8x32xf32>
    %c0_486 = arith.constant 0 : index
    %c0_487 = arith.constant 0 : index
    %1114 = vector.load %arg15[%c0_486, %c0_487] : memref<1x32xf32, #tpu.memory_space<vmem>>, vector<1x32xf32>
    %1115 = vector.broadcast %1114 : vector<1x32xf32> to vector<8x32xf32>
    %1116 = arith.addf %1113, %1115 : vector<8x32xf32>
    %cst_488 = arith.constant 0.000000e+00 : f32
    %1117 = vector.shape_cast %5 : vector<8x1xi1> to vector<8x1xi1>
    %1118 = vector.broadcast %1117 : vector<8x1xi1> to vector<8x32xi1>
    %1119 = vector.broadcast %cst_488 : f32 to vector<8x32xf32>
    %1120 = arith.select %1118, %1116, %1119 : vector<8x32xi1>, vector<8x32xf32>
    %c7 = arith.constant 7 : index
    %c0_489 = arith.constant 0 : index
    %c0_490 = arith.constant 0 : index
    %1121 = vector.load %arg16[%c7, %c0_489, %c0_490] : memref<8x8x32xf32, #tpu.memory_space<vmem>>, vector<1x8x32xf32>
    %1122 = vector.shape_cast %1121 : vector<1x8x32xf32> to vector<8x32xf32>
    %1123 = vector.shape_cast %1120 : vector<8x32xf32> to vector<1x8x32xf32>
    tpu.vector_store %arg16[%c7, %c0_489, %c0_490], %1123 {strides = array<i32>} : memref<8x8x32xf32, #tpu.memory_space<vmem>>, vector<1x8x32xf32>,
    %c0_491 = arith.constant 0 : index
    %c0_492 = arith.constant 0 : index
    %1124 = vector.load %arg21[%c0_491, %c0_492] : memref<8x32xf32, #tpu.memory_space<vmem>>, vector<8x32xf32>
    %c0_493 = arith.constant 0 : index
    %c0_494 = arith.constant 0 : index
    %1125 = vector.load %arg17[%c0_493, %c0_494] : memref<8x32xf32, #tpu.memory_space<vmem>>, vector<8x32xf32>
    tpu.vector_store %arg17[%c0_493, %c0_494], %1124 {strides = array<i32>} : memref<8x32xf32, #tpu.memory_space<vmem>>, vector<8x32xf32>,
    %c0_495 = arith.constant 0 : index
    %c0_496 = arith.constant 0 : index
    %1126 = vector.load %arg23[%c0_495, %c0_496] : memref<8x32xf32, #tpu.memory_space<vmem>>, vector<8x32xf32>
    %c0_497 = arith.constant 0 : index
    %c0_498 = arith.constant 0 : index
    %1127 = vector.load %arg19[%c0_497, %c0_498] : memref<8x32xf32, #tpu.memory_space<vmem>>, vector<8x32xf32>
    tpu.vector_store %arg19[%c0_497, %c0_498], %1126 {strides = array<i32>} : memref<8x32xf32, #tpu.memory_space<vmem>>, vector<8x32xf32>,
    %c0_499 = arith.constant 0 : index
    %c0_500 = arith.constant 0 : index
    %1128 = vector.load %arg22[%c0_499, %c0_500] : memref<8x32xf32, #tpu.memory_space<vmem>>, vector<8x32xf32>
    %c0_501 = arith.constant 0 : index
    %c0_502 = arith.constant 0 : index
    %1129 = vector.load %arg18[%c0_501, %c0_502] : memref<8x32xf32, #tpu.memory_space<vmem>>, vector<8x32xf32>
    tpu.vector_store %arg18[%c0_501, %c0_502], %1128 {strides = array<i32>} : memref<8x32xf32, #tpu.memory_space<vmem>>, vector<8x32xf32>,
    %c0_503 = arith.constant 0 : index
    %c0_504 = arith.constant 0 : index
    %1130 = vector.load %arg24[%c0_503, %c0_504] : memref<8x32xf32, #tpu.memory_space<vmem>>, vector<8x32xf32>
    %c0_505 = arith.constant 0 : index
    %c0_506 = arith.constant 0 : index
    %1131 = vector.load %arg20[%c0_505, %c0_506] : memref<8x32xf32, #tpu.memory_space<vmem>>, vector<8x32xf32>
    tpu.vector_store %arg20[%c0_505, %c0_506], %1130 {strides = array<i32>} : memref<8x32xf32, #tpu.memory_space<vmem>>, vector<8x32xf32>,
    return
  }
  func.func @transform_0(%arg0: i32) -> (i32, i32) {
    %c0_i32 = arith.constant 0 : i32
    %c0_i32_0 = arith.constant 0 : i32
    return %arg0, %c0_i32 : i32, i32
  }
  func.func @transform_1(%arg0: i32) -> (i32, i32) {
    %c0_i32 = arith.constant 0 : i32
    %c0_i32_0 = arith.constant 0 : i32
    %c0_i32_1 = arith.constant 0 : i32
    return %c0_i32, %c0_i32_0 : i32, i32
  }
  func.func @transform_2(%arg0: i32) -> (i32, i32) {
    %c0_i32 = arith.constant 0 : i32
    %c0_i32_0 = arith.constant 0 : i32
    %c0_i32_1 = arith.constant 0 : i32
    return %c0_i32, %c0_i32_0 : i32, i32
  }
  func.func @transform_3(%arg0: i32) -> (i32, i32) {
    %c0_i32 = arith.constant 0 : i32
    %c0_i32_0 = arith.constant 0 : i32
    %c0_i32_1 = arith.constant 0 : i32
    return %c0_i32, %c0_i32_0 : i32, i32
  }
  func.func @transform_4(%arg0: i32) -> (i32, i32) {
    %c0_i32 = arith.constant 0 : i32
    %c0_i32_0 = arith.constant 0 : i32
    %c0_i32_1 = arith.constant 0 : i32
    return %c0_i32, %c0_i32_0 : i32, i32
  }
  func.func @transform_5(%arg0: i32) -> (i32, i32) {
    %c0_i32 = arith.constant 0 : i32
    %c0_i32_0 = arith.constant 0 : i32
    %c0_i32_1 = arith.constant 0 : i32
    return %c0_i32, %c0_i32_0 : i32, i32
  }
  func.func @transform_6(%arg0: i32) -> (i32, i32) {
    %c0_i32 = arith.constant 0 : i32
    %c0_i32_0 = arith.constant 0 : i32
    %c0_i32_1 = arith.constant 0 : i32
    return %c0_i32, %c0_i32_0 : i32, i32
  }
  func.func @transform_7(%arg0: i32) -> (i32, i32) {
    %c0_i32 = arith.constant 0 : i32
    %c0_i32_0 = arith.constant 0 : i32
    %c0_i32_1 = arith.constant 0 : i32
    return %c0_i32, %c0_i32_0 : i32, i32
  }
  func.func @transform_8(%arg0: i32) -> (i32, i32) {
    %c0_i32 = arith.constant 0 : i32
    %c0_i32_0 = arith.constant 0 : i32
    %c0_i32_1 = arith.constant 0 : i32
    return %c0_i32, %c0_i32_0 : i32, i32
  }
  func.func @transform_9(%arg0: i32) -> (i32, i32) {
    %c0_i32 = arith.constant 0 : i32
    %c0_i32_0 = arith.constant 0 : i32
    %c0_i32_1 = arith.constant 0 : i32
    return %c0_i32, %c0_i32_0 : i32, i32
  }
  func.func @transform_10(%arg0: i32) -> (i32, i32) {
    %c0_i32 = arith.constant 0 : i32
    %c0_i32_0 = arith.constant 0 : i32
    %c0_i32_1 = arith.constant 0 : i32
    return %c0_i32, %c0_i32_0 : i32, i32
  }
  func.func @transform_11(%arg0: i32) -> (i32, i32) {
    %c0_i32 = arith.constant 0 : i32
    %c0_i32_0 = arith.constant 0 : i32
    %c0_i32_1 = arith.constant 0 : i32
    return %c0_i32, %c0_i32_0 : i32, i32
  }
  func.func @transform_12(%arg0: i32) -> (i32, i32) {
    %c0_i32 = arith.constant 0 : i32
    %c0_i32_0 = arith.constant 0 : i32
    %c0_i32_1 = arith.constant 0 : i32
    return %c0_i32, %c0_i32_0 : i32, i32
  }
  func.func @transform_13(%arg0: i32) -> (i32, i32) {
    %c0_i32 = arith.constant 0 : i32
    %c0_i32_0 = arith.constant 0 : i32
    %c0_i32_1 = arith.constant 0 : i32
    return %c0_i32, %c0_i32_0 : i32, i32
  }
  func.func @transform_14(%arg0: i32) -> (i32, i32) {
    %c0_i32 = arith.constant 0 : i32
    %c0_i32_0 = arith.constant 0 : i32
    %c0_i32_1 = arith.constant 0 : i32
    return %c0_i32, %c0_i32_0 : i32, i32
  }
  func.func @transform_15(%arg0: i32) -> (i32, i32, i32) {
    %c0_i32 = arith.constant 0 : i32
    %c0_i32_0 = arith.constant 0 : i32
    %c0_i32_1 = arith.constant 0 : i32
    return %arg0, %c0_i32, %c0_i32_0 : i32, i32, i32
  }
  func.func @transform_16(%arg0: i32) -> (i32, i32) {
    %c0_i32 = arith.constant 0 : i32
    %c0_i32_0 = arith.constant 0 : i32
    %c0_i32_1 = arith.constant 0 : i32
    return %c0_i32, %c0_i32_0 : i32, i32
  }
  func.func @transform_17(%arg0: i32) -> (i32, i32) {
    %c0_i32 = arith.constant 0 : i32
    %c0_i32_0 = arith.constant 0 : i32
    %c0_i32_1 = arith.constant 0 : i32
    return %c0_i32, %c0_i32_0 : i32, i32
  }
  func.func @transform_18(%arg0: i32) -> (i32, i32) {
    %c0_i32 = arith.constant 0 : i32
    %c0_i32_0 = arith.constant 0 : i32
    %c0_i32_1 = arith.constant 0 : i32
    return %c0_i32, %c0_i32_0 : i32, i32
  }
  func.func @transform_19(%arg0: i32) -> (i32, i32) {
    %c0_i32 = arith.constant 0 : i32
    %c0_i32_0 = arith.constant 0 : i32
    %c0_i32_1 = arith.constant 0 : i32
    return %c0_i32, %c0_i32_0 : i32, i32
  }
}

</mosaic_0001>

<llo_original>
// kernel: tpu_custom_call.1
$region0: #{tpu_custom_call.1}
  #allocation0 [shape = 'u32[]', space=smem, size = 0x4, offset = 0x4, fixed_abs, tag = 'smem constant byte address 0x4 - core index']
  #allocation1 [shape = 'u32[144,128]{1,0:T(1,128)}', space=vmem, size = 0x12000, scoped, tag = 'internal scratch']
  #allocation2 [shape = 'f32[8,32]{1,0:T(8,128)}', space=vmem, size = 0x1000, scoped, tag = 'scratch operand']
  #allocation3 [shape = 'f32[8,32]{1,0:T(8,128)}', space=vmem, size = 0x1000, scoped, tag = 'scratch operand']
  #allocation4 [shape = 'f32[8,32]{1,0:T(8,128)}', space=vmem, size = 0x1000, scoped, tag = 'scratch operand']
  #allocation5 [shape = 'f32[8,32]{1,0:T(8,128)}', space=vmem, size = 0x1000, scoped, tag = 'scratch operand']
  #allocation6 [shape = 'f32[64,32]{1,0:T(8,128)}', space=vmem, size = 0x8000, scoped, tag = 'scratch operand']
  #allocation7 [shape = 'f32[64,128]{1,0:T(8,128)}', space=vmem, size = 0x8000, scoped, tag = 'scratch operand']
  %s0 = inlined_call_operand.vmem [shape: f32[64,8], index: 0, kind: input, shape index: {}]
  %s1 = inlined_call_operand.vmem [shape: f32[8,128], index: 1, kind: input, shape index: {}]
  %s2 = inlined_call_operand.vmem [shape: f32[32,128], index: 2, kind: input, shape index: {}]
  %s3 = inlined_call_operand.hbm [shape: f32[1,128], index: 3, kind: input, shape index: {}]
  %s4 = inlined_call_operand.hbm [shape: f32[8,32], index: 4, kind: input, shape index: {}]
  %s5 = inlined_call_operand.vmem [shape: f32[8,32], index: 5, kind: input, shape index: {}]
  %s6 = inlined_call_operand.hbm [shape: f32[1,32], index: 6, kind: input, shape index: {}]
  %s7 = inlined_call_operand.hbm [shape: f32[1,32], index: 7, kind: input, shape index: {}]
  %s8 = inlined_call_operand.vmem [shape: f32[32,128], index: 8, kind: input, shape index: {}]
  %s9 = inlined_call_operand.hbm [shape: f32[32,128], index: 9, kind: input, shape index: {}]
  %s10 = inlined_call_operand.vmem [shape: f32[1,128], index: 10, kind: input, shape index: {}]
  %s11 = inlined_call_operand.vmem [shape: f32[8,32], index: 11, kind: input, shape index: {}]
  %s12 = inlined_call_operand.hbm [shape: f32[8,32], index: 12, kind: input, shape index: {}]
  %s13 = inlined_call_operand.vmem [shape: f32[1,32], index: 13, kind: input, shape index: {}]
  %s14 = inlined_call_operand.vmem [shape: f32[1,32], index: 14, kind: input, shape index: {}]
  %s15 = inlined_call_operand.hbm [shape: f32[8,8,32], index: 15, kind: output, shape index: {0}]
  %s16 = inlined_call_operand.hbm [shape: f32[8,32], index: 16, kind: output, shape index: {1}]
  %s17 = inlined_call_operand.hbm [shape: f32[8,32], index: 17, kind: output, shape index: {2}]
  %s18 = inlined_call_operand.hbm [shape: f32[8,32], index: 18, kind: output, shape index: {3}]
  %s19 = inlined_call_operand.hbm [shape: f32[8,32], index: 19, kind: output, shape index: {4}]
  %20 = xla_tuple %s15, %s16, %s17, %s18, %s19
  %s21 = sld [smem:[#allocation0]]
  $region130: #{tpu_custom_call.1} parent=0
    _
  %s23 = ssub.s32 1, %s21
  %s24 = scalar_select 0, %s23, %s21
  $region1: #{tpu_custom_call.1} parent=0
    #allocation8 [shape = 'u8[512]{0}', space=vmem, size = 0x400, scoped, tag = 'input window, operand 3, single buffered']
    #allocation9 [shape = 's32[1]{0}', space=sflag, size = 0x4, scoped, tag = 'scoped memory for tpu_custom_call.1']
    #allocation10 [shape = 's32[1]{0}', space=sflag, size = 0x4, scoped, tag = 'scoped memory for tpu_custom_call.1']
    #allocation11 [shape = 'u8[4096]{0}', space=vmem, size = 0x1000, scoped, tag = 'input window, operand 4, single buffered']
    #allocation12 [shape = 's32[1]{0}', space=sflag, size = 0x4, scoped, tag = 'scoped memory for tpu_custom_call.1']
    #allocation13 [shape = 'u8[512]{0}', space=vmem, size = 0x400, scoped, tag = 'input window, operand 6, single buffered']
    #allocation14 [shape = 'u8[512]{0}', space=vmem, size = 0x400, scoped, tag = 'input window, operand 7, single buffered']
    #allocation15 [shape = 's32[1]{0}', space=sflag, size = 0x4, scoped, tag = 'scoped memory for tpu_custom_call.1']
    #allocation16 [shape = 'u8[16384]{0}', space=vmem, size = 0x4000, scoped, tag = 'input window, operand 9, single buffered']
    #allocation17 [shape = 'u8[4096]{0}', space=vmem, size = 0x1000, scoped, tag = 'input window, operand 12, single buffered']
    #allocation18 [shape = 's32[1]{0}', space=sflag, size = 0x4, scoped, tag = 'scoped memory for tpu_custom_call.1']
    #allocation19 [shape = 'u8[32768]{0}', space=vmem, size = 0x8000, scoped, tag = 'output window, operand 0, single buffered']
    #allocation20 [shape = 'u8[4096]{0}', space=vmem, size = 0x1000, scoped, tag = 'output window, operand 1, single buffered']
    #allocation21 [shape = 's32[1]{0}', space=sflag, size = 0x4, scoped, tag = 'scoped memory for tpu_custom_call.1']
    #allocation22 [shape = 'u8[4096]{0}', space=vmem, size = 0x1000, scoped, tag = 'output window, operand 2, single buffered']
    #allocation23 [shape = 'u8[4096]{0}', space=vmem, size = 0x1000, scoped, tag = 'output window, operand 3, single buffered']
    #allocation24 [shape = 's32[1]{0}', space=sflag, size = 0x4, scoped, tag = 'scoped memory for tpu_custom_call.1']
    #allocation25 [shape = 'u8[4096]{0}', space=vmem, size = 0x1000, scoped, tag = 'output window, operand 4, single buffered']
    %25 = vsyncpa [#allocation9], 0
    %26 = vsyncpa [#allocation12], 0
    %27 = vsyncpa [#allocation15], 0
    %28 = vsyncpa [#allocation18], 0
    %29 = vsyncpa [#allocation10], 0
    %30 = vsyncpa [#allocation21], 0
    %31 = vsyncpa [#allocation24], 0
    // Predicated region
    $region2: #{tpu_custom_call.1} parent=1 // pred_check
      _
    $region3: #{tpu_custom_call.1} parent=1 // pred_check_branch
      %33 = sbr.rel (0) target = $region5
    $region4: #{tpu_custom_call.1} parent=1 // pred_region
      _
    $region5: #{tpu_custom_call.1} parent=1 // pred_fallthru
      _
    // Predicated region
    $region6: #{tpu_custom_call.1} parent=1 // pred_check
      _
    $region7: #{tpu_custom_call.1} parent=1 // pred_check_branch
      %35 = sbr.rel (0) target = $region9
    $region8: #{tpu_custom_call.1} parent=1 // pred_region
      _
    $region9: #{tpu_custom_call.1} parent=1 // pred_fallthru
      _
    // Predicated region
    $region10: #{tpu_custom_call.1} parent=1 // pred_check
      _
    $region11: #{tpu_custom_call.1} parent=1 // pred_check_branch
      %37 = sbr.rel (0) target = $region13
    $region12: #{tpu_custom_call.1} parent=1 // pred_region
      _
    $region13: #{tpu_custom_call.1} parent=1 // pred_fallthru
      _
    // Predicated region
    $region14: #{tpu_custom_call.1} parent=1 // pred_check
      _
    $region15: #{tpu_custom_call.1} parent=1 // pred_check_branch
      %39 = sbr.rel (0) target = $region17
    $region16: #{tpu_custom_call.1} parent=1 // pred_region
      %s41 = ssub.s32 16, 16
      %42 = vsyncadd [#allocation9], %s41
      %s44 = sshll.u32 [#allocation8], 4
      %s45 = int_to_ptr.vmem [resolvable:$true] %s44
      %47 = dma.hbm_to_vmem [thread:$0]  %s3, 16, %s45, [#allocation9]
    $region17: #{tpu_custom_call.1} parent=1 // pred_fallthru
      _
    // Predicated region
    $region18: #{tpu_custom_call.1} parent=1 // pred_check
      _
    $region19: #{tpu_custom_call.1} parent=1 // pred_check_branch
      %49 = sbr.rel (0) target = $region21
    $region20: #{tpu_custom_call.1} parent=1 // pred_region
      %s51 = ssub.s32 128, 128
      %52 = vsyncadd [#allocation12], %s51
      %s54 = sshll.u32 [#allocation11], 4
      %s55 = int_to_ptr.vmem [resolvable:$true] %s54
      %57 = dma.hbm_to_vmem [thread:$0]  %s4, 128, %s55, [#allocation12]
    $region21: #{tpu_custom_call.1} parent=1 // pred_fallthru
      _
    // Predicated region
    $region22: #{tpu_custom_call.1} parent=1 // pred_check
      _
    $region23: #{tpu_custom_call.1} parent=1 // pred_check_branch
      %59 = sbr.rel (0) target = $region25
    $region24: #{tpu_custom_call.1} parent=1 // pred_region
      _
    $region25: #{tpu_custom_call.1} parent=1 // pred_fallthru
      _
    // Predicated region
    $region26: #{tpu_custom_call.1} parent=1 // pred_check
      _
    $region27: #{tpu_custom_call.1} parent=1 // pred_check_branch
      %61 = sbr.rel (0) target = $region29
    $region28: #{tpu_custom_call.1} parent=1 // pred_region
      %s63 = ssub.s32 16, 16
      %64 = vsyncadd [#allocation12], %s63
      %s66 = sshll.u32 [#allocation13], 4
      %s67 = int_to_ptr.vmem [resolvable:$true] %s66
      %69 = dma.hbm_to_vmem [thread:$0]  %s6, 16, %s67, [#allocation12]
    $region29: #{tpu_custom_call.1} parent=1 // pred_fallthru
      _
    // Predicated region
    $region30: #{tpu_custom_call.1} parent=1 // pred_check
      _
    $region31: #{tpu_custom_call.1} parent=1 // pred_check_branch
      %71 = sbr.rel (0) target = $region33
    $region32: #{tpu_custom_call.1} parent=1 // pred_region
      %s73 = ssub.s32 16, 16
      %74 = vsyncadd [#allocation15], %s73
      %s76 = sshll.u32 [#allocation14], 4
      %s77 = int_to_ptr.vmem [resolvable:$true] %s76
      %79 = dma.hbm_to_vmem [thread:$0]  %s7, 16, %s77, [#allocation15]
    $region33: #{tpu_custom_call.1} parent=1 // pred_fallthru
      _
    // Predicated region
    $region34: #{tpu_custom_call.1} parent=1 // pred_check
      _
    $region35: #{tpu_custom_call.1} parent=1 // pred_check_branch
      %81 = sbr.rel (0) target = $region37
    $region36: #{tpu_custom_call.1} parent=1 // pred_region
      _
    $region37: #{tpu_custom_call.1} parent=1 // pred_fallthru
      _
    // Predicated region
    $region38: #{tpu_custom_call.1} parent=1 // pred_check
      _
    $region39: #{tpu_custom_call.1} parent=1 // pred_check_branch
      %83 = sbr.rel (0) target = $region41
    $region40: #{tpu_custom_call.1} parent=1 // pred_region
      %s85 = ssub.s32 512, 512
      %86 = vsyncadd [#allocation15], %s85
      %s87 = sshll.u32 [#allocation16], 4
      %s88 = int_to_ptr.vmem [resolvable:$true] %s87
      %93 = dma.hbm_to_vmem [thread:$0]  %s9, 512, %s88, [#allocation15], 128, 128, 8
    $region41: #{tpu_custom_call.1} parent=1 // pred_fallthru
      _
    // Predicated region
    $region42: #{tpu_custom_call.1} parent=1 // pred_check
      _
    $region43: #{tpu_custom_call.1} parent=1 // pred_check_branch
      %95 = sbr.rel (0) target = $region45
    $region44: #{tpu_custom_call.1} parent=1 // pred_region
      _
    $region45: #{tpu_custom_call.1} parent=1 // pred_fallthru
      _
    // Predicated region
    $region46: #{tpu_custom_call.1} parent=1 // pred_check
      _
    $region47: #{tpu_custom_call.1} parent=1 // pred_check_branch
      %97 = sbr.rel (0) target = $region49
    $region48: #{tpu_custom_call.1} parent=1 // pred_region
      _
    $region49: #{tpu_custom_call.1} parent=1 // pred_fallthru
      _
    // Predicated region
    $region50: #{tpu_custom_call.1} parent=1 // pred_check
      _
    $region51: #{tpu_custom_call.1} parent=1 // pred_check_branch
      %99 = sbr.rel (0) target = $region53
    $region52: #{tpu_custom_call.1} parent=1 // pred_region
      %s101 = ssub.s32 128, 128
      %102 = vsyncadd [#allocation18], %s101
      %s104 = sshll.u32 [#allocation17], 4
      %s105 = int_to_ptr.vmem [resolvable:$true] %s104
      %107 = dma.hbm_to_vmem [thread:$0]  %s12, 128, %s105, [#allocation18]
    $region53: #{tpu_custom_call.1} parent=1 // pred_fallthru
      _
    // Predicated region
    $region54: #{tpu_custom_call.1} parent=1 // pred_check
      _
    $region55: #{tpu_custom_call.1} parent=1 // pred_check_branch
      %109 = sbr.rel (0) target = $region57
    $region56: #{tpu_custom_call.1} parent=1 // pred_region
      _
    $region57: #{tpu_custom_call.1} parent=1 // pred_fallthru
      _
    // Predicated region
    $region58: #{tpu_custom_call.1} parent=1 // pred_check
      _
    $region59: #{tpu_custom_call.1} parent=1 // pred_check_branch
      %111 = sbr.rel (0) target = $region61
    $region60: #{tpu_custom_call.1} parent=1 // pred_region
      _
    $region61: #{tpu_custom_call.1} parent=1 // pred_fallthru
      _
    // Predicated region
    $region62: #{tpu_custom_call.1} parent=1 // pred_check
      _
    $region63: #{tpu_custom_call.1} parent=1 // pred_check_branch
      %113 = sbr.rel (0) target = $region65
    $region64: #{tpu_custom_call.1} parent=1 // pred_region
      %114 = dma.done [#allocation9], 16
    $region65: #{tpu_custom_call.1} parent=1 // pred_fallthru
      _
    // Predicated region
    $region66: #{tpu_custom_call.1} parent=1 // pred_check
      _
    $region67: #{tpu_custom_call.1} parent=1 // pred_check_branch
      %116 = sbr.rel (0) target = $region69
    $region68: #{tpu_custom_call.1} parent=1 // pred_region
      %117 = dma.done [#allocation12], 128
    $region69: #{tpu_custom_call.1} parent=1 // pred_fallthru
      _
    // Predicated region
    $region70: #{tpu_custom_call.1} parent=1 // pred_check
      _
    $region71: #{tpu_custom_call.1} parent=1 // pred_check_branch
      %119 = sbr.rel (0) target = $region73
    $region72: #{tpu_custom_call.1} parent=1 // pred_region
      %120 = dma.done [#allocation12], 16
    $region73: #{tpu_custom_call.1} parent=1 // pred_fallthru
      _
    // Predicated region
    $region74: #{tpu_custom_call.1} parent=1 // pred_check
      _
    $region75: #{tpu_custom_call.1} parent=1 // pred_check_branch
      %122 = sbr.rel (0) target = $region77
    $region76: #{tpu_custom_call.1} parent=1 // pred_region
      %123 = dma.done [#allocation15], 16
    $region77: #{tpu_custom_call.1} parent=1 // pred_fallthru
      _
    // Predicated region
    $region78: #{tpu_custom_call.1} parent=1 // pred_check
      _
    $region79: #{tpu_custom_call.1} parent=1 // pred_check_branch
      %125 = sbr.rel (0) target = $region81
    $region80: #{tpu_custom_call.1} parent=1 // pred_region
      %126 = dma.done [#allocation15], 512
    $region81: #{tpu_custom_call.1} parent=1 // pred_fallthru
      _
    // Predicated region
    $region82: #{tpu_custom_call.1} parent=1 // pred_check
      _
    $region83: #{tpu_custom_call.1} parent=1 // pred_check_branch
      %128 = sbr.rel (0) target = $region85
    $region84: #{tpu_custom_call.1} parent=1 // pred_region
      %129 = dma.done [#allocation18], 128
    $region85: #{tpu_custom_call.1} parent=1 // pred_fallthru
      _
    %p130 = scmp.eq.s32.totalorder 0, 0
    // Predicated region
    $region86: #{tpu_custom_call.1} parent=1 // pred_check
      %p131 = pneg %p130
    $region87: #{tpu_custom_call.1} parent=1 // pred_check_branch
      %133 = sbr.rel (%p131) target = $region89
    $region88: #{tpu_custom_call.1} parent=1 // pred_region
      %v134 = vld [vmem:[#allocation11] sm:$0xff]
      %vm135 = vcmask 261120
      %136 = vst.msk [vmem:[#allocation2] sm:$0xff] %vm135, %v134
      %v137 = vld [vmem:[%s5] sm:$0xff]
      %138 = vst.msk [vmem:[#allocation4] sm:$0xff] %vm135, %v137
      %v139 = vld [vmem:[%s11] sm:$0xff]
      %140 = vst.msk [vmem:[#allocation3] sm:$0xff] %vm135, %v139
      %v141 = vld [vmem:[#allocation17] sm:$0xff]
      %142 = vst.msk [vmem:[#allocation5] sm:$0xff] %vm135, %v141
    $region89: #{tpu_custom_call.1} parent=1 // pred_fallthru
      _
    %v143 = vlaneseq
    %v144 = vshrl.u32 %v143, 7
    %vm145 = vcmp.lt.s32.totalorder %v144, 2
    %v146 = vld [vmem:[%s0] sm:$0xff]
    %v147 = vld [vmem:[%s0 + $0x8] sm:$0xff]
    %v148 = vld [vmem:[%s0 + $0x10] sm:$0xff]
    %v149 = vld [vmem:[%s0 + $0x18] sm:$0xff]
    %v150 = vld [vmem:[%s0 + $0x20] sm:$0xff]
    %v151 = vld [vmem:[%s0 + $0x28] sm:$0xff]
    %v152 = vld [vmem:[%s0 + $0x30] sm:$0xff]
    %v153 = vld [vmem:[%s0 + $0x38] sm:$0xff]
    %v154 = vld [vmem:[%s1] sm:$0xff]
    %v155 = vld [vmem:[#allocation8] sm:$0x1]
    %v157 = vlaneseq
    %v158 = vshrl.u32 %v157, 7
    %v159 = vsub.s32 0, %v158
    %v160 = vrot.slane %v155, %v159
    %vm162 = vcmask 64512
    %v164 = vsel %vm162, %v146, 0
    %v167 = vsel %vm162, %v147, 0
    %v170 = vsel %vm162, %v148, 0
    %v173 = vsel %vm162, %v149, 0
    %v176 = vsel %vm162, %v150, 0
    %v179 = vsel %vm162, %v151, 0
    %v182 = vsel %vm162, %v152, 0
    %v185 = vsel %vm162, %v153, 0
    %187 = vmatprep.subr.mxu0 0.0
    %188 = vmatpush1.msra.mxu0 0.0
    %189 = vmatprep.subr.mxu0 0.0
    %190 = vmatpush1.msra.mxu0 0.0
    %191 = vmatprep.subr.mxu0 0.0
    %192 = vmatpush1.msra.mxu0 0.0
    %193 = vmatprep.subr.mxu0 0.0
    %194 = vmatpush1.msra.mxu0 0.0
    %195 = vmatprep.subr.mxu0 0.0
    %196 = vmatpush1.msra.mxu0 0.0
    %197 = vmatprep.subr.mxu0 0.0
    %198 = vmatpush1.msra.mxu0 0.0
    %199 = vmatprep.subr.mxu0 0.0
    %200 = vmatpush1.msra.mxu0 0.0
    %201 = vmatprep.subr.mxu0 0.0
    %202 = vmatpush1.msra.mxu0 0.0
    %203 = vmatprep.subr.mxu0 0.0
    %204 = vmatpush1.msra.mxu0 0.0
    %205 = vmatprep.subr.mxu0 0.0
    %206 = vmatpush1.msra.mxu0 0.0
    %207 = vmatprep.subr.mxu0 0.0
    %208 = vmatpush1.msra.mxu0 0.0
    %209 = vmatprep.subr.mxu0 0.0
    %210 = vmatpush1.msra.mxu0 0.0
    %211 = vmatprep.subr.mxu0 0.0
    %212 = vmatpush1.msra.mxu0 0.0
    %213 = vmatprep.subr.mxu0 0.0
    %214 = vmatpush1.msra.mxu0 0.0
    %215 = vmatprep.subr.mxu0 0.0
    %216 = vmatpush1.msra.mxu0 0.0
    %217 = vmatprep.subr.mxu0 0.0
    %218 = vmatpush1.msra.mxu0 %v154
    %219 = vmatprep.subr.mxu0 0.0
    %220 = vmatpush2.msra.mxu0 0.0
    %221 = vmatprep.subr.mxu0 0.0
    %222 = vmatpush2.msra.mxu0 0.0
    %223 = vmatprep.subr.mxu0 0.0
    %224 = vmatpush2.msra.mxu0 0.0
    %225 = vmatprep.subr.mxu0 0.0
    %226 = vmatpush2.msra.mxu0 0.0
    %227 = vmatprep.subr.mxu0 0.0
    %228 = vmatpush2.msra.mxu0 0.0
    %229 = vmatprep.subr.mxu0 0.0
    %230 = vmatpush2.msra.mxu0 0.0
    %231 = vmatprep.subr.mxu0 0.0
    %232 = vmatpush2.msra.mxu0 0.0
    %233 = vmatprep.subr.mxu0 0.0
    %234 = vmatpush2.msra.mxu0 0.0
    %235 = vmatprep.subr.mxu0 0.0
    %236 = vmatpush2.msra.mxu0 0.0
    %237 = vmatprep.subr.mxu0 0.0
    %238 = vmatpush2.msra.mxu0 0.0
    %239 = vmatprep.subr.mxu0 0.0
    %240 = vmatpush2.msra.mxu0 0.0
    %241 = vmatprep.subr.mxu0 0.0
    %242 = vmatpush2.msra.mxu0 0.0
    %243 = vmatprep.subr.mxu0 0.0
    %244 = vmatpush2.msra.mxu0 0.0
    %245 = vmatprep.subr.mxu0 0.0
    %246 = vmatpush2.msra.mxu0 0.0
    %247 = vmatprep.subr.mxu0 0.0
    %248 = vmatpush2.msra.mxu0 0.0
    %249 = vmatprep.subr.mxu0 0.0
    %250 = vmatpush2.msra.mxu0 0.0
    %251 = vmatprep.mubr.f32.mxu0 0.0
    %252 = vmatmul.mubr.f32.gmra.mxu0 %v164
    %v253 = vpop.f32.mrf.mxu0
    %v254 = vadd.f32 %v160, %v253
    %v255 = vpop.f32.mrf.mxu0
    %256 = vmatprep.mubr.f32.mxu0 0.0
    %257 = vmatmul.mubr.f32.gmra.mxu0 %v167
    %v258 = vpop.f32.mrf.mxu0
    %v259 = vadd.f32 %v160, %v258
    %v260 = vpop.f32.mrf.mxu0
    %261 = vmatprep.mubr.f32.mxu0 0.0
    %262 = vmatmul.mubr.f32.gmra.mxu0 %v170
    %v263 = vpop.f32.mrf.mxu0
    %v264 = vadd.f32 %v160, %v263
    %v265 = vpop.f32.mrf.mxu0
    %266 = vmatprep.mubr.f32.mxu0 0.0
    %267 = vmatmul.mubr.f32.gmra.mxu0 %v173
    %v268 = vpop.f32.mrf.mxu0
    %v269 = vadd.f32 %v160, %v268
    %v270 = vpop.f32.mrf.mxu0
    %271 = vmatprep.mubr.f32.mxu0 0.0
    %272 = vmatmul.mubr.f32.gmra.mxu0 %v176
    %v273 = vpop.f32.mrf.mxu0
    %v274 = vadd.f32 %v160, %v273
    %v275 = vpop.f32.mrf.mxu0
    %276 = vmatprep.mubr.f32.mxu0 0.0
    %277 = vmatmul.mubr.f32.gmra.mxu0 %v179
    %v278 = vpop.f32.mrf.mxu0
    %v279 = vadd.f32 %v160, %v278
    %v280 = vpop.f32.mrf.mxu0
    %281 = vmatprep.mubr.f32.mxu0 0.0
    %282 = vmatmul.mubr.f32.gmra.mxu0 %v182
    %v283 = vpop.f32.mrf.mxu0
    %v284 = vadd.f32 %v160, %v283
    %v285 = vpop.f32.mrf.mxu0
    %286 = vmatprep.mubr.f32.mxu0 0.0
    %287 = vmatmul.mubr.f32.gmra.mxu0 %v185
    %v288 = vpop.f32.mrf.mxu0
    %v289 = vadd.f32 %v160, %v288
    %v290 = vpop.f32.mrf.mxu0
    %291 = vdwg.mxu0
    %292 = vst [vmem:[#allocation7] sm:$0xff] %v254
    %293 = vst [vmem:[#allocation7 + $0x8] sm:$0xff] %v259
    %294 = vst [vmem:[#allocation7 + $0x10] sm:$0xff] %v264
    %295 = vst [vmem:[#allocation7 + $0x18] sm:$0xff] %v269
    %296 = vst [vmem:[#allocation7 + $0x20] sm:$0xff] %v274
    %297 = vst [vmem:[#allocation7 + $0x28] sm:$0xff] %v279
    %298 = vst [vmem:[#allocation7 + $0x30] sm:$0xff] %v284
    %299 = vst [vmem:[#allocation7 + $0x38] sm:$0xff] %v289
    %v300 = vld [vmem:[#allocation7] sm:$0xff]
    %v301 = vld [vmem:[#allocation2] sm:$0xff]
    %v302 = vld [vmem:[#allocation4] sm:$0xff]
    %v303 = vld [vmem:[%s2] sm:$0xff]
    %v304 = vld [vmem:[%s2 + $0x8] sm:$0xff]
    %v305 = vld [vmem:[%s2 + $0x10] sm:$0xff]
    %v306 = vld [vmem:[%s2 + $0x18] sm:$0xff]
    %vm307 = vcmask 261120
    %v309 = vsel %vm307, %v301, 0
    %311 = vmatprep.subr.mxu0 0.0
    %312 = vmatpush1.msra.mxu0 0.0
    %313 = vmatprep.subr.mxu0 0.0
    %314 = vmatpush1.msra.mxu0 0.0
    %315 = vmatprep.subr.mxu0 0.0
    %316 = vmatpush1.msra.mxu0 0.0
    %317 = vmatprep.subr.mxu0 0.0
    %318 = vmatpush1.msra.mxu0 0.0
    %319 = vmatprep.subr.mxu0 0.0
    %320 = vmatpush1.msra.mxu0 0.0
    %321 = vmatprep.subr.mxu0 0.0
    %322 = vmatpush1.msra.mxu0 0.0
    %323 = vmatprep.subr.mxu0 0.0
    %324 = vmatpush1.msra.mxu0 0.0
    %325 = vmatprep.subr.mxu0 0.0
    %326 = vmatpush1.msra.mxu0 0.0
    %327 = vmatprep.subr.mxu0 0.0
    %328 = vmatpush1.msra.mxu0 0.0
    %329 = vmatprep.subr.mxu0 0.0
    %330 = vmatpush1.msra.mxu0 0.0
    %331 = vmatprep.subr.mxu0 0.0
    %332 = vmatpush1.msra.mxu0 0.0
    %333 = vmatprep.subr.mxu0 0.0
    %334 = vmatpush1.msra.mxu0 0.0
    %335 = vmatprep.subr.mxu0 0.0
    %336 = vmatpush1.msra.mxu0 %v306
    %337 = vmatprep.subr.mxu0 0.0
    %338 = vmatpush1.msra.mxu0 %v305
    %339 = vmatprep.subr.mxu0 0.0
    %340 = vmatpush1.msra.mxu0 %v304
    %341 = vmatprep.subr.mxu0 0.0
    %342 = vmatpush1.msra.mxu0 %v303
    %343 = vmatprep.subr.mxu0 0.0
    %344 = vmatpush2.msra.mxu0 0.0
    %345 = vmatprep.subr.mxu0 0.0
    %346 = vmatpush2.msra.mxu0 0.0
    %347 = vmatprep.subr.mxu0 0.0
    %348 = vmatpush2.msra.mxu0 0.0
    %349 = vmatprep.subr.mxu0 0.0
    %350 = vmatpush2.msra.mxu0 0.0
    %351 = vmatprep.subr.mxu0 0.0
    %352 = vmatpush2.msra.mxu0 0.0
    %353 = vmatprep.subr.mxu0 0.0
    %354 = vmatpush2.msra.mxu0 0.0
    %355 = vmatprep.subr.mxu0 0.0
    %356 = vmatpush2.msra.mxu0 0.0
    %357 = vmatprep.subr.mxu0 0.0
    %358 = vmatpush2.msra.mxu0 0.0
    %359 = vmatprep.subr.mxu0 0.0
    %360 = vmatpush2.msra.mxu0 0.0
    %361 = vmatprep.subr.mxu0 0.0
    %362 = vmatpush2.msra.mxu0 0.0
    %363 = vmatprep.subr.mxu0 0.0
    %364 = vmatpush2.msra.mxu0 0.0
    %365 = vmatprep.subr.mxu0 0.0
    %366 = vmatpush2.msra.mxu0 0.0
    %367 = vmatprep.subr.mxu0 0.0
    %368 = vmatpush2.msra.mxu0 0.0
    %369 = vmatprep.subr.mxu0 0.0
    %370 = vmatpush2.msra.mxu0 0.0
    %371 = vmatprep.subr.mxu0 0.0
    %372 = vmatpush2.msra.mxu0 0.0
    %373 = vmatprep.subr.mxu0 0.0
    %374 = vmatpush2.msra.mxu0 0.0
    %375 = vmatprep.mubr.f32.mxu0 0.0
    %376 = vmatmul.mubr.f32.gmra.mxu0 %v309
    %v377 = vpop.f32.mrf.mxu0
    %v378 = vadd.f32 0.0, %v377
    %v379 = vpop.f32.mrf.mxu0
    %380 = vdwg.mxu0
    %v381 = vadd.f32 %v300, %v378
    %v382 = vxor.u32 %v381, 2147483648
    %v383 = vmul.f32 %v382, 1.442695
    %v384 = vpow.pop %v383
    %v385 = vadd.f32 %v384, 1.0
    %v386 = vrcp.pop %v385
    %v387 = vmul.f32 1.0, %v386
    %v388 = vtanh.pop %v381
    %390 = vrot.lane.b32.xlu0 %v302, 32
    %v391 = vpop.permute.xlu0 %390
    %v393 = vmul.f32 %v387, %v391
    %395 = vrot.lane.b32.xlu0 %v388, 64
    %v396 = vpop.permute.xlu0 %395
    %v398 = vmul.f32 %v387, %v396
    %400 = vrot.lane.b32.xlu0 %v398, 32
    %v401 = vpop.permute.xlu0 %400
    %v403 = vadd.f32 %v393, %v401
    %v404 = vtanh.pop %v403
    %406 = vrot.lane.b32.xlu0 %v404, 64
    %v407 = vpop.permute.xlu0 %406
    %v409 = vmul.f32 %v387, %v407
    %v410 = vsel %vm145, 1, 0
    %vm411 = vcmp.eq.s32.totalorder %v410, 1
    %v412 = vsel %vm411, %v409, 0.0
    %v413 = vsel %vm411, %v403, 0.0
    %415 = vrot.lane.b32.xlu0 %v412, 32
    %v416 = vpop.permute.xlu0 %415
    %418 = vst.msk [vmem:[#allocation2] sm:$0xff] %vm307, %v416
    %420 = vrot.lane.b32.xlu0 %v413, 96
    %v421 = vpop.permute.xlu0 %420
    %423 = vst.msk [vmem:[#allocation4] sm:$0xff] %vm307, %v421
    %v424 = vsel %vm307, %v416, 0.0
    %425 = vadd.xlane.f32.xlu0 %v424
    %v426 = vpop.xlane.xlu0 %425
    %v427 = vmul.f32 %v426, 0.03125
    %v428 = vsub.f32 %v412, %v427
    %v429 = vmul.f32 %v428, %v428
    %431 = vrot.lane.b32.xlu0 %v429, 32
    %v432 = vpop.permute.xlu0 %431
    %v434 = vsel %vm307, %v432, 0.0
    %435 = vadd.xlane.f32.xlu0 %v434
    %v436 = vpop.xlane.xlu0 %435
    %v437 = vmul.f32 %v436, 0.03125
    %v438 = vadd.f32 %v437, 1e-05
    %v439 = vrsqrt.pop %v438
    %v440 = vmul.f32 %v428, %v439
    %v441 = vld [vmem:[#allocation13] sm:$0x1]
    %v443 = vlaneseq
    %v444 = vshrl.u32 %v443, 7
    %v445 = vsub.s32 0, %v444
    %v446 = vrot.slane %v441, %v445
    %447 = vrot.lane.b32.xlu0 %v446, 96
    %v448 = vpop.permute.xlu0 %447
    %v450 = vmul.f32 %v440, %v448
    %v451 = vld [vmem:[#allocation14] sm:$0x1]
    %v453 = vlaneseq
    %v454 = vshrl.u32 %v453, 7
    %v455 = vsub.s32 0, %v454
    %v456 = vrot.slane %v451, %v455
    %457 = vrot.lane.b32.xlu0 %v456, 96
    %v458 = vpop.permute.xlu0 %457
    %v460 = vadd.f32 %v450, %v458
    %v461 = vsel %vm411, %v460, 0.0
    %463 = vrot.lane.b32.xlu0 %v461, 32
    %v464 = vpop.permute.xlu0 %463
    %466 = vst.msk [vmem:[#allocation6] sm:$0xff] %vm307, %v464
    %v467 = vld [vmem:[#allocation7 + $0x8] sm:$0xff]
    %v468 = vld [vmem:[#allocation2] sm:$0xff]
    %v469 = vld [vmem:[#allocation4] sm:$0xff]
    %v470 = vld [vmem:[%s2] sm:$0xff]
    %v471 = vld [vmem:[%s2 + $0x8] sm:$0xff]
    %v472 = vld [vmem:[%s2 + $0x10] sm:$0xff]
    %v473 = vld [vmem:[%s2 + $0x18] sm:$0xff]
    %v475 = vsel %vm307, %v468, 0
    %477 = vmatprep.subr.mxu0 0.0
    %478 = vmatpush1.msra.mxu0 0.0
    %479 = vmatprep.subr.mxu0 0.0
    %480 = vmatpush1.msra.mxu0 0.0
    %481 = vmatprep.subr.mxu0 0.0
    %482 = vmatpush1.msra.mxu0 0.0
    %483 = vmatprep.subr.mxu0 0.0
    %484 = vmatpush1.msra.mxu0 0.0
    %485 = vmatprep.subr.mxu0 0.0
    %486 = vmatpush1.msra.mxu0 0.0
    %487 = vmatprep.subr.mxu0 0.0
    %488 = vmatpush1.msra.mxu0 0.0
    %489 = vmatprep.subr.mxu0 0.0
    %490 = vmatpush1.msra.mxu0 0.0
    %491 = vmatprep.subr.mxu0 0.0
    %492 = vmatpush1.msra.mxu0 0.0
    %493 = vmatprep.subr.mxu0 0.0
    %494 = vmatpush1.msra.mxu0 0.0
    %495 = vmatprep.subr.mxu0 0.0
    %496 = vmatpush1.msra.mxu0 0.0
    %497 = vmatprep.subr.mxu0 0.0
    %498 = vmatpush1.msra.mxu0 0.0
    %499 = vmatprep.subr.mxu0 0.0
    %500 = vmatpush1.msra.mxu0 0.0
    %501 = vmatprep.subr.mxu0 0.0
    %502 = vmatpush1.msra.mxu0 %v473
    %503 = vmatprep.subr.mxu0 0.0
    %504 = vmatpush1.msra.mxu0 %v472
    %505 = vmatprep.subr.mxu0 0.0
    %506 = vmatpush1.msra.mxu0 %v471
    %507 = vmatprep.subr.mxu0 0.0
    %508 = vmatpush1.msra.mxu0 %v470
    %509 = vmatprep.subr.mxu0 0.0
    %510 = vmatpush2.msra.mxu0 0.0
    %511 = vmatprep.subr.mxu0 0.0
    %512 = vmatpush2.msra.mxu0 0.0
    %513 = vmatprep.subr.mxu0 0.0
    %514 = vmatpush2.msra.mxu0 0.0
    %515 = vmatprep.subr.mxu0 0.0
    %516 = vmatpush2.msra.mxu0 0.0
    %517 = vmatprep.subr.mxu0 0.0
    %518 = vmatpush2.msra.mxu0 0.0
    %519 = vmatprep.subr.mxu0 0.0
    %520 = vmatpush2.msra.mxu0 0.0
    %521 = vmatprep.subr.mxu0 0.0
    %522 = vmatpush2.msra.mxu0 0.0
    %523 = vmatprep.subr.mxu0 0.0
    %524 = vmatpush2.msra.mxu0 0.0
    %525 = vmatprep.subr.mxu0 0.0
    %526 = vmatpush2.msra.mxu0 0.0
    %527 = vmatprep.subr.mxu0 0.0
    %528 = vmatpush2.msra.mxu0 0.0
    %529 = vmatprep.subr.mxu0 0.0
    %530 = vmatpush2.msra.mxu0 0.0
    %531 = vmatprep.subr.mxu0 0.0
    %532 = vmatpush2.msra.mxu0 0.0
    %533 = vmatprep.subr.mxu0 0.0
    %534 = vmatpush2.msra.mxu0 0.0
    %535 = vmatprep.subr.mxu0 0.0
    %536 = vmatpush2.msra.mxu0 0.0
    %537 = vmatprep.subr.mxu0 0.0
    %538 = vmatpush2.msra.mxu0 0.0
    %539 = vmatprep.subr.mxu0 0.0
    %540 = vmatpush2.msra.mxu0 0.0
    %541 = vmatprep.mubr.f32.mxu0 0.0
    %542 = vmatmul.mubr.f32.gmra.mxu0 %v475
    %v543 = vpop.f32.mrf.mxu0
    %v544 = vadd.f32 0.0, %v543
    %v545 = vpop.f32.mrf.mxu0
    %546 = vdwg.mxu0
    %v547 = vadd.f32 %v467, %v544
    %v548 = vxor.u32 %v547, 2147483648
    %v549 = vmul.f32 %v548, 1.442695
    %v550 = vpow.pop %v549
    %v551 = vadd.f32 %v550, 1.0
    %v552 = vrcp.pop %v551
    %v553 = vmul.f32 1.0, %v552
    %v554 = vtanh.pop %v547
    %556 = vrot.lane.b32.xlu0 %v469, 32
    %v557 = vpop.permute.xlu0 %556
    %v559 = vmul.f32 %v553, %v557
    %561 = vrot.lane.b32.xlu0 %v554, 64
    %v562 = vpop.permute.xlu0 %561
    %v564 = vmul.f32 %v553, %v562
    %566 = vrot.lane.b32.xlu0 %v564, 32
    %v567 = vpop.permute.xlu0 %566
    %v569 = vadd.f32 %v559, %v567
    %v570 = vtanh.pop %v569
    %572 = vrot.lane.b32.xlu0 %v570, 64
    %v573 = vpop.permute.xlu0 %572
    %v575 = vmul.f32 %v553, %v573
    %v576 = vsel %vm411, %v575, 0.0
    %v577 = vsel %vm411, %v569, 0.0
    %579 = vrot.lane.b32.xlu0 %v576, 32
    %v580 = vpop.permute.xlu0 %579
    %582 = vst.msk [vmem:[#allocation2] sm:$0xff] %vm307, %v580
    %584 = vrot.lane.b32.xlu0 %v577, 96
    %v585 = vpop.permute.xlu0 %584
    %587 = vst.msk [vmem:[#allocation4] sm:$0xff] %vm307, %v585
    %v588 = vsel %vm307, %v580, 0.0
    %589 = vadd.xlane.f32.xlu0 %v588
    %v590 = vpop.xlane.xlu0 %589
    %v591 = vmul.f32 %v590, 0.03125
    %v592 = vsub.f32 %v576, %v591
    %v593 = vmul.f32 %v592, %v592
    %595 = vrot.lane.b32.xlu0 %v593, 32
    %v596 = vpop.permute.xlu0 %595
    %v598 = vsel %vm307, %v596, 0.0
    %599 = vadd.xlane.f32.xlu0 %v598
    %v600 = vpop.xlane.xlu0 %599
    %v601 = vmul.f32 %v600, 0.03125
    %v602 = vadd.f32 %v601, 1e-05
    %v603 = vrsqrt.pop %v602
    %v604 = vmul.f32 %v592, %v603
    %v605 = vld [vmem:[#allocation13] sm:$0x1]
    %v607 = vlaneseq
    %v608 = vshrl.u32 %v607, 7
    %v609 = vsub.s32 0, %v608
    %v610 = vrot.slane %v605, %v609
    %611 = vrot.lane.b32.xlu0 %v610, 96
    %v612 = vpop.permute.xlu0 %611
    %v614 = vmul.f32 %v604, %v612
    %v615 = vld [vmem:[#allocation14] sm:$0x1]
    %v617 = vlaneseq
    %v618 = vshrl.u32 %v617, 7
    %v619 = vsub.s32 0, %v618
    %v620 = vrot.slane %v615, %v619
    %621 = vrot.lane.b32.xlu0 %v620, 96
    %v622 = vpop.permute.xlu0 %621
    %v624 = vadd.f32 %v614, %v622
    %v625 = vsel %vm411, %v624, 0.0
    %627 = vrot.lane.b32.xlu0 %v625, 32
    %v628 = vpop.permute.xlu0 %627
    %630 = vst.msk [vmem:[#allocation6 + $0x8] sm:$0xff] %vm307, %v628
    %v631 = vld [vmem:[#allocation7 + $0x10] sm:$0xff]
    %v632 = vld [vmem:[#allocation2] sm:$0xff]
    %v633 = vld [vmem:[#allocation4] sm:$0xff]
    %v634 = vld [vmem:[%s2] sm:$0xff]
    %v635 = vld [vmem:[%s2 + $0x8] sm:$0xff]
    %v636 = vld [vmem:[%s2 + $0x10] sm:$0xff]
    %v637 = vld [vmem:[%s2 + $0x18] sm:$0xff]
    %v639 = vsel %vm307, %v632, 0
    %641 = vmatprep.subr.mxu0 0.0
    %642 = vmatpush1.msra.mxu0 0.0
    %643 = vmatprep.subr.mxu0 0.0
    %644 = vmatpush1.msra.mxu0 0.0
    %645 = vmatprep.subr.mxu0 0.0
    %646 = vmatpush1.msra.mxu0 0.0
    %647 = vmatprep.subr.mxu0 0.0
    %648 = vmatpush1.msra.mxu0 0.0
    %649 = vmatprep.subr.mxu0 0.0
    %650 = vmatpush1.msra.mxu0 0.0
    %651 = vmatprep.subr.mxu0 0.0
    %652 = vmatpush1.msra.mxu0 0.0
    %653 = vmatprep.subr.mxu0 0.0
    %654 = vmatpush1.msra.mxu0 0.0
    %655 = vmatprep.subr.mxu0 0.0
    %656 = vmatpush1.msra.mxu0 0.0
    %657 = vmatprep.subr.mxu0 0.0
    %658 = vmatpush1.msra.mxu0 0.0
    %659 = vmatprep.subr.mxu0 0.0
    %660 = vmatpush1.msra.mxu0 0.0
    %661 = vmatprep.subr.mxu0 0.0
    %662 = vmatpush1.msra.mxu0 0.0
    %663 = vmatprep.subr.mxu0 0.0
    %664 = vmatpush1.msra.mxu0 0.0
    %665 = vmatprep.subr.mxu0 0.0
    %666 = vmatpush1.msra.mxu0 %v637
    %667 = vmatprep.subr.mxu0 0.0
    %668 = vmatpush1.msra.mxu0 %v636
    %669 = vmatprep.subr.mxu0 0.0
    %670 = vmatpush1.msra.mxu0 %v635
    %671 = vmatprep.subr.mxu0 0.0
    %672 = vmatpush1.msra.mxu0 %v634
    %673 = vmatprep.subr.mxu0 0.0
    %674 = vmatpush2.msra.mxu0 0.0
    %675 = vmatprep.subr.mxu0 0.0
    %676 = vmatpush2.msra.mxu0 0.0
    %677 = vmatprep.subr.mxu0 0.0
    %678 = vmatpush2.msra.mxu0 0.0
    %679 = vmatprep.subr.mxu0 0.0
    %680 = vmatpush2.msra.mxu0 0.0
    %681 = vmatprep.subr.mxu0 0.0
    %682 = vmatpush2.msra.mxu0 0.0
    %683 = vmatprep.subr.mxu0 0.0
    %684 = vmatpush2.msra.mxu0 0.0
    %685 = vmatprep.subr.mxu0 0.0
    %686 = vmatpush2.msra.mxu0 0.0
    %687 = vmatprep.subr.mxu0 0.0
    %688 = vmatpush2.msra.mxu0 0.0
    %689 = vmatprep.subr.mxu0 0.0
    %690 = vmatpush2.msra.mxu0 0.0
    %691 = vmatprep.subr.mxu0 0.0
    %692 = vmatpush2.msra.mxu0 0.0
    %693 = vmatprep.subr.mxu0 0.0
    %694 = vmatpush2.msra.mxu0 0.0
    %695 = vmatprep.subr.mxu0 0.0
    %696 = vmatpush2.msra.mxu0 0.0
    %697 = vmatprep.subr.mxu0 0.0
    %698 = vmatpush2.msra.mxu0 0.0
    %699 = vmatprep.subr.mxu0 0.0
    %700 = vmatpush2.msra.mxu0 0.0
    %701 = vmatprep.subr.mxu0 0.0
    %702 = vmatpush2.msra.mxu0 0.0
    %703 = vmatprep.subr.mxu0 0.0
    %704 = vmatpush2.msra.mxu0 0.0
    %705 = vmatprep.mubr.f32.mxu0 0.0
    %706 = vmatmul.mubr.f32.gmra.mxu0 %v639
    %v707 = vpop.f32.mrf.mxu0
    %v708 = vadd.f32 0.0, %v707
    %v709 = vpop.f32.mrf.mxu0
    %710 = vdwg.mxu0
    %v711 = vadd.f32 %v631, %v708
    %v712 = vxor.u32 %v711, 2147483648
    %v713 = vmul.f32 %v712, 1.442695
    %v714 = vpow.pop %v713
    %v715 = vadd.f32 %v714, 1.0
    %v716 = vrcp.pop %v715
    %v717 = vmul.f32 1.0, %v716
    %v718 = vtanh.pop %v711
    %720 = vrot.lane.b32.xlu0 %v633, 32
    %v721 = vpop.permute.xlu0 %720
    %v723 = vmul.f32 %v717, %v721
    %725 = vrot.lane.b32.xlu0 %v718, 64
    %v726 = vpop.permute.xlu0 %725
    %v728 = vmul.f32 %v717, %v726
    %730 = vrot.lane.b32.xlu0 %v728, 32
    %v731 = vpop.permute.xlu0 %730
    %v733 = vadd.f32 %v723, %v731
    %v734 = vtanh.pop %v733
    %736 = vrot.lane.b32.xlu0 %v734, 64
    %v737 = vpop.permute.xlu0 %736
    %v739 = vmul.f32 %v717, %v737
    %v740 = vsel %vm411, %v739, 0.0
    %v741 = vsel %vm411, %v733, 0.0
    %743 = vrot.lane.b32.xlu0 %v740, 32
    %v744 = vpop.permute.xlu0 %743
    %746 = vst.msk [vmem:[#allocation2] sm:$0xff] %vm307, %v744
    %748 = vrot.lane.b32.xlu0 %v741, 96
    %v749 = vpop.permute.xlu0 %748
    %751 = vst.msk [vmem:[#allocation4] sm:$0xff] %vm307, %v749
    %v752 = vsel %vm307, %v744, 0.0
    %753 = vadd.xlane.f32.xlu0 %v752
    %v754 = vpop.xlane.xlu0 %753
    %v755 = vmul.f32 %v754, 0.03125
    %v756 = vsub.f32 %v740, %v755
    %v757 = vmul.f32 %v756, %v756
    %759 = vrot.lane.b32.xlu0 %v757, 32
    %v760 = vpop.permute.xlu0 %759
    %v762 = vsel %vm307, %v760, 0.0
    %763 = vadd.xlane.f32.xlu0 %v762
    %v764 = vpop.xlane.xlu0 %763
    %v765 = vmul.f32 %v764, 0.03125
    %v766 = vadd.f32 %v765, 1e-05
    %v767 = vrsqrt.pop %v766
    %v768 = vmul.f32 %v756, %v767
    %v769 = vld [vmem:[#allocation13] sm:$0x1]
    %v771 = vlaneseq
    %v772 = vshrl.u32 %v771, 7
    %v773 = vsub.s32 0, %v772
    %v774 = vrot.slane %v769, %v773
    %775 = vrot.lane.b32.xlu0 %v774, 96
    %v776 = vpop.permute.xlu0 %775
    %v778 = vmul.f32 %v768, %v776
    %v779 = vld [vmem:[#allocation14] sm:$0x1]
    %v781 = vlaneseq
    %v782 = vshrl.u32 %v781, 7
    %v783 = vsub.s32 0, %v782
    %v784 = vrot.slane %v779, %v783
    %785 = vrot.lane.b32.xlu0 %v784, 96
    %v786 = vpop.permute.xlu0 %785
    %v788 = vadd.f32 %v778, %v786
    %v789 = vsel %vm411, %v788, 0.0
    %791 = vrot.lane.b32.xlu0 %v789, 32
    %v792 = vpop.permute.xlu0 %791
    %794 = vst.msk [vmem:[#allocation6 + $0x10] sm:$0xff] %vm307, %v792
    %v795 = vld [vmem:[#allocation7 + $0x18] sm:$0xff]
    %v796 = vld [vmem:[#allocation2] sm:$0xff]
    %v797 = vld [vmem:[#allocation4] sm:$0xff]
    %v798 = vld [vmem:[%s2] sm:$0xff]
    %v799 = vld [vmem:[%s2 + $0x8] sm:$0xff]
    %v800 = vld [vmem:[%s2 + $0x10] sm:$0xff]
    %v801 = vld [vmem:[%s2 + $0x18] sm:$0xff]
    %v803 = vsel %vm307, %v796, 0
    %805 = vmatprep.subr.mxu0 0.0
    %806 = vmatpush1.msra.mxu0 0.0
    %807 = vmatprep.subr.mxu0 0.0
    %808 = vmatpush1.msra.mxu0 0.0
    %809 = vmatprep.subr.mxu0 0.0
    %810 = vmatpush1.msra.mxu0 0.0
    %811 = vmatprep.subr.mxu0 0.0
    %812 = vmatpush1.msra.mxu0 0.0
    %813 = vmatprep.subr.mxu0 0.0
    %814 = vmatpush1.msra.mxu0 0.0
    %815 = vmatprep.subr.mxu0 0.0
    %816 = vmatpush1.msra.mxu0 0.0
    %817 = vmatprep.subr.mxu0 0.0
    %818 = vmatpush1.msra.mxu0 0.0
    %819 = vmatprep.subr.mxu0 0.0
    %820 = vmatpush1.msra.mxu0 0.0
    %821 = vmatprep.subr.mxu0 0.0
    %822 = vmatpush1.msra.mxu0 0.0
    %823 = vmatprep.subr.mxu0 0.0
    %824 = vmatpush1.msra.mxu0 0.0
    %825 = vmatprep.subr.mxu0 0.0
    %826 = vmatpush1.msra.mxu0 0.0
    %827 = vmatprep.subr.mxu0 0.0
    %828 = vmatpush1.msra.mxu0 0.0
    %829 = vmatprep.subr.mxu0 0.0
    %830 = vmatpush1.msra.mxu0 %v801
    %831 = vmatprep.subr.mxu0 0.0
    %832 = vmatpush1.msra.mxu0 %v800
    %833 = vmatprep.subr.mxu0 0.0
    %834 = vmatpush1.msra.mxu0 %v799
    %835 = vmatprep.subr.mxu0 0.0
    %836 = vmatpush1.msra.mxu0 %v798
    %837 = vmatprep.subr.mxu0 0.0
    %838 = vmatpush2.msra.mxu0 0.0
    %839 = vmatprep.subr.mxu0 0.0
    %840 = vmatpush2.msra.mxu0 0.0
    %841 = vmatprep.subr.mxu0 0.0
    %842 = vmatpush2.msra.mxu0 0.0
    %843 = vmatprep.subr.mxu0 0.0
    %844 = vmatpush2.msra.mxu0 0.0
    %845 = vmatprep.subr.mxu0 0.0
    %846 = vmatpush2.msra.mxu0 0.0
    %847 = vmatprep.subr.mxu0 0.0
    %848 = vmatpush2.msra.mxu0 0.0
    %849 = vmatprep.subr.mxu0 0.0
    %850 = vmatpush2.msra.mxu0 0.0
    %851 = vmatprep.subr.mxu0 0.0
    %852 = vmatpush2.msra.mxu0 0.0
    %853 = vmatprep.subr.mxu0 0.0
    %854 = vmatpush2.msra.mxu0 0.0
    %855 = vmatprep.subr.mxu0 0.0
    %856 = vmatpush2.msra.mxu0 0.0
    %857 = vmatprep.subr.mxu0 0.0
    %858 = vmatpush2.msra.mxu0 0.0
    %859 = vmatprep.subr.mxu0 0.0
    %860 = vmatpush2.msra.mxu0 0.0
    %861 = vmatprep.subr.mxu0 0.0
    %862 = vmatpush2.msra.mxu0 0.0
    %863 = vmatprep.subr.mxu0 0.0
    %864 = vmatpush2.msra.mxu0 0.0
    %865 = vmatprep.subr.mxu0 0.0
    %866 = vmatpush2.msra.mxu0 0.0
    %867 = vmatprep.subr.mxu0 0.0
    %868 = vmatpush2.msra.mxu0 0.0
    %869 = vmatprep.mubr.f32.mxu0 0.0
    %870 = vmatmul.mubr.f32.gmra.mxu0 %v803
    %v871 = vpop.f32.mrf.mxu0
    %v872 = vadd.f32 0.0, %v871
    %v873 = vpop.f32.mrf.mxu0
    %874 = vdwg.mxu0
    %v875 = vadd.f32 %v795, %v872
    %v876 = vxor.u32 %v875, 2147483648
    %v877 = vmul.f32 %v876, 1.442695
    %v878 = vpow.pop %v877
    %v879 = vadd.f32 %v878, 1.0
    %v880 = vrcp.pop %v879
    %v881 = vmul.f32 1.0, %v880
    %v882 = vtanh.pop %v875
    %884 = vrot.lane.b32.xlu0 %v797, 32
    %v885 = vpop.permute.xlu0 %884
    %v887 = vmul.f32 %v881, %v885
    %889 = vrot.lane.b32.xlu0 %v882, 64
    %v890 = vpop.permute.xlu0 %889
    %v892 = vmul.f32 %v881, %v890
    %894 = vrot.lane.b32.xlu0 %v892, 32
    %v895 = vpop.permute.xlu0 %894
    %v897 = vadd.f32 %v887, %v895
    %v898 = vtanh.pop %v897
    %900 = vrot.lane.b32.xlu0 %v898, 64
    %v901 = vpop.permute.xlu0 %900
    %v903 = vmul.f32 %v881, %v901
    %v904 = vsel %vm411, %v903, 0.0
    %v905 = vsel %vm411, %v897, 0.0
    %907 = vrot.lane.b32.xlu0 %v904, 32
    %v908 = vpop.permute.xlu0 %907
    %910 = vst.msk [vmem:[#allocation2] sm:$0xff] %vm307, %v908
    %912 = vrot.lane.b32.xlu0 %v905, 96
    %v913 = vpop.permute.xlu0 %912
    %915 = vst.msk [vmem:[#allocation4] sm:$0xff] %vm307, %v913
    %v916 = vsel %vm307, %v908, 0.0
    %917 = vadd.xlane.f32.xlu0 %v916
    %v918 = vpop.xlane.xlu0 %917
    %v919 = vmul.f32 %v918, 0.03125
    %v920 = vsub.f32 %v904, %v919
    %v921 = vmul.f32 %v920, %v920
    %923 = vrot.lane.b32.xlu0 %v921, 32
    %v924 = vpop.permute.xlu0 %923
    %v926 = vsel %vm307, %v924, 0.0
    %927 = vadd.xlane.f32.xlu0 %v926
    %v928 = vpop.xlane.xlu0 %927
    %v929 = vmul.f32 %v928, 0.03125
    %v930 = vadd.f32 %v929, 1e-05
    %v931 = vrsqrt.pop %v930
    %v932 = vmul.f32 %v920, %v931
    %v933 = vld [vmem:[#allocation13] sm:$0x1]
    %v935 = vlaneseq
    %v936 = vshrl.u32 %v935, 7
    %v937 = vsub.s32 0, %v936
    %v938 = vrot.slane %v933, %v937
    %939 = vrot.lane.b32.xlu0 %v938, 96
    %v940 = vpop.permute.xlu0 %939
    %v942 = vmul.f32 %v932, %v940
    %v943 = vld [vmem:[#allocation14] sm:$0x1]
    %v945 = vlaneseq
    %v946 = vshrl.u32 %v945, 7
    %v947 = vsub.s32 0, %v946
    %v948 = vrot.slane %v943, %v947
    %949 = vrot.lane.b32.xlu0 %v948, 96
    %v950 = vpop.permute.xlu0 %949
    %v952 = vadd.f32 %v942, %v950
    %v953 = vsel %vm411, %v952, 0.0
    %955 = vrot.lane.b32.xlu0 %v953, 32
    %v956 = vpop.permute.xlu0 %955
    %958 = vst.msk [vmem:[#allocation6 + $0x18] sm:$0xff] %vm307, %v956
    %v959 = vld [vmem:[#allocation7 + $0x20] sm:$0xff]
    %v960 = vld [vmem:[#allocation2] sm:$0xff]
    %v961 = vld [vmem:[#allocation4] sm:$0xff]
    %v962 = vld [vmem:[%s2] sm:$0xff]
    %v963 = vld [vmem:[%s2 + $0x8] sm:$0xff]
    %v964 = vld [vmem:[%s2 + $0x10] sm:$0xff]
    %v965 = vld [vmem:[%s2 + $0x18] sm:$0xff]
    %v967 = vsel %vm307, %v960, 0
    %969 = vmatprep.subr.mxu0 0.0
    %970 = vmatpush1.msra.mxu0 0.0
    %971 = vmatprep.subr.mxu0 0.0
    %972 = vmatpush1.msra.mxu0 0.0
    %973 = vmatprep.subr.mxu0 0.0
    %974 = vmatpush1.msra.mxu0 0.0
    %975 = vmatprep.subr.mxu0 0.0
    %976 = vmatpush1.msra.mxu0 0.0
    %977 = vmatprep.subr.mxu0 0.0
    %978 = vmatpush1.msra.mxu0 0.0
    %979 = vmatprep.subr.mxu0 0.0
    %980 = vmatpush1.msra.mxu0 0.0
    %981 = vmatprep.subr.mxu0 0.0
    %982 = vmatpush1.msra.mxu0 0.0
    %983 = vmatprep.subr.mxu0 0.0
    %984 = vmatpush1.msra.mxu0 0.0
    %985 = vmatprep.subr.mxu0 0.0
    %986 = vmatpush1.msra.mxu0 0.0
    %987 = vmatprep.subr.mxu0 0.0
    %988 = vmatpush1.msra.mxu0 0.0
    %989 = vmatprep.subr.mxu0 0.0
    %990 = vmatpush1.msra.mxu0 0.0
    %991 = vmatprep.subr.mxu0 0.0
    %992 = vmatpush1.msra.mxu0 0.0
    %993 = vmatprep.subr.mxu0 0.0
    %994 = vmatpush1.msra.mxu0 %v965
    %995 = vmatprep.subr.mxu0 0.0
    %996 = vmatpush1.msra.mxu0 %v964
    %997 = vmatprep.subr.mxu0 0.0
    %998 = vmatpush1.msra.mxu0 %v963
    %999 = vmatprep.subr.mxu0 0.0
    %1000 = vmatpush1.msra.mxu0 %v962
    %1001 = vmatprep.subr.mxu0 0.0
    %1002 = vmatpush2.msra.mxu0 0.0
    %1003 = vmatprep.subr.mxu0 0.0
    %1004 = vmatpush2.msra.mxu0 0.0
    %1005 = vmatprep.subr.mxu0 0.0
    %1006 = vmatpush2.msra.mxu0 0.0
    %1007 = vmatprep.subr.mxu0 0.0
    %1008 = vmatpush2.msra.mxu0 0.0
    %1009 = vmatprep.subr.mxu0 0.0
    %1010 = vmatpush2.msra.mxu0 0.0
    %1011 = vmatprep.subr.mxu0 0.0
    %1012 = vmatpush2.msra.mxu0 0.0
    %1013 = vmatprep.subr.mxu0 0.0
    %1014 = vmatpush2.msra.mxu0 0.0
    %1015 = vmatprep.subr.mxu0 0.0
    %1016 = vmatpush2.msra.mxu0 0.0
    %1017 = vmatprep.subr.mxu0 0.0
    %1018 = vmatpush2.msra.mxu0 0.0
    %1019 = vmatprep.subr.mxu0 0.0
    %1020 = vmatpush2.msra.mxu0 0.0
    %1021 = vmatprep.subr.mxu0 0.0
    %1022 = vmatpush2.msra.mxu0 0.0
    %1023 = vmatprep.subr.mxu0 0.0
    %1024 = vmatpush2.msra.mxu0 0.0
    %1025 = vmatprep.subr.mxu0 0.0
    %1026 = vmatpush2.msra.mxu0 0.0
    %1027 = vmatprep.subr.mxu0 0.0
    %1028 = vmatpush2.msra.mxu0 0.0
    %1029 = vmatprep.subr.mxu0 0.0
    %1030 = vmatpush2.msra.mxu0 0.0
    %1031 = vmatprep.subr.mxu0 0.0
    %1032 = vmatpush2.msra.mxu0 0.0
    %1033 = vmatprep.mubr.f32.mxu0 0.0
    %1034 = vmatmul.mubr.f32.gmra.mxu0 %v967
    %v1035 = vpop.f32.mrf.mxu0
    %v1036 = vadd.f32 0.0, %v1035
    %v1037 = vpop.f32.mrf.mxu0
    %1038 = vdwg.mxu0
    %v1039 = vadd.f32 %v959, %v1036
    %v1040 = vxor.u32 %v1039, 2147483648
    %v1041 = vmul.f32 %v1040, 1.442695
    %v1042 = vpow.pop %v1041
    %v1043 = vadd.f32 %v1042, 1.0
    %v1044 = vrcp.pop %v1043
    %v1045 = vmul.f32 1.0, %v1044
    %v1046 = vtanh.pop %v1039
    %1048 = vrot.lane.b32.xlu0 %v961, 32
    %v1049 = vpop.permute.xlu0 %1048
    %v1051 = vmul.f32 %v1045, %v1049
    %1053 = vrot.lane.b32.xlu0 %v1046, 64
    %v1054 = vpop.permute.xlu0 %1053
    %v1056 = vmul.f32 %v1045, %v1054
    %1058 = vrot.lane.b32.xlu0 %v1056, 32
    %v1059 = vpop.permute.xlu0 %1058
    %v1061 = vadd.f32 %v1051, %v1059
    %v1062 = vtanh.pop %v1061
    %1064 = vrot.lane.b32.xlu0 %v1062, 64
    %v1065 = vpop.permute.xlu0 %1064
    %v1067 = vmul.f32 %v1045, %v1065
    %v1068 = vsel %vm411, %v1067, 0.0
    %v1069 = vsel %vm411, %v1061, 0.0
    %1071 = vrot.lane.b32.xlu0 %v1068, 32
    %v1072 = vpop.permute.xlu0 %1071
    %1074 = vst.msk [vmem:[#allocation2] sm:$0xff] %vm307, %v1072
    %1076 = vrot.lane.b32.xlu0 %v1069, 96
    %v1077 = vpop.permute.xlu0 %1076
    %1079 = vst.msk [vmem:[#allocation4] sm:$0xff] %vm307, %v1077
    %v1080 = vsel %vm307, %v1072, 0.0
    %1081 = vadd.xlane.f32.xlu0 %v1080
    %v1082 = vpop.xlane.xlu0 %1081
    %v1083 = vmul.f32 %v1082, 0.03125
    %v1084 = vsub.f32 %v1068, %v1083
    %v1085 = vmul.f32 %v1084, %v1084
    %1087 = vrot.lane.b32.xlu0 %v1085, 32
    %v1088 = vpop.permute.xlu0 %1087
    %v1090 = vsel %vm307, %v1088, 0.0
    %1091 = vadd.xlane.f32.xlu0 %v1090
    %v1092 = vpop.xlane.xlu0 %1091
    %v1093 = vmul.f32 %v1092, 0.03125
    %v1094 = vadd.f32 %v1093, 1e-05
    %v1095 = vrsqrt.pop %v1094
    %v1096 = vmul.f32 %v1084, %v1095
    %v1097 = vld [vmem:[#allocation13] sm:$0x1]
    %v1099 = vlaneseq
    %v1100 = vshrl.u32 %v1099, 7
    %v1101 = vsub.s32 0, %v1100
    %v1102 = vrot.slane %v1097, %v1101
    %1103 = vrot.lane.b32.xlu0 %v1102, 96
    %v1104 = vpop.permute.xlu0 %1103
    %v1106 = vmul.f32 %v1096, %v1104
    %v1107 = vld [vmem:[#allocation14] sm:$0x1]
    %v1109 = vlaneseq
    %v1110 = vshrl.u32 %v1109, 7
    %v1111 = vsub.s32 0, %v1110
    %v1112 = vrot.slane %v1107, %v1111
    %1113 = vrot.lane.b32.xlu0 %v1112, 96
    %v1114 = vpop.permute.xlu0 %1113
    %v1116 = vadd.f32 %v1106, %v1114
    %v1117 = vsel %vm411, %v1116, 0.0
    %1119 = vrot.lane.b32.xlu0 %v1117, 32
    %v1120 = vpop.permute.xlu0 %1119
    %1122 = vst.msk [vmem:[#allocation6 + $0x20] sm:$0xff] %vm307, %v1120
    %v1123 = vld [vmem:[#allocation7 + $0x28] sm:$0xff]
    %v1124 = vld [vmem:[#allocation2] sm:$0xff]
    %v1125 = vld [vmem:[#allocation4] sm:$0xff]
    %v1126 = vld [vmem:[%s2] sm:$0xff]
    %v1127 = vld [vmem:[%s2 + $0x8] sm:$0xff]
    %v1128 = vld [vmem:[%s2 + $0x10] sm:$0xff]
    %v1129 = vld [vmem:[%s2 + $0x18] sm:$0xff]
    %v1131 = vsel %vm307, %v1124, 0
    %1133 = vmatprep.subr.mxu0 0.0
    %1134 = vmatpush1.msra.mxu0 0.0
    %1135 = vmatprep.subr.mxu0 0.0
    %1136 = vmatpush1.msra.mxu0 0.0
    %1137 = vmatprep.subr.mxu0 0.0
    %1138 = vmatpush1.msra.mxu0 0.0
    %1139 = vmatprep.subr.mxu0 0.0
    %1140 = vmatpush1.msra.mxu0 0.0
    %1141 = vmatprep.subr.mxu0 0.0
    %1142 = vmatpush1.msra.mxu0 0.0
    %1143 = vmatprep.subr.mxu0 0.0
    %1144 = vmatpush1.msra.mxu0 0.0
    %1145 = vmatprep.subr.mxu0 0.0
    %1146 = vmatpush1.msra.mxu0 0.0
    %1147 = vmatprep.subr.mxu0 0.0
    %1148 = vmatpush1.msra.mxu0 0.0
    %1149 = vmatprep.subr.mxu0 0.0
    %1150 = vmatpush1.msra.mxu0 0.0
    %1151 = vmatprep.subr.mxu0 0.0
    %1152 = vmatpush1.msra.mxu0 0.0
    %1153 = vmatprep.subr.mxu0 0.0
    %1154 = vmatpush1.msra.mxu0 0.0
    %1155 = vmatprep.subr.mxu0 0.0
    %1156 = vmatpush1.msra.mxu0 0.0
    %1157 = vmatprep.subr.mxu0 0.0
    %1158 = vmatpush1.msra.mxu0 %v1129
    %1159 = vmatprep.subr.mxu0 0.0
    %1160 = vmatpush1.msra.mxu0 %v1128
    %1161 = vmatprep.subr.mxu0 0.0
    %1162 = vmatpush1.msra.mxu0 %v1127
    %1163 = vmatprep.subr.mxu0 0.0
    %1164 = vmatpush1.msra.mxu0 %v1126
    %1165 = vmatprep.subr.mxu0 0.0
    %1166 = vmatpush2.msra.mxu0 0.0
    %1167 = vmatprep.subr.mxu0 0.0
    %1168 = vmatpush2.msra.mxu0 0.0
    %1169 = vmatprep.subr.mxu0 0.0
    %1170 = vmatpush2.msra.mxu0 0.0
    %1171 = vmatprep.subr.mxu0 0.0
    %1172 = vmatpush2.msra.mxu0 0.0
    %1173 = vmatprep.subr.mxu0 0.0
    %1174 = vmatpush2.msra.mxu0 0.0
    %1175 = vmatprep.subr.mxu0 0.0
    %1176 = vmatpush2.msra.mxu0 0.0
    %1177 = vmatprep.subr.mxu0 0.0
    %1178 = vmatpush2.msra.mxu0 0.0
    %1179 = vmatprep.subr.mxu0 0.0
    %1180 = vmatpush2.msra.mxu0 0.0
    %1181 = vmatprep.subr.mxu0 0.0
    %1182 = vmatpush2.msra.mxu0 0.0
    %1183 = vmatprep.subr.mxu0 0.0
    %1184 = vmatpush2.msra.mxu0 0.0
    %1185 = vmatprep.subr.mxu0 0.0
    %1186 = vmatpush2.msra.mxu0 0.0
    %1187 = vmatprep.subr.mxu0 0.0
    %1188 = vmatpush2.msra.mxu0 0.0
    %1189 = vmatprep.subr.mxu0 0.0
    %1190 = vmatpush2.msra.mxu0 0.0
    %1191 = vmatprep.subr.mxu0 0.0
    %1192 = vmatpush2.msra.mxu0 0.0
    %1193 = vmatprep.subr.mxu0 0.0
    %1194 = vmatpush2.msra.mxu0 0.0
    %1195 = vmatprep.subr.mxu0 0.0
    %1196 = vmatpush2.msra.mxu0 0.0
    %1197 = vmatprep.mubr.f32.mxu0 0.0
    %1198 = vmatmul.mubr.f32.gmra.mxu0 %v1131
    %v1199 = vpop.f32.mrf.mxu0
    %v1200 = vadd.f32 0.0, %v1199
    %v1201 = vpop.f32.mrf.mxu0
    %1202 = vdwg.mxu0
    %v1203 = vadd.f32 %v1123, %v1200
    %v1204 = vxor.u32 %v1203, 2147483648
    %v1205 = vmul.f32 %v1204, 1.442695
    %v1206 = vpow.pop %v1205
    %v1207 = vadd.f32 %v1206, 1.0
    %v1208 = vrcp.pop %v1207
    %v1209 = vmul.f32 1.0, %v1208
    %v1210 = vtanh.pop %v1203
    %1212 = vrot.lane.b32.xlu0 %v1125, 32
    %v1213 = vpop.permute.xlu0 %1212
    %v1215 = vmul.f32 %v1209, %v1213
    %1217 = vrot.lane.b32.xlu0 %v1210, 64
    %v1218 = vpop.permute.xlu0 %1217
    %v1220 = vmul.f32 %v1209, %v1218
    %1222 = vrot.lane.b32.xlu0 %v1220, 32
    %v1223 = vpop.permute.xlu0 %1222
    %v1225 = vadd.f32 %v1215, %v1223
    %v1226 = vtanh.pop %v1225
    %1228 = vrot.lane.b32.xlu0 %v1226, 64
    %v1229 = vpop.permute.xlu0 %1228
    %v1231 = vmul.f32 %v1209, %v1229
    %v1232 = vsel %vm411, %v1231, 0.0
    %v1233 = vsel %vm411, %v1225, 0.0
    %1235 = vrot.lane.b32.xlu0 %v1232, 32
    %v1236 = vpop.permute.xlu0 %1235
    %1238 = vst.msk [vmem:[#allocation2] sm:$0xff] %vm307, %v1236
    %1240 = vrot.lane.b32.xlu0 %v1233, 96
    %v1241 = vpop.permute.xlu0 %1240
    %1243 = vst.msk [vmem:[#allocation4] sm:$0xff] %vm307, %v1241
    %v1244 = vsel %vm307, %v1236, 0.0
    %1245 = vadd.xlane.f32.xlu0 %v1244
    %v1246 = vpop.xlane.xlu0 %1245
    %v1247 = vmul.f32 %v1246, 0.03125
    %v1248 = vsub.f32 %v1232, %v1247
    %v1249 = vmul.f32 %v1248, %v1248
    %1251 = vrot.lane.b32.xlu0 %v1249, 32
    %v1252 = vpop.permute.xlu0 %1251
    %v1254 = vsel %vm307, %v1252, 0.0
    %1255 = vadd.xlane.f32.xlu0 %v1254
    %v1256 = vpop.xlane.xlu0 %1255
    %v1257 = vmul.f32 %v1256, 0.03125
    %v1258 = vadd.f32 %v1257, 1e-05
    %v1259 = vrsqrt.pop %v1258
    %v1260 = vmul.f32 %v1248, %v1259
    %v1261 = vld [vmem:[#allocation13] sm:$0x1]
    %v1263 = vlaneseq
    %v1264 = vshrl.u32 %v1263, 7
    %v1265 = vsub.s32 0, %v1264
    %v1266 = vrot.slane %v1261, %v1265
    %1267 = vrot.lane.b32.xlu0 %v1266, 96
    %v1268 = vpop.permute.xlu0 %1267
    %v1270 = vmul.f32 %v1260, %v1268
    %v1271 = vld [vmem:[#allocation14] sm:$0x1]
    %v1273 = vlaneseq
    %v1274 = vshrl.u32 %v1273, 7
    %v1275 = vsub.s32 0, %v1274
    %v1276 = vrot.slane %v1271, %v1275
    %1277 = vrot.lane.b32.xlu0 %v1276, 96
    %v1278 = vpop.permute.xlu0 %1277
    %v1280 = vadd.f32 %v1270, %v1278
    %v1281 = vsel %vm411, %v1280, 0.0
    %1283 = vrot.lane.b32.xlu0 %v1281, 32
    %v1284 = vpop.permute.xlu0 %1283
    %1286 = vst.msk [vmem:[#allocation6 + $0x28] sm:$0xff] %vm307, %v1284
    %v1287 = vld [vmem:[#allocation7 + $0x30] sm:$0xff]
    %v1288 = vld [vmem:[#allocation2] sm:$0xff]
    %v1289 = vld [vmem:[#allocation4] sm:$0xff]
    %v1290 = vld [vmem:[%s2] sm:$0xff]
    %v1291 = vld [vmem:[%s2 + $0x8] sm:$0xff]
    %v1292 = vld [vmem:[%s2 + $0x10] sm:$0xff]
    %v1293 = vld [vmem:[%s2 + $0x18] sm:$0xff]
    %v1295 = vsel %vm307, %v1288, 0
    %1297 = vmatprep.subr.mxu0 0.0
    %1298 = vmatpush1.msra.mxu0 0.0
    %1299 = vmatprep.subr.mxu0 0.0
    %1300 = vmatpush1.msra.mxu0 0.0
    %1301 = vmatprep.subr.mxu0 0.0
    %1302 = vmatpush1.msra.mxu0 0.0
    %1303 = vmatprep.subr.mxu0 0.0
    %1304 = vmatpush1.msra.mxu0 0.0
    %1305 = vmatprep.subr.mxu0 0.0
    %1306 = vmatpush1.msra.mxu0 0.0
    %1307 = vmatprep.subr.mxu0 0.0
    %1308 = vmatpush1.msra.mxu0 0.0
    %1309 = vmatprep.subr.mxu0 0.0
    %1310 = vmatpush1.msra.mxu0 0.0
    %1311 = vmatprep.subr.mxu0 0.0
    %1312 = vmatpush1.msra.mxu0 0.0
    %1313 = vmatprep.subr.mxu0 0.0
    %1314 = vmatpush1.msra.mxu0 0.0
    %1315 = vmatprep.subr.mxu0 0.0
    %1316 = vmatpush1.msra.mxu0 0.0
    %1317 = vmatprep.subr.mxu0 0.0
    %1318 = vmatpush1.msra.mxu0 0.0
    %1319 = vmatprep.subr.mxu0 0.0
    %1320 = vmatpush1.msra.mxu0 0.0
    %1321 = vmatprep.subr.mxu0 0.0
    %1322 = vmatpush1.msra.mxu0 %v1293
    %1323 = vmatprep.subr.mxu0 0.0
    %1324 = vmatpush1.msra.mxu0 %v1292
    %1325 = vmatprep.subr.mxu0 0.0
    %1326 = vmatpush1.msra.mxu0 %v1291
    %1327 = vmatprep.subr.mxu0 0.0
    %1328 = vmatpush1.msra.mxu0 %v1290
    %1329 = vmatprep.subr.mxu0 0.0
    %1330 = vmatpush2.msra.mxu0 0.0
    %1331 = vmatprep.subr.mxu0 0.0
    %1332 = vmatpush2.msra.mxu0 0.0
    %1333 = vmatprep.subr.mxu0 0.0
    %1334 = vmatpush2.msra.mxu0 0.0
    %1335 = vmatprep.subr.mxu0 0.0
    %1336 = vmatpush2.msra.mxu0 0.0
    %1337 = vmatprep.subr.mxu0 0.0
    %1338 = vmatpush2.msra.mxu0 0.0
    %1339 = vmatprep.subr.mxu0 0.0
    %1340 = vmatpush2.msra.mxu0 0.0
    %1341 = vmatprep.subr.mxu0 0.0
    %1342 = vmatpush2.msra.mxu0 0.0
    %1343 = vmatprep.subr.mxu0 0.0
    %1344 = vmatpush2.msra.mxu0 0.0
    %1345 = vmatprep.subr.mxu0 0.0
    %1346 = vmatpush2.msra.mxu0 0.0
    %1347 = vmatprep.subr.mxu0 0.0
    %1348 = vmatpush2.msra.mxu0 0.0
    %1349 = vmatprep.subr.mxu0 0.0
    %1350 = vmatpush2.msra.mxu0 0.0
    %1351 = vmatprep.subr.mxu0 0.0
    %1352 = vmatpush2.msra.mxu0 0.0
    %1353 = vmatprep.subr.mxu0 0.0
    %1354 = vmatpush2.msra.mxu0 0.0
    %1355 = vmatprep.subr.mxu0 0.0
    %1356 = vmatpush2.msra.mxu0 0.0
    %1357 = vmatprep.subr.mxu0 0.0
    %1358 = vmatpush2.msra.mxu0 0.0
    %1359 = vmatprep.subr.mxu0 0.0
    %1360 = vmatpush2.msra.mxu0 0.0
    %1361 = vmatprep.mubr.f32.mxu0 0.0
    %1362 = vmatmul.mubr.f32.gmra.mxu0 %v1295
    %v1363 = vpop.f32.mrf.mxu0
    %v1364 = vadd.f32 0.0, %v1363
    %v1365 = vpop.f32.mrf.mxu0
    %1366 = vdwg.mxu0
    %v1367 = vadd.f32 %v1287, %v1364
    %v1368 = vxor.u32 %v1367, 2147483648
    %v1369 = vmul.f32 %v1368, 1.442695
    %v1370 = vpow.pop %v1369
    %v1371 = vadd.f32 %v1370, 1.0
    %v1372 = vrcp.pop %v1371
    %v1373 = vmul.f32 1.0, %v1372
    %v1374 = vtanh.pop %v1367
    %1376 = vrot.lane.b32.xlu0 %v1289, 32
    %v1377 = vpop.permute.xlu0 %1376
    %v1379 = vmul.f32 %v1373, %v1377
    %1381 = vrot.lane.b32.xlu0 %v1374, 64
    %v1382 = vpop.permute.xlu0 %1381
    %v1384 = vmul.f32 %v1373, %v1382
    %1386 = vrot.lane.b32.xlu0 %v1384, 32
    %v1387 = vpop.permute.xlu0 %1386
    %v1389 = vadd.f32 %v1379, %v1387
    %v1390 = vtanh.pop %v1389
    %1392 = vrot.lane.b32.xlu0 %v1390, 64
    %v1393 = vpop.permute.xlu0 %1392
    %v1395 = vmul.f32 %v1373, %v1393
    %v1396 = vsel %vm411, %v1395, 0.0
    %v1397 = vsel %vm411, %v1389, 0.0
    %1399 = vrot.lane.b32.xlu0 %v1396, 32
    %v1400 = vpop.permute.xlu0 %1399
    %1402 = vst.msk [vmem:[#allocation2] sm:$0xff] %vm307, %v1400
    %1404 = vrot.lane.b32.xlu0 %v1397, 96
    %v1405 = vpop.permute.xlu0 %1404
    %1407 = vst.msk [vmem:[#allocation4] sm:$0xff] %vm307, %v1405
    %v1408 = vsel %vm307, %v1400, 0.0
    %1409 = vadd.xlane.f32.xlu0 %v1408
    %v1410 = vpop.xlane.xlu0 %1409
    %v1411 = vmul.f32 %v1410, 0.03125
    %v1412 = vsub.f32 %v1396, %v1411
    %v1413 = vmul.f32 %v1412, %v1412
    %1415 = vrot.lane.b32.xlu0 %v1413, 32
    %v1416 = vpop.permute.xlu0 %1415
    %v1418 = vsel %vm307, %v1416, 0.0
    %1419 = vadd.xlane.f32.xlu0 %v1418
    %v1420 = vpop.xlane.xlu0 %1419
    %v1421 = vmul.f32 %v1420, 0.03125
    %v1422 = vadd.f32 %v1421, 1e-05
    %v1423 = vrsqrt.pop %v1422
    %v1424 = vmul.f32 %v1412, %v1423
    %v1425 = vld [vmem:[#allocation13] sm:$0x1]
    %v1427 = vlaneseq
    %v1428 = vshrl.u32 %v1427, 7
    %v1429 = vsub.s32 0, %v1428
    %v1430 = vrot.slane %v1425, %v1429
    %1431 = vrot.lane.b32.xlu0 %v1430, 96
    %v1432 = vpop.permute.xlu0 %1431
    %v1434 = vmul.f32 %v1424, %v1432
    %v1435 = vld [vmem:[#allocation14] sm:$0x1]
    %v1437 = vlaneseq
    %v1438 = vshrl.u32 %v1437, 7
    %v1439 = vsub.s32 0, %v1438
    %v1440 = vrot.slane %v1435, %v1439
    %1441 = vrot.lane.b32.xlu0 %v1440, 96
    %v1442 = vpop.permute.xlu0 %1441
    %v1444 = vadd.f32 %v1434, %v1442
    %v1445 = vsel %vm411, %v1444, 0.0
    %1447 = vrot.lane.b32.xlu0 %v1445, 32
    %v1448 = vpop.permute.xlu0 %1447
    %1450 = vst.msk [vmem:[#allocation6 + $0x30] sm:$0xff] %vm307, %v1448
    %v1451 = vld [vmem:[#allocation7 + $0x38] sm:$0xff]
    %v1452 = vld [vmem:[#allocation2] sm:$0xff]
    %v1453 = vld [vmem:[#allocation4] sm:$0xff]
    %v1454 = vld [vmem:[%s2] sm:$0xff]
    %v1455 = vld [vmem:[%s2 + $0x8] sm:$0xff]
    %v1456 = vld [vmem:[%s2 + $0x10] sm:$0xff]
    %v1457 = vld [vmem:[%s2 + $0x18] sm:$0xff]
    %v1459 = vsel %vm307, %v1452, 0
    %1461 = vmatprep.subr.mxu0 0.0
    %1462 = vmatpush1.msra.mxu0 0.0
    %1463 = vmatprep.subr.mxu0 0.0
    %1464 = vmatpush1.msra.mxu0 0.0
    %1465 = vmatprep.subr.mxu0 0.0
    %1466 = vmatpush1.msra.mxu0 0.0
    %1467 = vmatprep.subr.mxu0 0.0
    %1468 = vmatpush1.msra.mxu0 0.0
    %1469 = vmatprep.subr.mxu0 0.0
    %1470 = vmatpush1.msra.mxu0 0.0
    %1471 = vmatprep.subr.mxu0 0.0
    %1472 = vmatpush1.msra.mxu0 0.0
    %1473 = vmatprep.subr.mxu0 0.0
    %1474 = vmatpush1.msra.mxu0 0.0
    %1475 = vmatprep.subr.mxu0 0.0
    %1476 = vmatpush1.msra.mxu0 0.0
    %1477 = vmatprep.subr.mxu0 0.0
    %1478 = vmatpush1.msra.mxu0 0.0
    %1479 = vmatprep.subr.mxu0 0.0
    %1480 = vmatpush1.msra.mxu0 0.0
    %1481 = vmatprep.subr.mxu0 0.0
    %1482 = vmatpush1.msra.mxu0 0.0
    %1483 = vmatprep.subr.mxu0 0.0
    %1484 = vmatpush1.msra.mxu0 0.0
    %1485 = vmatprep.subr.mxu0 0.0
    %1486 = vmatpush1.msra.mxu0 %v1457
    %1487 = vmatprep.subr.mxu0 0.0
    %1488 = vmatpush1.msra.mxu0 %v1456
    %1489 = vmatprep.subr.mxu0 0.0
    %1490 = vmatpush1.msra.mxu0 %v1455
    %1491 = vmatprep.subr.mxu0 0.0
    %1492 = vmatpush1.msra.mxu0 %v1454
    %1493 = vmatprep.subr.mxu0 0.0
    %1494 = vmatpush2.msra.mxu0 0.0
    %1495 = vmatprep.subr.mxu0 0.0
    %1496 = vmatpush2.msra.mxu0 0.0
    %1497 = vmatprep.subr.mxu0 0.0
    %1498 = vmatpush2.msra.mxu0 0.0
    %1499 = vmatprep.subr.mxu0 0.0
    %1500 = vmatpush2.msra.mxu0 0.0
    %1501 = vmatprep.subr.mxu0 0.0
    %1502 = vmatpush2.msra.mxu0 0.0
    %1503 = vmatprep.subr.mxu0 0.0
    %1504 = vmatpush2.msra.mxu0 0.0
    %1505 = vmatprep.subr.mxu0 0.0
    %1506 = vmatpush2.msra.mxu0 0.0
    %1507 = vmatprep.subr.mxu0 0.0
    %1508 = vmatpush2.msra.mxu0 0.0
    %1509 = vmatprep.subr.mxu0 0.0
    %1510 = vmatpush2.msra.mxu0 0.0
    %1511 = vmatprep.subr.mxu0 0.0
    %1512 = vmatpush2.msra.mxu0 0.0
    %1513 = vmatprep.subr.mxu0 0.0
    %1514 = vmatpush2.msra.mxu0 0.0
    %1515 = vmatprep.subr.mxu0 0.0
    %1516 = vmatpush2.msra.mxu0 0.0
    %1517 = vmatprep.subr.mxu0 0.0
    %1518 = vmatpush2.msra.mxu0 0.0
    %1519 = vmatprep.subr.mxu0 0.0
    %1520 = vmatpush2.msra.mxu0 0.0
    %1521 = vmatprep.subr.mxu0 0.0
    %1522 = vmatpush2.msra.mxu0 0.0
    %1523 = vmatprep.subr.mxu0 0.0
    %1524 = vmatpush2.msra.mxu0 0.0
    %1525 = vmatprep.mubr.f32.mxu0 0.0
    %1526 = vmatmul.mubr.f32.gmra.mxu0 %v1459
    %v1527 = vpop.f32.mrf.mxu0
    %v1528 = vadd.f32 0.0, %v1527
    %v1529 = vpop.f32.mrf.mxu0
    %1530 = vdwg.mxu0
    %v1531 = vadd.f32 %v1451, %v1528
    %v1532 = vxor.u32 %v1531, 2147483648
    %v1533 = vmul.f32 %v1532, 1.442695
    %v1534 = vpow.pop %v1533
    %v1535 = vadd.f32 %v1534, 1.0
    %v1536 = vrcp.pop %v1535
    %v1537 = vmul.f32 1.0, %v1536
    %v1538 = vtanh.pop %v1531
    %1540 = vrot.lane.b32.xlu0 %v1453, 32
    %v1541 = vpop.permute.xlu0 %1540
    %v1543 = vmul.f32 %v1537, %v1541
    %1545 = vrot.lane.b32.xlu0 %v1538, 64
    %v1546 = vpop.permute.xlu0 %1545
    %v1548 = vmul.f32 %v1537, %v1546
    %1550 = vrot.lane.b32.xlu0 %v1548, 32
    %v1551 = vpop.permute.xlu0 %1550
    %v1553 = vadd.f32 %v1543, %v1551
    %v1554 = vtanh.pop %v1553
    %1556 = vrot.lane.b32.xlu0 %v1554, 64
    %v1557 = vpop.permute.xlu0 %1556
    %v1559 = vmul.f32 %v1537, %v1557
    %v1560 = vsel %vm411, %v1559, 0.0
    %v1561 = vsel %vm411, %v1553, 0.0
    %1563 = vrot.lane.b32.xlu0 %v1560, 32
    %v1564 = vpop.permute.xlu0 %1563
    %1566 = vst.msk [vmem:[#allocation2] sm:$0xff] %vm307, %v1564
    %1568 = vrot.lane.b32.xlu0 %v1561, 96
    %v1569 = vpop.permute.xlu0 %1568
    %1571 = vst.msk [vmem:[#allocation4] sm:$0xff] %vm307, %v1569
    %v1572 = vsel %vm307, %v1564, 0.0
    %1573 = vadd.xlane.f32.xlu0 %v1572
    %v1574 = vpop.xlane.xlu0 %1573
    %v1575 = vmul.f32 %v1574, 0.03125
    %v1576 = vsub.f32 %v1560, %v1575
    %v1577 = vmul.f32 %v1576, %v1576
    %1579 = vrot.lane.b32.xlu0 %v1577, 32
    %v1580 = vpop.permute.xlu0 %1579
    %v1582 = vsel %vm307, %v1580, 0.0
    %1583 = vadd.xlane.f32.xlu0 %v1582
    %v1584 = vpop.xlane.xlu0 %1583
    %v1585 = vmul.f32 %v1584, 0.03125
    %v1586 = vadd.f32 %v1585, 1e-05
    %v1587 = vrsqrt.pop %v1586
    %v1588 = vmul.f32 %v1576, %v1587
    %v1589 = vld [vmem:[#allocation13] sm:$0x1]
    %v1591 = vlaneseq
    %v1592 = vshrl.u32 %v1591, 7
    %v1593 = vsub.s32 0, %v1592
    %v1594 = vrot.slane %v1589, %v1593
    %1595 = vrot.lane.b32.xlu0 %v1594, 96
    %v1596 = vpop.permute.xlu0 %1595
    %v1598 = vmul.f32 %v1588, %v1596
    %v1599 = vld [vmem:[#allocation14] sm:$0x1]
    %v1601 = vlaneseq
    %v1602 = vshrl.u32 %v1601, 7
    %v1603 = vsub.s32 0, %v1602
    %v1604 = vrot.slane %v1599, %v1603
    %1605 = vrot.lane.b32.xlu0 %v1604, 96
    %v1606 = vpop.permute.xlu0 %1605
    %v1608 = vadd.f32 %v1598, %v1606
    %v1609 = vsel %vm411, %v1608, 0.0
    %1611 = vrot.lane.b32.xlu0 %v1609, 32
    %v1612 = vpop.permute.xlu0 %1611
    %1614 = vst.msk [vmem:[#allocation6 + $0x38] sm:$0xff] %vm307, %v1612
    %v1615 = vld [vmem:[#allocation6] sm:$0xff]
    %v1616 = vld [vmem:[#allocation6 + $0x8] sm:$0xff]
    %v1617 = vld [vmem:[#allocation6 + $0x10] sm:$0xff]
    %v1618 = vld [vmem:[#allocation6 + $0x18] sm:$0xff]
    %v1619 = vld [vmem:[#allocation6 + $0x20] sm:$0xff]
    %v1620 = vld [vmem:[#allocation6 + $0x28] sm:$0xff]
    %v1621 = vld [vmem:[#allocation6 + $0x30] sm:$0xff]
    %v1622 = vld [vmem:[#allocation6 + $0x38] sm:$0xff]
    %v1623 = vld [vmem:[%s8] sm:$0xff]
    %v1624 = vld [vmem:[%s8 + $0x8] sm:$0xff]
    %v1625 = vld [vmem:[%s8 + $0x10] sm:$0xff]
    %v1626 = vld [vmem:[%s8 + $0x18] sm:$0xff]
    %v1627 = vld [vmem:[%s10] sm:$0x1]
    %v1629 = vlaneseq
    %v1630 = vshrl.u32 %v1629, 7
    %v1631 = vsub.s32 0, %v1630
    %v1632 = vrot.slane %v1627, %v1631
    %v1635 = vsel %vm307, %v1615, 0
    %v1638 = vsel %vm307, %v1616, 0
    %v1641 = vsel %vm307, %v1617, 0
    %v1644 = vsel %vm307, %v1618, 0
    %v1647 = vsel %vm307, %v1619, 0
    %v1650 = vsel %vm307, %v1620, 0
    %v1653 = vsel %vm307, %v1621, 0
    %v1656 = vsel %vm307, %v1622, 0
    %1658 = vmatprep.subr.mxu0 0.0
    %1659 = vmatpush1.msra.mxu0 0.0
    %1660 = vmatprep.subr.mxu0 0.0
    %1661 = vmatpush1.msra.mxu0 0.0
    %1662 = vmatprep.subr.mxu0 0.0
    %1663 = vmatpush1.msra.mxu0 0.0
    %1664 = vmatprep.subr.mxu0 0.0
    %1665 = vmatpush1.msra.mxu0 0.0
    %1666 = vmatprep.subr.mxu0 0.0
    %1667 = vmatpush1.msra.mxu0 0.0
    %1668 = vmatprep.subr.mxu0 0.0
    %1669 = vmatpush1.msra.mxu0 0.0
    %1670 = vmatprep.subr.mxu0 0.0
    %1671 = vmatpush1.msra.mxu0 0.0
    %1672 = vmatprep.subr.mxu0 0.0
    %1673 = vmatpush1.msra.mxu0 0.0
    %1674 = vmatprep.subr.mxu0 0.0
    %1675 = vmatpush1.msra.mxu0 0.0
    %1676 = vmatprep.subr.mxu0 0.0
    %1677 = vmatpush1.msra.mxu0 0.0
    %1678 = vmatprep.subr.mxu0 0.0
    %1679 = vmatpush1.msra.mxu0 0.0
    %1680 = vmatprep.subr.mxu0 0.0
    %1681 = vmatpush1.msra.mxu0 0.0
    %1682 = vmatprep.subr.mxu0 0.0
    %1683 = vmatpush1.msra.mxu0 %v1626
    %1684 = vmatprep.subr.mxu0 0.0
    %1685 = vmatpush1.msra.mxu0 %v1625
    %1686 = vmatprep.subr.mxu0 0.0
    %1687 = vmatpush1.msra.mxu0 %v1624
    %1688 = vmatprep.subr.mxu0 0.0
    %1689 = vmatpush1.msra.mxu0 %v1623
    %1690 = vmatprep.subr.mxu0 0.0
    %1691 = vmatpush2.msra.mxu0 0.0
    %1692 = vmatprep.subr.mxu0 0.0
    %1693 = vmatpush2.msra.mxu0 0.0
    %1694 = vmatprep.subr.mxu0 0.0
    %1695 = vmatpush2.msra.mxu0 0.0
    %1696 = vmatprep.subr.mxu0 0.0
    %1697 = vmatpush2.msra.mxu0 0.0
    %1698 = vmatprep.subr.mxu0 0.0
    %1699 = vmatpush2.msra.mxu0 0.0
    %1700 = vmatprep.subr.mxu0 0.0
    %1701 = vmatpush2.msra.mxu0 0.0
    %1702 = vmatprep.subr.mxu0 0.0
    %1703 = vmatpush2.msra.mxu0 0.0
    %1704 = vmatprep.subr.mxu0 0.0
    %1705 = vmatpush2.msra.mxu0 0.0
    %1706 = vmatprep.subr.mxu0 0.0
    %1707 = vmatpush2.msra.mxu0 0.0
    %1708 = vmatprep.subr.mxu0 0.0
    %1709 = vmatpush2.msra.mxu0 0.0
    %1710 = vmatprep.subr.mxu0 0.0
    %1711 = vmatpush2.msra.mxu0 0.0
    %1712 = vmatprep.subr.mxu0 0.0
    %1713 = vmatpush2.msra.mxu0 0.0
    %1714 = vmatprep.subr.mxu0 0.0
    %1715 = vmatpush2.msra.mxu0 0.0
    %1716 = vmatprep.subr.mxu0 0.0
    %1717 = vmatpush2.msra.mxu0 0.0
    %1718 = vmatprep.subr.mxu0 0.0
    %1719 = vmatpush2.msra.mxu0 0.0
    %1720 = vmatprep.subr.mxu0 0.0
    %1721 = vmatpush2.msra.mxu0 0.0
    %1722 = vmatprep.mubr.f32.mxu0 0.0
    %1723 = vmatmul.mubr.f32.gmra.mxu0 %v1635
    %v1724 = vpop.f32.mrf.mxu0
    %v1725 = vadd.f32 %v1632, %v1724
    %v1726 = vpop.f32.mrf.mxu0
    %1727 = vmatprep.mubr.f32.mxu0 0.0
    %1728 = vmatmul.mubr.f32.gmra.mxu0 %v1638
    %v1729 = vpop.f32.mrf.mxu0
    %v1730 = vadd.f32 %v1632, %v1729
    %v1731 = vpop.f32.mrf.mxu0
    %1732 = vmatprep.mubr.f32.mxu0 0.0
    %1733 = vmatmul.mubr.f32.gmra.mxu0 %v1641
    %v1734 = vpop.f32.mrf.mxu0
    %v1735 = vadd.f32 %v1632, %v1734
    %v1736 = vpop.f32.mrf.mxu0
    %1737 = vmatprep.mubr.f32.mxu0 0.0
    %1738 = vmatmul.mubr.f32.gmra.mxu0 %v1644
    %v1739 = vpop.f32.mrf.mxu0
    %v1740 = vadd.f32 %v1632, %v1739
    %v1741 = vpop.f32.mrf.mxu0
    %1742 = vmatprep.mubr.f32.mxu0 0.0
    %1743 = vmatmul.mubr.f32.gmra.mxu0 %v1647
    %v1744 = vpop.f32.mrf.mxu0
    %v1745 = vadd.f32 %v1632, %v1744
    %v1746 = vpop.f32.mrf.mxu0
    %1747 = vmatprep.mubr.f32.mxu0 0.0
    %1748 = vmatmul.mubr.f32.gmra.mxu0 %v1650
    %v1749 = vpop.f32.mrf.mxu0
    %v1750 = vadd.f32 %v1632, %v1749
    %v1751 = vpop.f32.mrf.mxu0
    %1752 = vmatprep.mubr.f32.mxu0 0.0
    %1753 = vmatmul.mubr.f32.gmra.mxu0 %v1653
    %v1754 = vpop.f32.mrf.mxu0
    %v1755 = vadd.f32 %v1632, %v1754
    %v1756 = vpop.f32.mrf.mxu0
    %1757 = vmatprep.mubr.f32.mxu0 0.0
    %1758 = vmatmul.mubr.f32.gmra.mxu0 %v1656
    %v1759 = vpop.f32.mrf.mxu0
    %v1760 = vadd.f32 %v1632, %v1759
    %v1761 = vpop.f32.mrf.mxu0
    %1762 = vdwg.mxu0
    %1763 = vst [vmem:[#allocation7] sm:$0xff] %v1725
    %1764 = vst [vmem:[#allocation7 + $0x8] sm:$0xff] %v1730
    %1765 = vst [vmem:[#allocation7 + $0x10] sm:$0xff] %v1735
    %1766 = vst [vmem:[#allocation7 + $0x18] sm:$0xff] %v1740
    %1767 = vst [vmem:[#allocation7 + $0x20] sm:$0xff] %v1745
    %1768 = vst [vmem:[#allocation7 + $0x28] sm:$0xff] %v1750
    %1769 = vst [vmem:[#allocation7 + $0x30] sm:$0xff] %v1755
    %1770 = vst [vmem:[#allocation7 + $0x38] sm:$0xff] %v1760
    %v1771 = vld [vmem:[#allocation7] sm:$0xff]
    %v1772 = vld [vmem:[#allocation3] sm:$0xff]
    %v1773 = vld [vmem:[#allocation5] sm:$0xff]
    %v1774 = vld [vmem:[#allocation16] sm:$0xff]
    %v1775 = vld [vmem:[#allocation16 + $0x8] sm:$0xff]
    %v1776 = vld [vmem:[#allocation16 + $0x10] sm:$0xff]
    %v1777 = vld [vmem:[#allocation16 + $0x18] sm:$0xff]
    %v1779 = vsel %vm307, %v1772, 0
    %1781 = vmatprep.subr.mxu0 0.0
    %1782 = vmatpush1.msra.mxu0 0.0
    %1783 = vmatprep.subr.mxu0 0.0
    %1784 = vmatpush1.msra.mxu0 0.0
    %1785 = vmatprep.subr.mxu0 0.0
    %1786 = vmatpush1.msra.mxu0 0.0
    %1787 = vmatprep.subr.mxu0 0.0
    %1788 = vmatpush1.msra.mxu0 0.0
    %1789 = vmatprep.subr.mxu0 0.0
    %1790 = vmatpush1.msra.mxu0 0.0
    %1791 = vmatprep.subr.mxu0 0.0
    %1792 = vmatpush1.msra.mxu0 0.0
    %1793 = vmatprep.subr.mxu0 0.0
    %1794 = vmatpush1.msra.mxu0 0.0
    %1795 = vmatprep.subr.mxu0 0.0
    %1796 = vmatpush1.msra.mxu0 0.0
    %1797 = vmatprep.subr.mxu0 0.0
    %1798 = vmatpush1.msra.mxu0 0.0
    %1799 = vmatprep.subr.mxu0 0.0
    %1800 = vmatpush1.msra.mxu0 0.0
    %1801 = vmatprep.subr.mxu0 0.0
    %1802 = vmatpush1.msra.mxu0 0.0
    %1803 = vmatprep.subr.mxu0 0.0
    %1804 = vmatpush1.msra.mxu0 0.0
    %1805 = vmatprep.subr.mxu0 0.0
    %1806 = vmatpush1.msra.mxu0 %v1777
    %1807 = vmatprep.subr.mxu0 0.0
    %1808 = vmatpush1.msra.mxu0 %v1776
    %1809 = vmatprep.subr.mxu0 0.0
    %1810 = vmatpush1.msra.mxu0 %v1775
    %1811 = vmatprep.subr.mxu0 0.0
    %1812 = vmatpush1.msra.mxu0 %v1774
    %1813 = vmatprep.subr.mxu0 0.0
    %1814 = vmatpush2.msra.mxu0 0.0
    %1815 = vmatprep.subr.mxu0 0.0
    %1816 = vmatpush2.msra.mxu0 0.0
    %1817 = vmatprep.subr.mxu0 0.0
    %1818 = vmatpush2.msra.mxu0 0.0
    %1819 = vmatprep.subr.mxu0 0.0
    %1820 = vmatpush2.msra.mxu0 0.0
    %1821 = vmatprep.subr.mxu0 0.0
    %1822 = vmatpush2.msra.mxu0 0.0
    %1823 = vmatprep.subr.mxu0 0.0
    %1824 = vmatpush2.msra.mxu0 0.0
    %1825 = vmatprep.subr.mxu0 0.0
    %1826 = vmatpush2.msra.mxu0 0.0
    %1827 = vmatprep.subr.mxu0 0.0
    %1828 = vmatpush2.msra.mxu0 0.0
    %1829 = vmatprep.subr.mxu0 0.0
    %1830 = vmatpush2.msra.mxu0 0.0
    %1831 = vmatprep.subr.mxu0 0.0
    %1832 = vmatpush2.msra.mxu0 0.0
    %1833 = vmatprep.subr.mxu0 0.0
    %1834 = vmatpush2.msra.mxu0 0.0
    %1835 = vmatprep.subr.mxu0 0.0
    %1836 = vmatpush2.msra.mxu0 0.0
    %1837 = vmatprep.subr.mxu0 0.0
    %1838 = vmatpush2.msra.mxu0 0.0
    %1839 = vmatprep.subr.mxu0 0.0
    %1840 = vmatpush2.msra.mxu0 0.0
    %1841 = vmatprep.subr.mxu0 0.0
    %1842 = vmatpush2.msra.mxu0 0.0
    %1843 = vmatprep.subr.mxu0 0.0
    %1844 = vmatpush2.msra.mxu0 0.0
    %1845 = vmatprep.mubr.f32.mxu0 0.0
    %1846 = vmatmul.mubr.f32.gmra.mxu0 %v1779
    %v1847 = vpop.f32.mrf.mxu0
    %v1848 = vadd.f32 0.0, %v1847
    %v1849 = vpop.f32.mrf.mxu0
    %1850 = vdwg.mxu0
    %v1851 = vadd.f32 %v1771, %v1848
    %v1852 = vxor.u32 %v1851, 2147483648
    %v1853 = vmul.f32 %v1852, 1.442695
    %v1854 = vpow.pop %v1853
    %v1855 = vadd.f32 %v1854, 1.0
    %v1856 = vrcp.pop %v1855
    %v1857 = vmul.f32 1.0, %v1856
    %v1858 = vtanh.pop %v1851
    %1860 = vrot.lane.b32.xlu0 %v1773, 32
    %v1861 = vpop.permute.xlu0 %1860
    %v1863 = vmul.f32 %v1857, %v1861
    %1865 = vrot.lane.b32.xlu0 %v1858, 64
    %v1866 = vpop.permute.xlu0 %1865
    %v1868 = vmul.f32 %v1857, %v1866
    %1870 = vrot.lane.b32.xlu0 %v1868, 32
    %v1871 = vpop.permute.xlu0 %1870
    %v1873 = vadd.f32 %v1863, %v1871
    %v1874 = vtanh.pop %v1873
    %1876 = vrot.lane.b32.xlu0 %v1874, 64
    %v1877 = vpop.permute.xlu0 %1876
    %v1879 = vmul.f32 %v1857, %v1877
    %v1880 = vsel %vm411, %v1879, 0.0
    %v1881 = vsel %vm411, %v1873, 0.0
    %1883 = vrot.lane.b32.xlu0 %v1880, 32
    %v1884 = vpop.permute.xlu0 %1883
    %1886 = vst.msk [vmem:[#allocation3] sm:$0xff] %vm307, %v1884
    %1888 = vrot.lane.b32.xlu0 %v1881, 96
    %v1889 = vpop.permute.xlu0 %1888
    %1891 = vst.msk [vmem:[#allocation5] sm:$0xff] %vm307, %v1889
    %v1892 = vsel %vm307, %v1884, 0.0
    %1893 = vadd.xlane.f32.xlu0 %v1892
    %v1894 = vpop.xlane.xlu0 %1893
    %v1895 = vmul.f32 %v1894, 0.03125
    %v1896 = vsub.f32 %v1880, %v1895
    %v1897 = vmul.f32 %v1896, %v1896
    %1899 = vrot.lane.b32.xlu0 %v1897, 32
    %v1900 = vpop.permute.xlu0 %1899
    %v1902 = vsel %vm307, %v1900, 0.0
    %1903 = vadd.xlane.f32.xlu0 %v1902
    %v1904 = vpop.xlane.xlu0 %1903
    %v1905 = vmul.f32 %v1904, 0.03125
    %v1906 = vadd.f32 %v1905, 1e-05
    %v1907 = vrsqrt.pop %v1906
    %v1908 = vmul.f32 %v1896, %v1907
    %v1909 = vld [vmem:[%s13] sm:$0x1]
    %v1911 = vlaneseq
    %v1912 = vshrl.u32 %v1911, 7
    %v1913 = vsub.s32 0, %v1912
    %v1914 = vrot.slane %v1909, %v1913
    %1915 = vrot.lane.b32.xlu0 %v1914, 96
    %v1916 = vpop.permute.xlu0 %1915
    %v1918 = vmul.f32 %v1908, %v1916
    %v1919 = vld [vmem:[%s14] sm:$0x1]
    %v1921 = vlaneseq
    %v1922 = vshrl.u32 %v1921, 7
    %v1923 = vsub.s32 0, %v1922
    %v1924 = vrot.slane %v1919, %v1923
    %1925 = vrot.lane.b32.xlu0 %v1924, 96
    %v1926 = vpop.permute.xlu0 %1925
    %v1928 = vadd.f32 %v1918, %v1926
    %v1929 = vsel %vm411, %v1928, 0.0
    %1931 = vrot.lane.b32.xlu0 %v1929, 32
    %v1932 = vpop.permute.xlu0 %1931
    %1934 = vst.msk [vmem:[#allocation19] sm:$0xff] %vm307, %v1932
    %v1935 = vld [vmem:[#allocation7 + $0x8] sm:$0xff]
    %v1936 = vld [vmem:[#allocation3] sm:$0xff]
    %v1937 = vld [vmem:[#allocation5] sm:$0xff]
    %v1938 = vld [vmem:[#allocation16] sm:$0xff]
    %v1939 = vld [vmem:[#allocation16 + $0x8] sm:$0xff]
    %v1940 = vld [vmem:[#allocation16 + $0x10] sm:$0xff]
    %v1941 = vld [vmem:[#allocation16 + $0x18] sm:$0xff]
    %v1943 = vsel %vm307, %v1936, 0
    %1945 = vmatprep.subr.mxu0 0.0
    %1946 = vmatpush1.msra.mxu0 0.0
    %1947 = vmatprep.subr.mxu0 0.0
    %1948 = vmatpush1.msra.mxu0 0.0
    %1949 = vmatprep.subr.mxu0 0.0
    %1950 = vmatpush1.msra.mxu0 0.0
    %1951 = vmatprep.subr.mxu0 0.0
    %1952 = vmatpush1.msra.mxu0 0.0
    %1953 = vmatprep.subr.mxu0 0.0
    %1954 = vmatpush1.msra.mxu0 0.0
    %1955 = vmatprep.subr.mxu0 0.0
    %1956 = vmatpush1.msra.mxu0 0.0
    %1957 = vmatprep.subr.mxu0 0.0
    %1958 = vmatpush1.msra.mxu0 0.0
    %1959 = vmatprep.subr.mxu0 0.0
    %1960 = vmatpush1.msra.mxu0 0.0
    %1961 = vmatprep.subr.mxu0 0.0
    %1962 = vmatpush1.msra.mxu0 0.0
    %1963 = vmatprep.subr.mxu0 0.0
    %1964 = vmatpush1.msra.mxu0 0.0
    %1965 = vmatprep.subr.mxu0 0.0
    %1966 = vmatpush1.msra.mxu0 0.0
    %1967 = vmatprep.subr.mxu0 0.0
    %1968 = vmatpush1.msra.mxu0 0.0
    %1969 = vmatprep.subr.mxu0 0.0
    %1970 = vmatpush1.msra.mxu0 %v1941
    %1971 = vmatprep.subr.mxu0 0.0
    %1972 = vmatpush1.msra.mxu0 %v1940
    %1973 = vmatprep.subr.mxu0 0.0
    %1974 = vmatpush1.msra.mxu0 %v1939
    %1975 = vmatprep.subr.mxu0 0.0
    %1976 = vmatpush1.msra.mxu0 %v1938
    %1977 = vmatprep.subr.mxu0 0.0
    %1978 = vmatpush2.msra.mxu0 0.0
    %1979 = vmatprep.subr.mxu0 0.0
    %1980 = vmatpush2.msra.mxu0 0.0
    %1981 = vmatprep.subr.mxu0 0.0
    %1982 = vmatpush2.msra.mxu0 0.0
    %1983 = vmatprep.subr.mxu0 0.0
    %1984 = vmatpush2.msra.mxu0 0.0
    %1985 = vmatprep.subr.mxu0 0.0
    %1986 = vmatpush2.msra.mxu0 0.0
    %1987 = vmatprep.subr.mxu0 0.0
    %1988 = vmatpush2.msra.mxu0 0.0
    %1989 = vmatprep.subr.mxu0 0.0
    %1990 = vmatpush2.msra.mxu0 0.0
    %1991 = vmatprep.subr.mxu0 0.0
    %1992 = vmatpush2.msra.mxu0 0.0
    %1993 = vmatprep.subr.mxu0 0.0
    %1994 = vmatpush2.msra.mxu0 0.0
    %1995 = vmatprep.subr.mxu0 0.0
    %1996 = vmatpush2.msra.mxu0 0.0
    %1997 = vmatprep.subr.mxu0 0.0
    %1998 = vmatpush2.msra.mxu0 0.0
    %1999 = vmatprep.subr.mxu0 0.0
    %2000 = vmatpush2.msra.mxu0 0.0
    %2001 = vmatprep.subr.mxu0 0.0
    %2002 = vmatpush2.msra.mxu0 0.0
    %2003 = vmatprep.subr.mxu0 0.0
    %2004 = vmatpush2.msra.mxu0 0.0
    %2005 = vmatprep.subr.mxu0 0.0
    %2006 = vmatpush2.msra.mxu0 0.0
    %2007 = vmatprep.subr.mxu0 0.0
    %2008 = vmatpush2.msra.mxu0 0.0
    %2009 = vmatprep.mubr.f32.mxu0 0.0
    %2010 = vmatmul.mubr.f32.gmra.mxu0 %v1943
    %v2011 = vpop.f32.mrf.mxu0
    %v2012 = vadd.f32 0.0, %v2011
    %v2013 = vpop.f32.mrf.mxu0
    %2014 = vdwg.mxu0
    %v2015 = vadd.f32 %v1935, %v2012
    %v2016 = vxor.u32 %v2015, 2147483648
    %v2017 = vmul.f32 %v2016, 1.442695
    %v2018 = vpow.pop %v2017
    %v2019 = vadd.f32 %v2018, 1.0
    %v2020 = vrcp.pop %v2019
    %v2021 = vmul.f32 1.0, %v2020
    %v2022 = vtanh.pop %v2015
    %2024 = vrot.lane.b32.xlu0 %v1937, 32
    %v2025 = vpop.permute.xlu0 %2024
    %v2027 = vmul.f32 %v2021, %v2025
    %2029 = vrot.lane.b32.xlu0 %v2022, 64
    %v2030 = vpop.permute.xlu0 %2029
    %v2032 = vmul.f32 %v2021, %v2030
    %2034 = vrot.lane.b32.xlu0 %v2032, 32
    %v2035 = vpop.permute.xlu0 %2034
    %v2037 = vadd.f32 %v2027, %v2035
    %v2038 = vtanh.pop %v2037
    %2040 = vrot.lane.b32.xlu0 %v2038, 64
    %v2041 = vpop.permute.xlu0 %2040
    %v2043 = vmul.f32 %v2021, %v2041
    %v2044 = vsel %vm411, %v2043, 0.0
    %v2045 = vsel %vm411, %v2037, 0.0
    %2047 = vrot.lane.b32.xlu0 %v2044, 32
    %v2048 = vpop.permute.xlu0 %2047
    %2050 = vst.msk [vmem:[#allocation3] sm:$0xff] %vm307, %v2048
    %2052 = vrot.lane.b32.xlu0 %v2045, 96
    %v2053 = vpop.permute.xlu0 %2052
    %2055 = vst.msk [vmem:[#allocation5] sm:$0xff] %vm307, %v2053
    %v2056 = vsel %vm307, %v2048, 0.0
    %2057 = vadd.xlane.f32.xlu0 %v2056
    %v2058 = vpop.xlane.xlu0 %2057
    %v2059 = vmul.f32 %v2058, 0.03125
    %v2060 = vsub.f32 %v2044, %v2059
    %v2061 = vmul.f32 %v2060, %v2060
    %2063 = vrot.lane.b32.xlu0 %v2061, 32
    %v2064 = vpop.permute.xlu0 %2063
    %v2066 = vsel %vm307, %v2064, 0.0
    %2067 = vadd.xlane.f32.xlu0 %v2066
    %v2068 = vpop.xlane.xlu0 %2067
    %v2069 = vmul.f32 %v2068, 0.03125
    %v2070 = vadd.f32 %v2069, 1e-05
    %v2071 = vrsqrt.pop %v2070
    %v2072 = vmul.f32 %v2060, %v2071
    %v2073 = vld [vmem:[%s13] sm:$0x1]
    %v2075 = vlaneseq
    %v2076 = vshrl.u32 %v2075, 7
    %v2077 = vsub.s32 0, %v2076
    %v2078 = vrot.slane %v2073, %v2077
    %2079 = vrot.lane.b32.xlu0 %v2078, 96
    %v2080 = vpop.permute.xlu0 %2079
    %v2082 = vmul.f32 %v2072, %v2080
    %v2083 = vld [vmem:[%s14] sm:$0x1]
    %v2085 = vlaneseq
    %v2086 = vshrl.u32 %v2085, 7
    %v2087 = vsub.s32 0, %v2086
    %v2088 = vrot.slane %v2083, %v2087
    %2089 = vrot.lane.b32.xlu0 %v2088, 96
    %v2090 = vpop.permute.xlu0 %2089
    %v2092 = vadd.f32 %v2082, %v2090
    %v2093 = vsel %vm411, %v2092, 0.0
    %2095 = vrot.lane.b32.xlu0 %v2093, 32
    %v2096 = vpop.permute.xlu0 %2095
    %s2098 = scalar_lea.vmem [#allocation19], 8
    %2099 = vst.msk [vmem:[%s2098] sm:$0xff] %vm307, %v2096
    %v2100 = vld [vmem:[#allocation7 + $0x10] sm:$0xff]
    %v2101 = vld [vmem:[#allocation3] sm:$0xff]
    %v2102 = vld [vmem:[#allocation5] sm:$0xff]
    %v2103 = vld [vmem:[#allocation16] sm:$0xff]
    %v2104 = vld [vmem:[#allocation16 + $0x8] sm:$0xff]
    %v2105 = vld [vmem:[#allocation16 + $0x10] sm:$0xff]
    %v2106 = vld [vmem:[#allocation16 + $0x18] sm:$0xff]
    %v2108 = vsel %vm307, %v2101, 0
    %2110 = vmatprep.subr.mxu0 0.0
    %2111 = vmatpush1.msra.mxu0 0.0
    %2112 = vmatprep.subr.mxu0 0.0
    %2113 = vmatpush1.msra.mxu0 0.0
    %2114 = vmatprep.subr.mxu0 0.0
    %2115 = vmatpush1.msra.mxu0 0.0
    %2116 = vmatprep.subr.mxu0 0.0
    %2117 = vmatpush1.msra.mxu0 0.0
    %2118 = vmatprep.subr.mxu0 0.0
    %2119 = vmatpush1.msra.mxu0 0.0
    %2120 = vmatprep.subr.mxu0 0.0
    %2121 = vmatpush1.msra.mxu0 0.0
    %2122 = vmatprep.subr.mxu0 0.0
    %2123 = vmatpush1.msra.mxu0 0.0
    %2124 = vmatprep.subr.mxu0 0.0
    %2125 = vmatpush1.msra.mxu0 0.0
    %2126 = vmatprep.subr.mxu0 0.0
    %2127 = vmatpush1.msra.mxu0 0.0
    %2128 = vmatprep.subr.mxu0 0.0
    %2129 = vmatpush1.msra.mxu0 0.0
    %2130 = vmatprep.subr.mxu0 0.0
    %2131 = vmatpush1.msra.mxu0 0.0
    %2132 = vmatprep.subr.mxu0 0.0
    %2133 = vmatpush1.msra.mxu0 0.0
    %2134 = vmatprep.subr.mxu0 0.0
    %2135 = vmatpush1.msra.mxu0 %v2106
    %2136 = vmatprep.subr.mxu0 0.0
    %2137 = vmatpush1.msra.mxu0 %v2105
    %2138 = vmatprep.subr.mxu0 0.0
    %2139 = vmatpush1.msra.mxu0 %v2104
    %2140 = vmatprep.subr.mxu0 0.0
    %2141 = vmatpush1.msra.mxu0 %v2103
    %2142 = vmatprep.subr.mxu0 0.0
    %2143 = vmatpush2.msra.mxu0 0.0
    %2144 = vmatprep.subr.mxu0 0.0
    %2145 = vmatpush2.msra.mxu0 0.0
    %2146 = vmatprep.subr.mxu0 0.0
    %2147 = vmatpush2.msra.mxu0 0.0
    %2148 = vmatprep.subr.mxu0 0.0
    %2149 = vmatpush2.msra.mxu0 0.0
    %2150 = vmatprep.subr.mxu0 0.0
    %2151 = vmatpush2.msra.mxu0 0.0
    %2152 = vmatprep.subr.mxu0 0.0
    %2153 = vmatpush2.msra.mxu0 0.0
    %2154 = vmatprep.subr.mxu0 0.0
    %2155 = vmatpush2.msra.mxu0 0.0
    %2156 = vmatprep.subr.mxu0 0.0
    %2157 = vmatpush2.msra.mxu0 0.0
    %2158 = vmatprep.subr.mxu0 0.0
    %2159 = vmatpush2.msra.mxu0 0.0
    %2160 = vmatprep.subr.mxu0 0.0
    %2161 = vmatpush2.msra.mxu0 0.0
    %2162 = vmatprep.subr.mxu0 0.0
    %2163 = vmatpush2.msra.mxu0 0.0
    %2164 = vmatprep.subr.mxu0 0.0
    %2165 = vmatpush2.msra.mxu0 0.0
    %2166 = vmatprep.subr.mxu0 0.0
    %2167 = vmatpush2.msra.mxu0 0.0
    %2168 = vmatprep.subr.mxu0 0.0
    %2169 = vmatpush2.msra.mxu0 0.0
    %2170 = vmatprep.subr.mxu0 0.0
    %2171 = vmatpush2.msra.mxu0 0.0
    %2172 = vmatprep.subr.mxu0 0.0
    %2173 = vmatpush2.msra.mxu0 0.0
    %2174 = vmatprep.mubr.f32.mxu0 0.0
    %2175 = vmatmul.mubr.f32.gmra.mxu0 %v2108
    %v2176 = vpop.f32.mrf.mxu0
    %v2177 = vadd.f32 0.0, %v2176
    %v2178 = vpop.f32.mrf.mxu0
    %2179 = vdwg.mxu0
    %v2180 = vadd.f32 %v2100, %v2177
    %v2181 = vxor.u32 %v2180, 2147483648
    %v2182 = vmul.f32 %v2181, 1.442695
    %v2183 = vpow.pop %v2182
    %v2184 = vadd.f32 %v2183, 1.0
    %v2185 = vrcp.pop %v2184
    %v2186 = vmul.f32 1.0, %v2185
    %v2187 = vtanh.pop %v2180
    %2189 = vrot.lane.b32.xlu0 %v2102, 32
    %v2190 = vpop.permute.xlu0 %2189
    %v2192 = vmul.f32 %v2186, %v2190
    %2194 = vrot.lane.b32.xlu0 %v2187, 64
    %v2195 = vpop.permute.xlu0 %2194
    %v2197 = vmul.f32 %v2186, %v2195
    %2199 = vrot.lane.b32.xlu0 %v2197, 32
    %v2200 = vpop.permute.xlu0 %2199
    %v2202 = vadd.f32 %v2192, %v2200
    %v2203 = vtanh.pop %v2202
    %2205 = vrot.lane.b32.xlu0 %v2203, 64
    %v2206 = vpop.permute.xlu0 %2205
    %v2208 = vmul.f32 %v2186, %v2206
    %v2209 = vsel %vm411, %v2208, 0.0
    %v2210 = vsel %vm411, %v2202, 0.0
    %2212 = vrot.lane.b32.xlu0 %v2209, 32
    %v2213 = vpop.permute.xlu0 %2212
    %2215 = vst.msk [vmem:[#allocation3] sm:$0xff] %vm307, %v2213
    %2217 = vrot.lane.b32.xlu0 %v2210, 96
    %v2218 = vpop.permute.xlu0 %2217
    %2220 = vst.msk [vmem:[#allocation5] sm:$0xff] %vm307, %v2218
    %v2221 = vsel %vm307, %v2213, 0.0
    %2222 = vadd.xlane.f32.xlu0 %v2221
    %v2223 = vpop.xlane.xlu0 %2222
    %v2224 = vmul.f32 %v2223, 0.03125
    %v2225 = vsub.f32 %v2209, %v2224
    %v2226 = vmul.f32 %v2225, %v2225
    %2228 = vrot.lane.b32.xlu0 %v2226, 32
    %v2229 = vpop.permute.xlu0 %2228
    %v2231 = vsel %vm307, %v2229, 0.0
    %2232 = vadd.xlane.f32.xlu0 %v2231
    %v2233 = vpop.xlane.xlu0 %2232
    %v2234 = vmul.f32 %v2233, 0.03125
    %v2235 = vadd.f32 %v2234, 1e-05
    %v2236 = vrsqrt.pop %v2235
    %v2237 = vmul.f32 %v2225, %v2236
    %v2238 = vld [vmem:[%s13] sm:$0x1]
    %v2240 = vlaneseq
    %v2241 = vshrl.u32 %v2240, 7
    %v2242 = vsub.s32 0, %v2241
    %v2243 = vrot.slane %v2238, %v2242
    %2244 = vrot.lane.b32.xlu0 %v2243, 96
    %v2245 = vpop.permute.xlu0 %2244
    %v2247 = vmul.f32 %v2237, %v2245
    %v2248 = vld [vmem:[%s14] sm:$0x1]
    %v2250 = vlaneseq
    %v2251 = vshrl.u32 %v2250, 7
    %v2252 = vsub.s32 0, %v2251
    %v2253 = vrot.slane %v2248, %v2252
    %2254 = vrot.lane.b32.xlu0 %v2253, 96
    %v2255 = vpop.permute.xlu0 %2254
    %v2257 = vadd.f32 %v2247, %v2255
    %v2258 = vsel %vm411, %v2257, 0.0
    %2260 = vrot.lane.b32.xlu0 %v2258, 32
    %v2261 = vpop.permute.xlu0 %2260
    %s2263 = scalar_lea.vmem [#allocation19], 16
    %2264 = vst.msk [vmem:[%s2263] sm:$0xff] %vm307, %v2261
    %v2265 = vld [vmem:[#allocation7 + $0x18] sm:$0xff]
    %v2266 = vld [vmem:[#allocation3] sm:$0xff]
    %v2267 = vld [vmem:[#allocation5] sm:$0xff]
    %v2268 = vld [vmem:[#allocation16] sm:$0xff]
    %v2269 = vld [vmem:[#allocation16 + $0x8] sm:$0xff]
    %v2270 = vld [vmem:[#allocation16 + $0x10] sm:$0xff]
    %v2271 = vld [vmem:[#allocation16 + $0x18] sm:$0xff]
    %v2273 = vsel %vm307, %v2266, 0
    %2275 = vmatprep.subr.mxu0 0.0
    %2276 = vmatpush1.msra.mxu0 0.0
    %2277 = vmatprep.subr.mxu0 0.0
    %2278 = vmatpush1.msra.mxu0 0.0
    %2279 = vmatprep.subr.mxu0 0.0
    %2280 = vmatpush1.msra.mxu0 0.0
    %2281 = vmatprep.subr.mxu0 0.0
    %2282 = vmatpush1.msra.mxu0 0.0
    %2283 = vmatprep.subr.mxu0 0.0
    %2284 = vmatpush1.msra.mxu0 0.0
    %2285 = vmatprep.subr.mxu0 0.0
    %2286 = vmatpush1.msra.mxu0 0.0
    %2287 = vmatprep.subr.mxu0 0.0
    %2288 = vmatpush1.msra.mxu0 0.0
    %2289 = vmatprep.subr.mxu0 0.0
    %2290 = vmatpush1.msra.mxu0 0.0
    %2291 = vmatprep.subr.mxu0 0.0
    %2292 = vmatpush1.msra.mxu0 0.0
    %2293 = vmatprep.subr.mxu0 0.0
    %2294 = vmatpush1.msra.mxu0 0.0
    %2295 = vmatprep.subr.mxu0 0.0
    %2296 = vmatpush1.msra.mxu0 0.0
    %2297 = vmatprep.subr.mxu0 0.0
    %2298 = vmatpush1.msra.mxu0 0.0
    %2299 = vmatprep.subr.mxu0 0.0
    %2300 = vmatpush1.msra.mxu0 %v2271
    %2301 = vmatprep.subr.mxu0 0.0
    %2302 = vmatpush1.msra.mxu0 %v2270
    %2303 = vmatprep.subr.mxu0 0.0
    %2304 = vmatpush1.msra.mxu0 %v2269
    %2305 = vmatprep.subr.mxu0 0.0
    %2306 = vmatpush1.msra.mxu0 %v2268
    %2307 = vmatprep.subr.mxu0 0.0
    %2308 = vmatpush2.msra.mxu0 0.0
    %2309 = vmatprep.subr.mxu0 0.0
    %2310 = vmatpush2.msra.mxu0 0.0
    %2311 = vmatprep.subr.mxu0 0.0
    %2312 = vmatpush2.msra.mxu0 0.0
    %2313 = vmatprep.subr.mxu0 0.0
    %2314 = vmatpush2.msra.mxu0 0.0
    %2315 = vmatprep.subr.mxu0 0.0
    %2316 = vmatpush2.msra.mxu0 0.0
    %2317 = vmatprep.subr.mxu0 0.0
    %2318 = vmatpush2.msra.mxu0 0.0
    %2319 = vmatprep.subr.mxu0 0.0
    %2320 = vmatpush2.msra.mxu0 0.0
    %2321 = vmatprep.subr.mxu0 0.0
    %2322 = vmatpush2.msra.mxu0 0.0
    %2323 = vmatprep.subr.mxu0 0.0
    %2324 = vmatpush2.msra.mxu0 0.0
    %2325 = vmatprep.subr.mxu0 0.0
    %2326 = vmatpush2.msra.mxu0 0.0
    %2327 = vmatprep.subr.mxu0 0.0
    %2328 = vmatpush2.msra.mxu0 0.0
    %2329 = vmatprep.subr.mxu0 0.0
    %2330 = vmatpush2.msra.mxu0 0.0
    %2331 = vmatprep.subr.mxu0 0.0
    %2332 = vmatpush2.msra.mxu0 0.0
    %2333 = vmatprep.subr.mxu0 0.0
    %2334 = vmatpush2.msra.mxu0 0.0
    %2335 = vmatprep.subr.mxu0 0.0
    %2336 = vmatpush2.msra.mxu0 0.0
    %2337 = vmatprep.subr.mxu0 0.0
    %2338 = vmatpush2.msra.mxu0 0.0
    %2339 = vmatprep.mubr.f32.mxu0 0.0
    %2340 = vmatmul.mubr.f32.gmra.mxu0 %v2273
    %v2341 = vpop.f32.mrf.mxu0
    %v2342 = vadd.f32 0.0, %v2341
    %v2343 = vpop.f32.mrf.mxu0
    %2344 = vdwg.mxu0
    %v2345 = vadd.f32 %v2265, %v2342
    %v2346 = vxor.u32 %v2345, 2147483648
    %v2347 = vmul.f32 %v2346, 1.442695
    %v2348 = vpow.pop %v2347
    %v2349 = vadd.f32 %v2348, 1.0
    %v2350 = vrcp.pop %v2349
    %v2351 = vmul.f32 1.0, %v2350
    %v2352 = vtanh.pop %v2345
    %2354 = vrot.lane.b32.xlu0 %v2267, 32
    %v2355 = vpop.permute.xlu0 %2354
    %v2357 = vmul.f32 %v2351, %v2355
    %2359 = vrot.lane.b32.xlu0 %v2352, 64
    %v2360 = vpop.permute.xlu0 %2359
    %v2362 = vmul.f32 %v2351, %v2360
    %2364 = vrot.lane.b32.xlu0 %v2362, 32
    %v2365 = vpop.permute.xlu0 %2364
    %v2367 = vadd.f32 %v2357, %v2365
    %v2368 = vtanh.pop %v2367
    %2370 = vrot.lane.b32.xlu0 %v2368, 64
    %v2371 = vpop.permute.xlu0 %2370
    %v2373 = vmul.f32 %v2351, %v2371
    %v2374 = vsel %vm411, %v2373, 0.0
    %v2375 = vsel %vm411, %v2367, 0.0
    %2377 = vrot.lane.b32.xlu0 %v2374, 32
    %v2378 = vpop.permute.xlu0 %2377
    %2380 = vst.msk [vmem:[#allocation3] sm:$0xff] %vm307, %v2378
    %2382 = vrot.lane.b32.xlu0 %v2375, 96
    %v2383 = vpop.permute.xlu0 %2382
    %2385 = vst.msk [vmem:[#allocation5] sm:$0xff] %vm307, %v2383
    %v2386 = vsel %vm307, %v2378, 0.0
    %2387 = vadd.xlane.f32.xlu0 %v2386
    %v2388 = vpop.xlane.xlu0 %2387
    %v2389 = vmul.f32 %v2388, 0.03125
    %v2390 = vsub.f32 %v2374, %v2389
    %v2391 = vmul.f32 %v2390, %v2390
    %2393 = vrot.lane.b32.xlu0 %v2391, 32
    %v2394 = vpop.permute.xlu0 %2393
    %v2396 = vsel %vm307, %v2394, 0.0
    %2397 = vadd.xlane.f32.xlu0 %v2396
    %v2398 = vpop.xlane.xlu0 %2397
    %v2399 = vmul.f32 %v2398, 0.03125
    %v2400 = vadd.f32 %v2399, 1e-05
    %v2401 = vrsqrt.pop %v2400
    %v2402 = vmul.f32 %v2390, %v2401
    %v2403 = vld [vmem:[%s13] sm:$0x1]
    %v2405 = vlaneseq
    %v2406 = vshrl.u32 %v2405, 7
    %v2407 = vsub.s32 0, %v2406
    %v2408 = vrot.slane %v2403, %v2407
    %2409 = vrot.lane.b32.xlu0 %v2408, 96
    %v2410 = vpop.permute.xlu0 %2409
    %v2412 = vmul.f32 %v2402, %v2410
    %v2413 = vld [vmem:[%s14] sm:$0x1]
    %v2415 = vlaneseq
    %v2416 = vshrl.u32 %v2415, 7
    %v2417 = vsub.s32 0, %v2416
    %v2418 = vrot.slane %v2413, %v2417
    %2419 = vrot.lane.b32.xlu0 %v2418, 96
    %v2420 = vpop.permute.xlu0 %2419
    %v2422 = vadd.f32 %v2412, %v2420
    %v2423 = vsel %vm411, %v2422, 0.0
    %2425 = vrot.lane.b32.xlu0 %v2423, 32
    %v2426 = vpop.permute.xlu0 %2425
    %s2428 = scalar_lea.vmem [#allocation19], 24
    %2429 = vst.msk [vmem:[%s2428] sm:$0xff] %vm307, %v2426
    %v2430 = vld [vmem:[#allocation7 + $0x20] sm:$0xff]
    %v2431 = vld [vmem:[#allocation3] sm:$0xff]
    %v2432 = vld [vmem:[#allocation5] sm:$0xff]
    %v2433 = vld [vmem:[#allocation16] sm:$0xff]
    %v2434 = vld [vmem:[#allocation16 + $0x8] sm:$0xff]
    %v2435 = vld [vmem:[#allocation16 + $0x10] sm:$0xff]
    %v2436 = vld [vmem:[#allocation16 + $0x18] sm:$0xff]
    %v2438 = vsel %vm307, %v2431, 0
    %2440 = vmatprep.subr.mxu0 0.0
    %2441 = vmatpush1.msra.mxu0 0.0
    %2442 = vmatprep.subr.mxu0 0.0
    %2443 = vmatpush1.msra.mxu0 0.0
    %2444 = vmatprep.subr.mxu0 0.0
    %2445 = vmatpush1.msra.mxu0 0.0
    %2446 = vmatprep.subr.mxu0 0.0
    %2447 = vmatpush1.msra.mxu0 0.0
    %2448 = vmatprep.subr.mxu0 0.0
    %2449 = vmatpush1.msra.mxu0 0.0
    %2450 = vmatprep.subr.mxu0 0.0
    %2451 = vmatpush1.msra.mxu0 0.0
    %2452 = vmatprep.subr.mxu0 0.0
    %2453 = vmatpush1.msra.mxu0 0.0
    %2454 = vmatprep.subr.mxu0 0.0
    %2455 = vmatpush1.msra.mxu0 0.0
    %2456 = vmatprep.subr.mxu0 0.0
    %2457 = vmatpush1.msra.mxu0 0.0
    %2458 = vmatprep.subr.mxu0 0.0
    %2459 = vmatpush1.msra.mxu0 0.0
    %2460 = vmatprep.subr.mxu0 0.0
    %2461 = vmatpush1.msra.mxu0 0.0
    %2462 = vmatprep.subr.mxu0 0.0
    %2463 = vmatpush1.msra.mxu0 0.0
    %2464 = vmatprep.subr.mxu0 0.0
    %2465 = vmatpush1.msra.mxu0 %v2436
    %2466 = vmatprep.subr.mxu0 0.0
    %2467 = vmatpush1.msra.mxu0 %v2435
    %2468 = vmatprep.subr.mxu0 0.0
    %2469 = vmatpush1.msra.mxu0 %v2434
    %2470 = vmatprep.subr.mxu0 0.0
    %2471 = vmatpush1.msra.mxu0 %v2433
    %2472 = vmatprep.subr.mxu0 0.0
    %2473 = vmatpush2.msra.mxu0 0.0
    %2474 = vmatprep.subr.mxu0 0.0
    %2475 = vmatpush2.msra.mxu0 0.0
    %2476 = vmatprep.subr.mxu0 0.0
    %2477 = vmatpush2.msra.mxu0 0.0
    %2478 = vmatprep.subr.mxu0 0.0
    %2479 = vmatpush2.msra.mxu0 0.0
    %2480 = vmatprep.subr.mxu0 0.0
    %2481 = vmatpush2.msra.mxu0 0.0
    %2482 = vmatprep.subr.mxu0 0.0
    %2483 = vmatpush2.msra.mxu0 0.0
    %2484 = vmatprep.subr.mxu0 0.0
    %2485 = vmatpush2.msra.mxu0 0.0
    %2486 = vmatprep.subr.mxu0 0.0
    %2487 = vmatpush2.msra.mxu0 0.0
    %2488 = vmatprep.subr.mxu0 0.0
    %2489 = vmatpush2.msra.mxu0 0.0
    %2490 = vmatprep.subr.mxu0 0.0
    %2491 = vmatpush2.msra.mxu0 0.0
    %2492 = vmatprep.subr.mxu0 0.0
    %2493 = vmatpush2.msra.mxu0 0.0
    %2494 = vmatprep.subr.mxu0 0.0
    %2495 = vmatpush2.msra.mxu0 0.0
    %2496 = vmatprep.subr.mxu0 0.0
    %2497 = vmatpush2.msra.mxu0 0.0
    %2498 = vmatprep.subr.mxu0 0.0
    %2499 = vmatpush2.msra.mxu0 0.0
    %2500 = vmatprep.subr.mxu0 0.0
    %2501 = vmatpush2.msra.mxu0 0.0
    %2502 = vmatprep.subr.mxu0 0.0
    %2503 = vmatpush2.msra.mxu0 0.0
    %2504 = vmatprep.mubr.f32.mxu0 0.0
    %2505 = vmatmul.mubr.f32.gmra.mxu0 %v2438
    %v2506 = vpop.f32.mrf.mxu0
    %v2507 = vadd.f32 0.0, %v2506
    %v2508 = vpop.f32.mrf.mxu0
    %2509 = vdwg.mxu0
    %v2510 = vadd.f32 %v2430, %v2507
    %v2511 = vxor.u32 %v2510, 2147483648
    %v2512 = vmul.f32 %v2511, 1.442695
    %v2513 = vpow.pop %v2512
    %v2514 = vadd.f32 %v2513, 1.0
    %v2515 = vrcp.pop %v2514
    %v2516 = vmul.f32 1.0, %v2515
    %v2517 = vtanh.pop %v2510
    %2519 = vrot.lane.b32.xlu0 %v2432, 32
    %v2520 = vpop.permute.xlu0 %2519
    %v2522 = vmul.f32 %v2516, %v2520
    %2524 = vrot.lane.b32.xlu0 %v2517, 64
    %v2525 = vpop.permute.xlu0 %2524
    %v2527 = vmul.f32 %v2516, %v2525
    %2529 = vrot.lane.b32.xlu0 %v2527, 32
    %v2530 = vpop.permute.xlu0 %2529
    %v2532 = vadd.f32 %v2522, %v2530
    %v2533 = vtanh.pop %v2532
    %2535 = vrot.lane.b32.xlu0 %v2533, 64
    %v2536 = vpop.permute.xlu0 %2535
    %v2538 = vmul.f32 %v2516, %v2536
    %v2539 = vsel %vm411, %v2538, 0.0
    %v2540 = vsel %vm411, %v2532, 0.0
    %2542 = vrot.lane.b32.xlu0 %v2539, 32
    %v2543 = vpop.permute.xlu0 %2542
    %2545 = vst.msk [vmem:[#allocation3] sm:$0xff] %vm307, %v2543
    %2547 = vrot.lane.b32.xlu0 %v2540, 96
    %v2548 = vpop.permute.xlu0 %2547
    %2550 = vst.msk [vmem:[#allocation5] sm:$0xff] %vm307, %v2548
    %v2551 = vsel %vm307, %v2543, 0.0
    %2552 = vadd.xlane.f32.xlu0 %v2551
    %v2553 = vpop.xlane.xlu0 %2552
    %v2554 = vmul.f32 %v2553, 0.03125
    %v2555 = vsub.f32 %v2539, %v2554
    %v2556 = vmul.f32 %v2555, %v2555
    %2558 = vrot.lane.b32.xlu0 %v2556, 32
    %v2559 = vpop.permute.xlu0 %2558
    %v2561 = vsel %vm307, %v2559, 0.0
    %2562 = vadd.xlane.f32.xlu0 %v2561
    %v2563 = vpop.xlane.xlu0 %2562
    %v2564 = vmul.f32 %v2563, 0.03125
    %v2565 = vadd.f32 %v2564, 1e-05
    %v2566 = vrsqrt.pop %v2565
    %v2567 = vmul.f32 %v2555, %v2566
    %v2568 = vld [vmem:[%s13] sm:$0x1]
    %v2570 = vlaneseq
    %v2571 = vshrl.u32 %v2570, 7
    %v2572 = vsub.s32 0, %v2571
    %v2573 = vrot.slane %v2568, %v2572
    %2574 = vrot.lane.b32.xlu0 %v2573, 96
    %v2575 = vpop.permute.xlu0 %2574
    %v2577 = vmul.f32 %v2567, %v2575
    %v2578 = vld [vmem:[%s14] sm:$0x1]
    %v2580 = vlaneseq
    %v2581 = vshrl.u32 %v2580, 7
    %v2582 = vsub.s32 0, %v2581
    %v2583 = vrot.slane %v2578, %v2582
    %2584 = vrot.lane.b32.xlu0 %v2583, 96
    %v2585 = vpop.permute.xlu0 %2584
    %v2587 = vadd.f32 %v2577, %v2585
    %v2588 = vsel %vm411, %v2587, 0.0
    %2590 = vrot.lane.b32.xlu0 %v2588, 32
    %v2591 = vpop.permute.xlu0 %2590
    %s2593 = scalar_lea.vmem [#allocation19], 32
    %2594 = vst.msk [vmem:[%s2593] sm:$0xff] %vm307, %v2591
    %v2595 = vld [vmem:[#allocation7 + $0x28] sm:$0xff]
    %v2596 = vld [vmem:[#allocation3] sm:$0xff]
    %v2597 = vld [vmem:[#allocation5] sm:$0xff]
    %v2598 = vld [vmem:[#allocation16] sm:$0xff]
    %v2599 = vld [vmem:[#allocation16 + $0x8] sm:$0xff]
    %v2600 = vld [vmem:[#allocation16 + $0x10] sm:$0xff]
    %v2601 = vld [vmem:[#allocation16 + $0x18] sm:$0xff]
    %v2603 = vsel %vm307, %v2596, 0
    %2605 = vmatprep.subr.mxu0 0.0
    %2606 = vmatpush1.msra.mxu0 0.0
    %2607 = vmatprep.subr.mxu0 0.0
    %2608 = vmatpush1.msra.mxu0 0.0
    %2609 = vmatprep.subr.mxu0 0.0
    %2610 = vmatpush1.msra.mxu0 0.0
    %2611 = vmatprep.subr.mxu0 0.0
    %2612 = vmatpush1.msra.mxu0 0.0
    %2613 = vmatprep.subr.mxu0 0.0
    %2614 = vmatpush1.msra.mxu0 0.0
    %2615 = vmatprep.subr.mxu0 0.0
    %2616 = vmatpush1.msra.mxu0 0.0
    %2617 = vmatprep.subr.mxu0 0.0
    %2618 = vmatpush1.msra.mxu0 0.0
    %2619 = vmatprep.subr.mxu0 0.0
    %2620 = vmatpush1.msra.mxu0 0.0
    %2621 = vmatprep.subr.mxu0 0.0
    %2622 = vmatpush1.msra.mxu0 0.0
    %2623 = vmatprep.subr.mxu0 0.0
    %2624 = vmatpush1.msra.mxu0 0.0
    %2625 = vmatprep.subr.mxu0 0.0
    %2626 = vmatpush1.msra.mxu0 0.0
    %2627 = vmatprep.subr.mxu0 0.0
    %2628 = vmatpush1.msra.mxu0 0.0
    %2629 = vmatprep.subr.mxu0 0.0
    %2630 = vmatpush1.msra.mxu0 %v2601
    %2631 = vmatprep.subr.mxu0 0.0
    %2632 = vmatpush1.msra.mxu0 %v2600
    %2633 = vmatprep.subr.mxu0 0.0
    %2634 = vmatpush1.msra.mxu0 %v2599
    %2635 = vmatprep.subr.mxu0 0.0
    %2636 = vmatpush1.msra.mxu0 %v2598
    %2637 = vmatprep.subr.mxu0 0.0
    %2638 = vmatpush2.msra.mxu0 0.0
    %2639 = vmatprep.subr.mxu0 0.0
    %2640 = vmatpush2.msra.mxu0 0.0
    %2641 = vmatprep.subr.mxu0 0.0
    %2642 = vmatpush2.msra.mxu0 0.0
    %2643 = vmatprep.subr.mxu0 0.0
    %2644 = vmatpush2.msra.mxu0 0.0
    %2645 = vmatprep.subr.mxu0 0.0
    %2646 = vmatpush2.msra.mxu0 0.0
    %2647 = vmatprep.subr.mxu0 0.0
    %2648 = vmatpush2.msra.mxu0 0.0
    %2649 = vmatprep.subr.mxu0 0.0
    %2650 = vmatpush2.msra.mxu0 0.0
    %2651 = vmatprep.subr.mxu0 0.0
    %2652 = vmatpush2.msra.mxu0 0.0
    %2653 = vmatprep.subr.mxu0 0.0
    %2654 = vmatpush2.msra.mxu0 0.0
    %2655 = vmatprep.subr.mxu0 0.0
    %2656 = vmatpush2.msra.mxu0 0.0
    %2657 = vmatprep.subr.mxu0 0.0
    %2658 = vmatpush2.msra.mxu0 0.0
    %2659 = vmatprep.subr.mxu0 0.0
    %2660 = vmatpush2.msra.mxu0 0.0
    %2661 = vmatprep.subr.mxu0 0.0
    %2662 = vmatpush2.msra.mxu0 0.0
    %2663 = vmatprep.subr.mxu0 0.0
    %2664 = vmatpush2.msra.mxu0 0.0
    %2665 = vmatprep.subr.mxu0 0.0
    %2666 = vmatpush2.msra.mxu0 0.0
    %2667 = vmatprep.subr.mxu0 0.0
    %2668 = vmatpush2.msra.mxu0 0.0
    %2669 = vmatprep.mubr.f32.mxu0 0.0
    %2670 = vmatmul.mubr.f32.gmra.mxu0 %v2603
    %v2671 = vpop.f32.mrf.mxu0
    %v2672 = vadd.f32 0.0, %v2671
    %v2673 = vpop.f32.mrf.mxu0
    %2674 = vdwg.mxu0
    %v2675 = vadd.f32 %v2595, %v2672
    %v2676 = vxor.u32 %v2675, 2147483648
    %v2677 = vmul.f32 %v2676, 1.442695
    %v2678 = vpow.pop %v2677
    %v2679 = vadd.f32 %v2678, 1.0
    %v2680 = vrcp.pop %v2679
    %v2681 = vmul.f32 1.0, %v2680
    %v2682 = vtanh.pop %v2675
    %2684 = vrot.lane.b32.xlu0 %v2597, 32
    %v2685 = vpop.permute.xlu0 %2684
    %v2687 = vmul.f32 %v2681, %v2685
    %2689 = vrot.lane.b32.xlu0 %v2682, 64
    %v2690 = vpop.permute.xlu0 %2689
    %v2692 = vmul.f32 %v2681, %v2690
    %2694 = vrot.lane.b32.xlu0 %v2692, 32
    %v2695 = vpop.permute.xlu0 %2694
    %v2697 = vadd.f32 %v2687, %v2695
    %v2698 = vtanh.pop %v2697
    %2700 = vrot.lane.b32.xlu0 %v2698, 64
    %v2701 = vpop.permute.xlu0 %2700
    %v2703 = vmul.f32 %v2681, %v2701
    %v2704 = vsel %vm411, %v2703, 0.0
    %v2705 = vsel %vm411, %v2697, 0.0
    %2707 = vrot.lane.b32.xlu0 %v2704, 32
    %v2708 = vpop.permute.xlu0 %2707
    %2710 = vst.msk [vmem:[#allocation3] sm:$0xff] %vm307, %v2708
    %2712 = vrot.lane.b32.xlu0 %v2705, 96
    %v2713 = vpop.permute.xlu0 %2712
    %2715 = vst.msk [vmem:[#allocation5] sm:$0xff] %vm307, %v2713
    %v2716 = vsel %vm307, %v2708, 0.0
    %2717 = vadd.xlane.f32.xlu0 %v2716
    %v2718 = vpop.xlane.xlu0 %2717
    %v2719 = vmul.f32 %v2718, 0.03125
    %v2720 = vsub.f32 %v2704, %v2719
    %v2721 = vmul.f32 %v2720, %v2720
    %2723 = vrot.lane.b32.xlu0 %v2721, 32
    %v2724 = vpop.permute.xlu0 %2723
    %v2726 = vsel %vm307, %v2724, 0.0
    %2727 = vadd.xlane.f32.xlu0 %v2726
    %v2728 = vpop.xlane.xlu0 %2727
    %v2729 = vmul.f32 %v2728, 0.03125
    %v2730 = vadd.f32 %v2729, 1e-05
    %v2731 = vrsqrt.pop %v2730
    %v2732 = vmul.f32 %v2720, %v2731
    %v2733 = vld [vmem:[%s13] sm:$0x1]
    %v2735 = vlaneseq
    %v2736 = vshrl.u32 %v2735, 7
    %v2737 = vsub.s32 0, %v2736
    %v2738 = vrot.slane %v2733, %v2737
    %2739 = vrot.lane.b32.xlu0 %v2738, 96
    %v2740 = vpop.permute.xlu0 %2739
    %v2742 = vmul.f32 %v2732, %v2740
    %v2743 = vld [vmem:[%s14] sm:$0x1]
    %v2745 = vlaneseq
    %v2746 = vshrl.u32 %v2745, 7
    %v2747 = vsub.s32 0, %v2746
    %v2748 = vrot.slane %v2743, %v2747
    %2749 = vrot.lane.b32.xlu0 %v2748, 96
    %v2750 = vpop.permute.xlu0 %2749
    %v2752 = vadd.f32 %v2742, %v2750
    %v2753 = vsel %vm411, %v2752, 0.0
    %2755 = vrot.lane.b32.xlu0 %v2753, 32
    %v2756 = vpop.permute.xlu0 %2755
    %s2758 = scalar_lea.vmem [#allocation19], 40
    %2759 = vst.msk [vmem:[%s2758] sm:$0xff] %vm307, %v2756
    %v2760 = vld [vmem:[#allocation7 + $0x30] sm:$0xff]
    %v2761 = vld [vmem:[#allocation3] sm:$0xff]
    %v2762 = vld [vmem:[#allocation5] sm:$0xff]
    %v2763 = vld [vmem:[#allocation16] sm:$0xff]
    %v2764 = vld [vmem:[#allocation16 + $0x8] sm:$0xff]
    %v2765 = vld [vmem:[#allocation16 + $0x10] sm:$0xff]
    %v2766 = vld [vmem:[#allocation16 + $0x18] sm:$0xff]
    %v2768 = vsel %vm307, %v2761, 0
    %2770 = vmatprep.subr.mxu0 0.0
    %2771 = vmatpush1.msra.mxu0 0.0
    %2772 = vmatprep.subr.mxu0 0.0
    %2773 = vmatpush1.msra.mxu0 0.0
    %2774 = vmatprep.subr.mxu0 0.0
    %2775 = vmatpush1.msra.mxu0 0.0
    %2776 = vmatprep.subr.mxu0 0.0
    %2777 = vmatpush1.msra.mxu0 0.0
    %2778 = vmatprep.subr.mxu0 0.0
    %2779 = vmatpush1.msra.mxu0 0.0
    %2780 = vmatprep.subr.mxu0 0.0
    %2781 = vmatpush1.msra.mxu0 0.0
    %2782 = vmatprep.subr.mxu0 0.0
    %2783 = vmatpush1.msra.mxu0 0.0
    %2784 = vmatprep.subr.mxu0 0.0
    %2785 = vmatpush1.msra.mxu0 0.0
    %2786 = vmatprep.subr.mxu0 0.0
    %2787 = vmatpush1.msra.mxu0 0.0
    %2788 = vmatprep.subr.mxu0 0.0
    %2789 = vmatpush1.msra.mxu0 0.0
    %2790 = vmatprep.subr.mxu0 0.0
    %2791 = vmatpush1.msra.mxu0 0.0
    %2792 = vmatprep.subr.mxu0 0.0
    %2793 = vmatpush1.msra.mxu0 0.0
    %2794 = vmatprep.subr.mxu0 0.0
    %2795 = vmatpush1.msra.mxu0 %v2766
    %2796 = vmatprep.subr.mxu0 0.0
    %2797 = vmatpush1.msra.mxu0 %v2765
    %2798 = vmatprep.subr.mxu0 0.0
    %2799 = vmatpush1.msra.mxu0 %v2764
    %2800 = vmatprep.subr.mxu0 0.0
    %2801 = vmatpush1.msra.mxu0 %v2763
    %2802 = vmatprep.subr.mxu0 0.0
    %2803 = vmatpush2.msra.mxu0 0.0
    %2804 = vmatprep.subr.mxu0 0.0
    %2805 = vmatpush2.msra.mxu0 0.0
    %2806 = vmatprep.subr.mxu0 0.0
    %2807 = vmatpush2.msra.mxu0 0.0
    %2808 = vmatprep.subr.mxu0 0.0
    %2809 = vmatpush2.msra.mxu0 0.0
    %2810 = vmatprep.subr.mxu0 0.0
    %2811 = vmatpush2.msra.mxu0 0.0
    %2812 = vmatprep.subr.mxu0 0.0
    %2813 = vmatpush2.msra.mxu0 0.0
    %2814 = vmatprep.subr.mxu0 0.0
    %2815 = vmatpush2.msra.mxu0 0.0
    %2816 = vmatprep.subr.mxu0 0.0
    %2817 = vmatpush2.msra.mxu0 0.0
    %2818 = vmatprep.subr.mxu0 0.0
    %2819 = vmatpush2.msra.mxu0 0.0
    %2820 = vmatprep.subr.mxu0 0.0
    %2821 = vmatpush2.msra.mxu0 0.0
    %2822 = vmatprep.subr.mxu0 0.0
    %2823 = vmatpush2.msra.mxu0 0.0
    %2824 = vmatprep.subr.mxu0 0.0
    %2825 = vmatpush2.msra.mxu0 0.0
    %2826 = vmatprep.subr.mxu0 0.0
    %2827 = vmatpush2.msra.mxu0 0.0
    %2828 = vmatprep.subr.mxu0 0.0
    %2829 = vmatpush2.msra.mxu0 0.0
    %2830 = vmatprep.subr.mxu0 0.0
    %2831 = vmatpush2.msra.mxu0 0.0
    %2832 = vmatprep.subr.mxu0 0.0
    %2833 = vmatpush2.msra.mxu0 0.0
    %2834 = vmatprep.mubr.f32.mxu0 0.0
    %2835 = vmatmul.mubr.f32.gmra.mxu0 %v2768
    %v2836 = vpop.f32.mrf.mxu0
    %v2837 = vadd.f32 0.0, %v2836
    %v2838 = vpop.f32.mrf.mxu0
    %2839 = vdwg.mxu0
    %v2840 = vadd.f32 %v2760, %v2837
    %v2841 = vxor.u32 %v2840, 2147483648
    %v2842 = vmul.f32 %v2841, 1.442695
    %v2843 = vpow.pop %v2842
    %v2844 = vadd.f32 %v2843, 1.0
    %v2845 = vrcp.pop %v2844
    %v2846 = vmul.f32 1.0, %v2845
    %v2847 = vtanh.pop %v2840
    %2849 = vrot.lane.b32.xlu0 %v2762, 32
    %v2850 = vpop.permute.xlu0 %2849
    %v2852 = vmul.f32 %v2846, %v2850
    %2854 = vrot.lane.b32.xlu0 %v2847, 64
    %v2855 = vpop.permute.xlu0 %2854
    %v2857 = vmul.f32 %v2846, %v2855
    %2859 = vrot.lane.b32.xlu0 %v2857, 32
    %v2860 = vpop.permute.xlu0 %2859
    %v2862 = vadd.f32 %v2852, %v2860
    %v2863 = vtanh.pop %v2862
    %2865 = vrot.lane.b32.xlu0 %v2863, 64
    %v2866 = vpop.permute.xlu0 %2865
    %v2868 = vmul.f32 %v2846, %v2866
    %v2869 = vsel %vm411, %v2868, 0.0
    %v2870 = vsel %vm411, %v2862, 0.0
    %2872 = vrot.lane.b32.xlu0 %v2869, 32
    %v2873 = vpop.permute.xlu0 %2872
    %2875 = vst.msk [vmem:[#allocation3] sm:$0xff] %vm307, %v2873
    %2877 = vrot.lane.b32.xlu0 %v2870, 96
    %v2878 = vpop.permute.xlu0 %2877
    %2880 = vst.msk [vmem:[#allocation5] sm:$0xff] %vm307, %v2878
    %v2881 = vsel %vm307, %v2873, 0.0
    %2882 = vadd.xlane.f32.xlu0 %v2881
    %v2883 = vpop.xlane.xlu0 %2882
    %v2884 = vmul.f32 %v2883, 0.03125
    %v2885 = vsub.f32 %v2869, %v2884
    %v2886 = vmul.f32 %v2885, %v2885
    %2888 = vrot.lane.b32.xlu0 %v2886, 32
    %v2889 = vpop.permute.xlu0 %2888
    %v2891 = vsel %vm307, %v2889, 0.0
    %2892 = vadd.xlane.f32.xlu0 %v2891
    %v2893 = vpop.xlane.xlu0 %2892
    %v2894 = vmul.f32 %v2893, 0.03125
    %v2895 = vadd.f32 %v2894, 1e-05
    %v2896 = vrsqrt.pop %v2895
    %v2897 = vmul.f32 %v2885, %v2896
    %v2898 = vld [vmem:[%s13] sm:$0x1]
    %v2900 = vlaneseq
    %v2901 = vshrl.u32 %v2900, 7
    %v2902 = vsub.s32 0, %v2901
    %v2903 = vrot.slane %v2898, %v2902
    %2904 = vrot.lane.b32.xlu0 %v2903, 96
    %v2905 = vpop.permute.xlu0 %2904
    %v2907 = vmul.f32 %v2897, %v2905
    %v2908 = vld [vmem:[%s14] sm:$0x1]
    %v2910 = vlaneseq
    %v2911 = vshrl.u32 %v2910, 7
    %v2912 = vsub.s32 0, %v2911
    %v2913 = vrot.slane %v2908, %v2912
    %2914 = vrot.lane.b32.xlu0 %v2913, 96
    %v2915 = vpop.permute.xlu0 %2914
    %v2917 = vadd.f32 %v2907, %v2915
    %v2918 = vsel %vm411, %v2917, 0.0
    %2920 = vrot.lane.b32.xlu0 %v2918, 32
    %v2921 = vpop.permute.xlu0 %2920
    %s2923 = scalar_lea.vmem [#allocation19], 48
    %2924 = vst.msk [vmem:[%s2923] sm:$0xff] %vm307, %v2921
    %v2925 = vld [vmem:[#allocation7 + $0x38] sm:$0xff]
    %v2926 = vld [vmem:[#allocation3] sm:$0xff]
    %v2927 = vld [vmem:[#allocation5] sm:$0xff]
    %v2928 = vld [vmem:[#allocation16] sm:$0xff]
    %v2929 = vld [vmem:[#allocation16 + $0x8] sm:$0xff]
    %v2930 = vld [vmem:[#allocation16 + $0x10] sm:$0xff]
    %v2931 = vld [vmem:[#allocation16 + $0x18] sm:$0xff]
    %v2933 = vsel %vm307, %v2926, 0
    %2935 = vmatprep.subr.mxu0 0.0
    %2936 = vmatpush1.msra.mxu0 0.0
    %2937 = vmatprep.subr.mxu0 0.0
    %2938 = vmatpush1.msra.mxu0 0.0
    %2939 = vmatprep.subr.mxu0 0.0
    %2940 = vmatpush1.msra.mxu0 0.0
    %2941 = vmatprep.subr.mxu0 0.0
    %2942 = vmatpush1.msra.mxu0 0.0
    %2943 = vmatprep.subr.mxu0 0.0
    %2944 = vmatpush1.msra.mxu0 0.0
    %2945 = vmatprep.subr.mxu0 0.0
    %2946 = vmatpush1.msra.mxu0 0.0
    %2947 = vmatprep.subr.mxu0 0.0
    %2948 = vmatpush1.msra.mxu0 0.0
    %2949 = vmatprep.subr.mxu0 0.0
    %2950 = vmatpush1.msra.mxu0 0.0
    %2951 = vmatprep.subr.mxu0 0.0
    %2952 = vmatpush1.msra.mxu0 0.0
    %2953 = vmatprep.subr.mxu0 0.0
    %2954 = vmatpush1.msra.mxu0 0.0
    %2955 = vmatprep.subr.mxu0 0.0
    %2956 = vmatpush1.msra.mxu0 0.0
    %2957 = vmatprep.subr.mxu0 0.0
    %2958 = vmatpush1.msra.mxu0 0.0
    %2959 = vmatprep.subr.mxu0 0.0
    %2960 = vmatpush1.msra.mxu0 %v2931
    %2961 = vmatprep.subr.mxu0 0.0
    %2962 = vmatpush1.msra.mxu0 %v2930
    %2963 = vmatprep.subr.mxu0 0.0
    %2964 = vmatpush1.msra.mxu0 %v2929
    %2965 = vmatprep.subr.mxu0 0.0
    %2966 = vmatpush1.msra.mxu0 %v2928
    %2967 = vmatprep.subr.mxu0 0.0
    %2968 = vmatpush2.msra.mxu0 0.0
    %2969 = vmatprep.subr.mxu0 0.0
    %2970 = vmatpush2.msra.mxu0 0.0
    %2971 = vmatprep.subr.mxu0 0.0
    %2972 = vmatpush2.msra.mxu0 0.0
    %2973 = vmatprep.subr.mxu0 0.0
    %2974 = vmatpush2.msra.mxu0 0.0
    %2975 = vmatprep.subr.mxu0 0.0
    %2976 = vmatpush2.msra.mxu0 0.0
    %2977 = vmatprep.subr.mxu0 0.0
    %2978 = vmatpush2.msra.mxu0 0.0
    %2979 = vmatprep.subr.mxu0 0.0
    %2980 = vmatpush2.msra.mxu0 0.0
    %2981 = vmatprep.subr.mxu0 0.0
    %2982 = vmatpush2.msra.mxu0 0.0
    %2983 = vmatprep.subr.mxu0 0.0
    %2984 = vmatpush2.msra.mxu0 0.0
    %2985 = vmatprep.subr.mxu0 0.0
    %2986 = vmatpush2.msra.mxu0 0.0
    %2987 = vmatprep.subr.mxu0 0.0
    %2988 = vmatpush2.msra.mxu0 0.0
    %2989 = vmatprep.subr.mxu0 0.0
    %2990 = vmatpush2.msra.mxu0 0.0
    %2991 = vmatprep.subr.mxu0 0.0
    %2992 = vmatpush2.msra.mxu0 0.0
    %2993 = vmatprep.subr.mxu0 0.0
    %2994 = vmatpush2.msra.mxu0 0.0
    %2995 = vmatprep.subr.mxu0 0.0
    %2996 = vmatpush2.msra.mxu0 0.0
    %2997 = vmatprep.subr.mxu0 0.0
    %2998 = vmatpush2.msra.mxu0 0.0
    %2999 = vmatprep.mubr.f32.mxu0 0.0
    %3000 = vmatmul.mubr.f32.gmra.mxu0 %v2933
    %v3001 = vpop.f32.mrf.mxu0
    %v3002 = vadd.f32 0.0, %v3001
    %v3003 = vpop.f32.mrf.mxu0
    %3004 = vdwg.mxu0
    %v3005 = vadd.f32 %v2925, %v3002
    %v3006 = vxor.u32 %v3005, 2147483648
    %v3007 = vmul.f32 %v3006, 1.442695
    %v3008 = vpow.pop %v3007
    %v3009 = vadd.f32 %v3008, 1.0
    %v3010 = vrcp.pop %v3009
    %v3011 = vmul.f32 1.0, %v3010
    %v3012 = vtanh.pop %v3005
    %3014 = vrot.lane.b32.xlu0 %v2927, 32
    %v3015 = vpop.permute.xlu0 %3014
    %v3017 = vmul.f32 %v3011, %v3015
    %3019 = vrot.lane.b32.xlu0 %v3012, 64
    %v3020 = vpop.permute.xlu0 %3019
    %v3022 = vmul.f32 %v3011, %v3020
    %3024 = vrot.lane.b32.xlu0 %v3022, 32
    %v3025 = vpop.permute.xlu0 %3024
    %v3027 = vadd.f32 %v3017, %v3025
    %v3028 = vtanh.pop %v3027
    %3030 = vrot.lane.b32.xlu0 %v3028, 64
    %v3031 = vpop.permute.xlu0 %3030
    %v3033 = vmul.f32 %v3011, %v3031
    %v3034 = vsel %vm411, %v3033, 0.0
    %v3035 = vsel %vm411, %v3027, 0.0
    %3037 = vrot.lane.b32.xlu0 %v3034, 32
    %v3038 = vpop.permute.xlu0 %3037
    %3040 = vst.msk [vmem:[#allocation3] sm:$0xff] %vm307, %v3038
    %3042 = vrot.lane.b32.xlu0 %v3035, 96
    %v3043 = vpop.permute.xlu0 %3042
    %3045 = vst.msk [vmem:[#allocation5] sm:$0xff] %vm307, %v3043
    %v3046 = vsel %vm307, %v3038, 0.0
    %3047 = vadd.xlane.f32.xlu0 %v3046
    %v3048 = vpop.xlane.xlu0 %3047
    %v3049 = vmul.f32 %v3048, 0.03125
    %v3050 = vsub.f32 %v3034, %v3049
    %v3051 = vmul.f32 %v3050, %v3050
    %3053 = vrot.lane.b32.xlu0 %v3051, 32
    %v3054 = vpop.permute.xlu0 %3053
    %v3056 = vsel %vm307, %v3054, 0.0
    %3057 = vadd.xlane.f32.xlu0 %v3056
    %v3058 = vpop.xlane.xlu0 %3057
    %v3059 = vmul.f32 %v3058, 0.03125
    %v3060 = vadd.f32 %v3059, 1e-05
    %v3061 = vrsqrt.pop %v3060
    %v3062 = vmul.f32 %v3050, %v3061
    %v3063 = vld [vmem:[%s13] sm:$0x1]
    %v3065 = vlaneseq
    %v3066 = vshrl.u32 %v3065, 7
    %v3067 = vsub.s32 0, %v3066
    %v3068 = vrot.slane %v3063, %v3067
    %3069 = vrot.lane.b32.xlu0 %v3068, 96
    %v3070 = vpop.permute.xlu0 %3069
    %v3072 = vmul.f32 %v3062, %v3070
    %v3073 = vld [vmem:[%s14] sm:$0x1]
    %v3075 = vlaneseq
    %v3076 = vshrl.u32 %v3075, 7
    %v3077 = vsub.s32 0, %v3076
    %v3078 = vrot.slane %v3073, %v3077
    %3079 = vrot.lane.b32.xlu0 %v3078, 96
    %v3080 = vpop.permute.xlu0 %3079
    %v3082 = vadd.f32 %v3072, %v3080
    %v3083 = vsel %vm411, %v3082, 0.0
    %3085 = vrot.lane.b32.xlu0 %v3083, 32
    %v3086 = vpop.permute.xlu0 %3085
    %s3088 = scalar_lea.vmem [#allocation19], 56
    %3089 = vst.msk [vmem:[%s3088] sm:$0xff] %vm307, %v3086
    %v3090 = vld [vmem:[#allocation2] sm:$0xff]
    %3091 = vst.msk [vmem:[#allocation20] sm:$0xff] %vm307, %v3090
    %v3092 = vld [vmem:[#allocation4] sm:$0xff]
    %3093 = vst.msk [vmem:[#allocation23] sm:$0xff] %vm307, %v3092
    %v3094 = vld [vmem:[#allocation3] sm:$0xff]
    %3095 = vst.msk [vmem:[#allocation22] sm:$0xff] %vm307, %v3094
    %v3096 = vld [vmem:[#allocation5] sm:$0xff]
    %3097 = vst.msk [vmem:[#allocation25] sm:$0xff] %vm307, %v3096
    // Predicated region
    $region90: #{tpu_custom_call.1} parent=1 // pred_check
      _
    $region91: #{tpu_custom_call.1} parent=1 // pred_check_branch
      %3099 = sbr.rel (0) target = $region93
    $region92: #{tpu_custom_call.1} parent=1 // pred_region
      %s3101 = ssub.s32 1024, 1024
      %3102 = vsyncadd [#allocation10], %s3101
      %s3103 = sshll.u32 [#allocation19], 4
      %s3104 = int_to_ptr.vmem [resolvable:$true] %s3103
      %3109 = dma.vmem_to_hbm [thread:$0]  %s3104, 1024, %s15, [#allocation10], 128, 128, 8
    $region93: #{tpu_custom_call.1} parent=1 // pred_fallthru
      _
    // Predicated region
    $region94: #{tpu_custom_call.1} parent=1 // pred_check
      _
    $region95: #{tpu_custom_call.1} parent=1 // pred_check_branch
      %3111 = sbr.rel (0) target = $region97
    $region96: #{tpu_custom_call.1} parent=1 // pred_region
      %s3113 = ssub.s32 128, 128
      %3114 = vsyncadd [#allocation21], %s3113
      %s3116 = sshll.u32 [#allocation20], 4
      %s3117 = int_to_ptr.vmem [resolvable:$true] %s3116
      %3119 = dma.vmem_to_hbm [thread:$0]  %s3117, 128, %s16, [#allocation21]
    $region97: #{tpu_custom_call.1} parent=1 // pred_fallthru
      _
    // Predicated region
    $region98: #{tpu_custom_call.1} parent=1 // pred_check
      _
    $region99: #{tpu_custom_call.1} parent=1 // pred_check_branch
      %3121 = sbr.rel (0) target = $region101
    $region100: #{tpu_custom_call.1} parent=1 // pred_region
      %s3123 = ssub.s32 128, 128
      %3124 = vsyncadd [#allocation21], %s3123
      %s3126 = sshll.u32 [#allocation22], 4
      %s3127 = int_to_ptr.vmem [resolvable:$true] %s3126
      %3129 = dma.vmem_to_hbm [thread:$0]  %s3127, 128, %s17, [#allocation21]
    $region101: #{tpu_custom_call.1} parent=1 // pred_fallthru
      _
    // Predicated region
    $region102: #{tpu_custom_call.1} parent=1 // pred_check
      _
    $region103: #{tpu_custom_call.1} parent=1 // pred_check_branch
      %3131 = sbr.rel (0) target = $region105
    $region104: #{tpu_custom_call.1} parent=1 // pred_region
      %s3133 = ssub.s32 128, 128
      %3134 = vsyncadd [#allocation24], %s3133
      %s3136 = sshll.u32 [#allocation23], 4
      %s3137 = int_to_ptr.vmem [resolvable:$true] %s3136
      %3139 = dma.vmem_to_hbm [thread:$0]  %s3137, 128, %s18, [#allocation24]
    $region105: #{tpu_custom_call.1} parent=1 // pred_fallthru
      _
    // Predicated region
    $region106: #{tpu_custom_call.1} parent=1 // pred_check
      _
    $region107: #{tpu_custom_call.1} parent=1 // pred_check_branch
      %3141 = sbr.rel (0) target = $region109
    $region108: #{tpu_custom_call.1} parent=1 // pred_region
      %s3143 = ssub.s32 128, 128
      %3144 = vsyncadd [#allocation24], %s3143
      %s3146 = sshll.u32 [#allocation25], 4
      %s3147 = int_to_ptr.vmem [resolvable:$true] %s3146
      %3149 = dma.vmem_to_hbm [thread:$0]  %s3147, 128, %s19, [#allocation24]
    $region109: #{tpu_custom_call.1} parent=1 // pred_fallthru
      _
    // Predicated region
    $region110: #{tpu_custom_call.1} parent=1 // pred_check
      _
    $region111: #{tpu_custom_call.1} parent=1 // pred_check_branch
      %3151 = sbr.rel (0) target = $region113
    $region112: #{tpu_custom_call.1} parent=1 // pred_region
      %3152 = dma.done [#allocation10], 1024
    $region113: #{tpu_custom_call.1} parent=1 // pred_fallthru
      _
    // Predicated region
    $region114: #{tpu_custom_call.1} parent=1 // pred_check
      _
    $region115: #{tpu_custom_call.1} parent=1 // pred_check_branch
      %3154 = sbr.rel (0) target = $region117
    $region116: #{tpu_custom_call.1} parent=1 // pred_region
      %3155 = dma.done [#allocation21], 128
    $region117: #{tpu_custom_call.1} parent=1 // pred_fallthru
      _
    // Predicated region
    $region118: #{tpu_custom_call.1} parent=1 // pred_check
      _
    $region119: #{tpu_custom_call.1} parent=1 // pred_check_branch
      %3157 = sbr.rel (0) target = $region121
    $region120: #{tpu_custom_call.1} parent=1 // pred_region
      %3158 = dma.done [#allocation21], 128
    $region121: #{tpu_custom_call.1} parent=1 // pred_fallthru
      _
    // Predicated region
    $region122: #{tpu_custom_call.1} parent=1 // pred_check
      _
    $region123: #{tpu_custom_call.1} parent=1 // pred_check_branch
      %3160 = sbr.rel (0) target = $region125
    $region124: #{tpu_custom_call.1} parent=1 // pred_region
      %3161 = dma.done [#allocation24], 128
    $region125: #{tpu_custom_call.1} parent=1 // pred_fallthru
      _
    // Predicated region
    $region126: #{tpu_custom_call.1} parent=1 // pred_check
      _
    $region127: #{tpu_custom_call.1} parent=1 // pred_check_branch
      %3163 = sbr.rel (0) target = $region129
    $region128: #{tpu_custom_call.1} parent=1 // pred_region
      %3164 = dma.done [#allocation24], 128
    $region129: #{tpu_custom_call.1} parent=1 // pred_fallthru
      _
    %3165 = vsyncpa [#allocation9], 1
    %3166 = vsyncpa [#allocation12], 1
    %3167 = vsyncpa [#allocation15], 1
    %3168 = vsyncpa [#allocation18], 1
    %3169 = vsyncpa [#allocation10], 1
    %3170 = vsyncpa [#allocation21], 1
    %3171 = vsyncpa [#allocation24], 1

</llo_original>
